<compile_context>
chip_gen: v5e
topology: v5e:2x2
jax: 0.10.0
libtpu: 0.0.40
codegen_flags: <defaults>
</compile_context>

<pallas_src>
import jax
import jax.numpy as jnp
from jax.experimental import pallas as pl
from jax.experimental.pallas import tpu as pltpu


# ---------------------------------------------------------------------------
# Kernel 1: conv trunk + maxpool for one batch block (BT elements per grid step).
# ---------------------------------------------------------------------------
def qstn_conv_kernel(x_ref, w1, b1, w2, b2, w3, b3, g_ref):
    BT, P, dim = x_ref.shape
    M = BT * P

    # All BT*P points of this block as one points-major matrix (leading-dim merge is free).
    xf = x_ref[...].reshape(M, dim)                           # (M, dim) f32

    # conv1 (1x1) + bn1 (folded) + relu -> (M, 64).
    # Contraction depth is only `dim` (=3): VPU outer-product sum, not an MXU pass.
    w1v = w1[...]
    h = xf[:, 0:1] * w1v[0:1, :]
    for d in range(1, dim):
        h = h + xf[:, d:d + 1] * w1v[d:d + 1, :]
    h = jnp.maximum(h + b1[...], 0.0)

    # conv2 (1x1) + bn2 (folded) + relu -> (M, 128).   [bf16 operands, f32 accumulate]
    h = jnp.dot(h.astype(jnp.bfloat16), w2[...],
                preferred_element_type=jnp.float32) + b2[...]
    h = jnp.maximum(h, 0.0)

    # conv3 (1x1) + bn3 (folded) + relu -> (M, 1024).  [bf16 operands, f32 accumulate]
    # Single M = BT*P dot: conv3 weight tiles are pushed through the MXU once per step.
    h = jnp.dot(h.astype(jnp.bfloat16), w3[...],
                preferred_element_type=jnp.float32) + b3[...]
    h = jnp.maximum(h, 0.0)

    # MaxPool1d(num_points): sublane reduction over the P axis -> (BT, 1024).
    g_ref[0] = jnp.max(h.reshape(BT, P, h.shape[-1]), axis=1)


# ---------------------------------------------------------------------------
# Kernel 2: whole-batch FC head (fc1+bn4+relu, fc2+bn5+relu, fc3 + iden).
# Runs once per forward, so fc weights hit the MXU weight path exactly once.
# ---------------------------------------------------------------------------
def qstn_fc_kernel(g_ref, w4, b4, w5, b5, w6, b6, q_ref):
    f = jnp.dot(g_ref[...].astype(jnp.bfloat16), w4[...],
                preferred_element_type=jnp.float32) + b4[...]
    f = jnp.maximum(f, 0.0)
    f = jnp.dot(f.astype(jnp.bfloat16), w5[...],
                preferred_element_type=jnp.float32) + b5[...]
    f = jnp.maximum(f, 0.0)
    # fc3 stays f32: the quaternion normalization (2 / |q|^2) amplifies error.
    q_ref[...] = jnp.dot(f, w6[...], preferred_element_type=jnp.float32) + b6[...]


# ---------------------------------------------------------------------------
# Parameter setup (deterministic, synthetic) -- f32, BN folded (eval mode).
# ---------------------------------------------------------------------------
def init_params(key, dim=3):
    dims = [(dim, 64), (64, 128), (128, 1024), (1024, 512), (512, 256), (256, 4)]
    keys = jax.random.split(key, 4 * len(dims))
    params = []
    for i, (cin, cout) in enumerate(dims):
        kw, kb, kg, kbt = keys[4 * i:4 * i + 4]
        fan = 1.0 / jnp.sqrt(jnp.float32(cin))
        W = jax.random.uniform(kw, (cin, cout), jnp.float32, -fan, fan)
        b = jax.random.uniform(kb, (1, cout), jnp.float32, -fan, fan)
        if i < 5:  # layers with BatchNorm (bn1..bn5), eval-mode fold
            gamma = 1.0 + 0.1 * jax.random.normal(kg, (1, cout), jnp.float32)
            beta = 0.1 * jax.random.normal(kbt, (1, cout), jnp.float32)
            eps = 1e-5
            running_mean = jnp.zeros((1, cout), jnp.float32)
            running_var = jnp.ones((1, cout), jnp.float32)
            scale = gamma / jnp.sqrt(running_var + eps)
            shift = beta - running_mean * scale
            W = W * scale            # fold BN scale into weights
            b = b * scale + shift    # fold BN shift into bias
        else:
            # fold the "+ iden" ([1,0,0,0]) into the fc3 bias
            iden = jnp.array([[1.0, 0.0, 0.0, 0.0]], jnp.float32)
            b = b + iden
        params += [W, b]
    return params


def prepare_kernel_params(params):
    """One-time (outside jit) kernel-side prep: bf16 casts for the big MXU weights and
    lane-padding of fc3 to 128 output lanes (extra columns zero; wrapper slices [:, :4])."""
    w1, b1, w2, b2, w3, b3, w4, b4, w5, b5, w6, b6 = params
    N_PAD = 128
    w6p = jnp.zeros((w6.shape[0], N_PAD), jnp.float32).at[:, :w6.shape[1]].set(w6)
    b6p = jnp.zeros((1, N_PAD), jnp.float32).at[:, :b6.shape[1]].set(b6)
    conv_params = (w1, b1,                                   # conv1 stays f32 (VPU path)
                   w2.astype(jnp.bfloat16), b2,
                   w3.astype(jnp.bfloat16), b3)
    fc_params = (w4.astype(jnp.bfloat16), b4,
                 w5.astype(jnp.bfloat16), b5,
                 w6p, b6p)
    return conv_params, fc_params


# ---------------------------------------------------------------------------
# Quaternion -> rotation matrix (tiny elementwise op, plain JAX).
# (mirrors utils.batch_quat_to_rotmat from the PCPNet repo)
# ---------------------------------------------------------------------------
def batch_quat_to_rotmat(q):
    s = 2.0 / jnp.sum(q * q, axis=1)                        # (B,)
    w, x, y, z = q[:, 0], q[:, 1], q[:, 2], q[:, 3]
    r00 = 1.0 - (y * y + z * z) * s
    r01 = (x * y - z * w) * s
    r02 = (x * z + y * w) * s
    r10 = (x * y + z * w) * s
    r11 = 1.0 - (x * x + z * z) * s
    r12 = (y * z - x * w) * s
    r20 = (x * z - y * w) * s
    r21 = (y * z + x * w) * s
    r22 = 1.0 - (x * x + y * y) * s
    return jnp.stack(
        [jnp.stack([r00, r01, r02], -1),
         jnp.stack([r10, r11, r12], -1),
         jnp.stack([r20, r21, r22], -1)], axis=1)           # (B, 3, 3)


# ---------------------------------------------------------------------------
# Pure-JAX f32 reference (same folded params), for validation.
# ---------------------------------------------------------------------------
def qstn_reference(x_bdp, params):
    w1, b1, w2, b2, w3, b3, w4, b4, w5, b5, w6, b6 = params
    x = jnp.transpose(x_bdp, (0, 2, 1))                     # (B, P, dim)
    h = jnp.maximum(x @ w1 + b1, 0.0)
    h = jnp.maximum(h @ w2 + b2, 0.0)
    h = jnp.maximum(h @ w3 + b3, 0.0)
    g = jnp.max(h, axis=1)                                  # (B, 1024)
    f = jnp.maximum(g @ w4 + b4, 0.0)
    f = jnp.maximum(f @ w5 + b5, 0.0)
    q = f @ w6 + b6
    return batch_quat_to_rotmat(q)


# ---------------------------------------------------------------------------
# Wrapper
# ---------------------------------------------------------------------------
def qstn_forward(x_bdp, conv_params, fc_params, *, block_b=8):
    """x_bdp: (B, dim, P) float32 -- same layout as the PyTorch Conv1d input.

    conv_params / fc_params come from prepare_kernel_params() (pre-cast / padded once,
    outside jit).  block_b = batch elements per conv-grid step; the per-step conv3
    activation is block_b*P*4 KiB f32, keep that (plus ~2 MiB of weights/buffers) under
    the scoped-VMEM limit (16 MiB default on v5e, 32 MiB on v6e/v7x), and pick block_b so
    B/block_b >= 2 on v7x (2 TensorCores share the "parallel" grid axis).
    """
    w1, b1, w2, b2, w3, b3 = conv_params
    w4, b4, w5, b5, w6p, b6p = fc_params
    B, dim, P = x_bdp.shape
    C3 = w3.shape[1]            # 1024
    N_PAD = w6p.shape[1]        # 128 (lane-padded fc3 output)

    BT = min(block_b, B)
    nsteps = pl.cdiv(B, BT)
    B_pad = nsteps * BT

    # Points-major layout for the kernel: (B, P, dim).  The channels->lanes relayout is
    # paid here, on the tiny input, rather than on any in-kernel intermediate.
    # TODO(synk): a lane-dense (BT, dim, P) input block would avoid the 3->128 lane
    # padding of the x tile in VMEM; small win, skipped for kernel simplicity.
    x = jnp.transpose(x_bdp, (0, 2, 1))
    if B_pad != B:
        x = jnp.pad(x, ((0, B_pad - B), (0, 0), (0, 0)))    # padded rows are sliced off

    def full(a):  # whole-array block, constant index map (weights/biases)
        return pl.BlockSpec(a.shape, lambda b: (0,) * a.ndim)

    # ---- kernel 1: conv trunk + maxpool, grid over batch blocks --------------------
    conv_flops = 2 * B_pad * P * (dim * 64 + 64 * 128 + 128 * C3)
    conv_bytes = (int(x.size) * 4
                  + sum(int(p.size) * p.dtype.itemsize for p in conv_params)
                  + B_pad * C3 * 4)
    g = pl.pallas_call(
        qstn_conv_kernel,
        out_shape=jax.ShapeDtypeStruct((nsteps, BT, C3), jnp.float32),
        grid=(nsteps,),
        in_specs=[pl.BlockSpec((BT, P, dim), lambda b: (b, 0, 0))]
                 + [full(p) for p in conv_params],
        out_specs=pl.BlockSpec((1, BT, C3), lambda b: (b, 0, 0)),
        compiler_params=pltpu.CompilerParams(
            dimension_semantics=("parallel",)),
        cost_estimate=pl.CostEstimate(flops=conv_flops, transcendentals=0,
                                      bytes_accessed=conv_bytes),
    )(x, w1, b1, w2, b2, w3, b3)
    g = g.reshape(B_pad, C3)                                 # pooled features (B_pad, 1024)

    # ---- kernel 2: FC head, one pass over the whole batch (no grid) ----------------
    fc_flops = 2 * B_pad * (C3 * 512 + 512 * 256 + 256 * N_PAD)
    fc_bytes = (B_pad * C3 * 4
                + sum(int(p.size) * p.dtype.itemsize for p in fc_params)
                + B_pad * N_PAD * 4)
    q = pl.pallas_call(
        qstn_fc_kernel,
        out_shape=jax.ShapeDtypeStruct((B_pad, N_PAD), jnp.float32),
        cost_estimate=pl.CostEstimate(flops=fc_flops, transcendentals=0,
                                      bytes_accessed=fc_bytes),
    )(g, w4, b4, w5, b5, w6p, b6p)

    q = q[:B, :4]                                            # quaternion (w, x, y, z)
    return batch_quat_to_rotmat(q)                           # (B, 3, 3)


# ---------------------------------------------------------------------------
if __name__ == "__main__":
    B, dim, P = 4, 3, 128                                    # MaxPool1d(P) over all points
    key = jax.random.PRNGKey(0)
    kx, kp = jax.random.split(key)
    x = jax.random.normal(kx, (B, dim, P), jnp.float32)      # PyTorch-style (B, C, P)
    params = init_params(kp, dim=dim)
    conv_p, fc_p = prepare_kernel_params(params)             # pre-cast/pad once, outside jit

    fwd = jax.jit(qstn_forward, static_argnames=("block_b",))
    # block_b=2 with B=4 -> 2 grid steps (both TensorCores usable on v7x).
    trans = jax.block_until_ready(fwd(x, conv_p, fc_p, block_b=2))

    ref = jax.block_until_ready(qstn_reference(x, params))   # f32 reference

    assert trans.shape == (B, 3, 3)
    assert jnp.all(jnp.isfinite(trans))
    # bf16 operands / f32 accumulation in the kernels -> loose tolerance vs f32 ref.
    assert jnp.max(jnp.abs(trans - ref)) < 1e-1
    print("KERNEL_OK")
</pallas_src>

<mosaic_0001>
module attributes {stable_mosaic.version = 11 : i64} {
  func.func @qstn_fc_kernel(%arg0: memref<4x1024xf32, #tpu.memory_space<vmem>>, %arg1: memref<1024x512xbf16, #tpu.memory_space<vmem>>, %arg2: memref<1x512xf32, #tpu.memory_space<vmem>>, %arg3: memref<512x256xbf16, #tpu.memory_space<vmem>>, %arg4: memref<1x256xf32, #tpu.memory_space<vmem>>, %arg5: memref<256x128xf32, #tpu.memory_space<vmem>>, %arg6: memref<1x128xf32, #tpu.memory_space<vmem>>, %arg7: memref<4x128xf32, #tpu.memory_space<vmem>>) attributes {dimension_semantics = [], scalar_prefetch = 0 : i64, scratch_operands = 0 : i64, tpu.core_type = #tpu.core_type<tc>} {
    %c0 = arith.constant 0 : index
    %c0_0 = arith.constant 0 : index
    %0 = vector.load %arg0[%c0, %c0_0] : memref<4x1024xf32, #tpu.memory_space<vmem>>, vector<4x1024xf32>
    %1 = arith.truncf %0 : vector<4x1024xf32> to vector<4x1024xbf16>
    %c0_1 = arith.constant 0 : index
    %c0_2 = arith.constant 0 : index
    %2 = vector.load %arg1[%c0_1, %c0_2] : memref<1024x512xbf16, #tpu.memory_space<vmem>>, vector<1024x512xbf16>
    %cst = arith.constant dense<0.000000e+00> : vector<4x512xf32>
    %3 = tpu.matmul %1, %2, %cst {dimension_numbers = #tpu.dot_dimension_numbers<[1], [0], [0], [1], [0, 0, 1, 1], [], []>} : vector<4x1024xbf16>, vector<1024x512xbf16>, vector<4x512xf32> -> vector<4x512xf32>
    %c0_3 = arith.constant 0 : index
    %c0_4 = arith.constant 0 : index
    %4 = vector.load %arg2[%c0_3, %c0_4] : memref<1x512xf32, #tpu.memory_space<vmem>>, vector<1x512xf32>
    %5 = vector.broadcast %4 : vector<1x512xf32> to vector<4x512xf32>
    %6 = arith.addf %3, %5 : vector<4x512xf32>
    %cst_5 = arith.constant 0.000000e+00 : f32
    %7 = vector.broadcast %cst_5 : f32 to vector<4x512xf32>
    %8 = arith.maximumf %6, %7 : vector<4x512xf32>
    %9 = arith.truncf %8 : vector<4x512xf32> to vector<4x512xbf16>
    %c0_6 = arith.constant 0 : index
    %c0_7 = arith.constant 0 : index
    %10 = vector.load %arg3[%c0_6, %c0_7] : memref<512x256xbf16, #tpu.memory_space<vmem>>, vector<512x256xbf16>
    %cst_8 = arith.constant dense<0.000000e+00> : vector<4x256xf32>
    %11 = tpu.matmul %9, %10, %cst_8 {dimension_numbers = #tpu.dot_dimension_numbers<[1], [0], [0], [1], [0, 0, 1, 1], [], []>} : vector<4x512xbf16>, vector<512x256xbf16>, vector<4x256xf32> -> vector<4x256xf32>
    %c0_9 = arith.constant 0 : index
    %c0_10 = arith.constant 0 : index
    %12 = vector.load %arg4[%c0_9, %c0_10] : memref<1x256xf32, #tpu.memory_space<vmem>>, vector<1x256xf32>
    %13 = vector.broadcast %12 : vector<1x256xf32> to vector<4x256xf32>
    %14 = arith.addf %11, %13 : vector<4x256xf32>
    %cst_11 = arith.constant 0.000000e+00 : f32
    %15 = vector.broadcast %cst_11 : f32 to vector<4x256xf32>
    %16 = arith.maximumf %14, %15 : vector<4x256xf32>
    %c0_12 = arith.constant 0 : index
    %c0_13 = arith.constant 0 : index
    %17 = vector.load %arg5[%c0_12, %c0_13] : memref<256x128xf32, #tpu.memory_space<vmem>>, vector<256x128xf32>
    %cst_14 = arith.constant dense<0.000000e+00> : vector<4x128xf32>
    %18 = tpu.matmul %16, %17, %cst_14 {dimension_numbers = #tpu.dot_dimension_numbers<[1], [0], [0], [1], [0, 0, 1, 1], [], []>} : vector<4x256xf32>, vector<256x128xf32>, vector<4x128xf32> -> vector<4x128xf32>
    %c0_15 = arith.constant 0 : index
    %c0_16 = arith.constant 0 : index
    %19 = vector.load %arg6[%c0_15, %c0_16] : memref<1x128xf32, #tpu.memory_space<vmem>>, vector<1x128xf32>
    %20 = vector.broadcast %19 : vector<1x128xf32> to vector<4x128xf32>
    %21 = arith.addf %18, %20 : vector<4x128xf32>
    %c0_17 = arith.constant 0 : index
    %c0_18 = arith.constant 0 : index
    %22 = vector.load %arg7[%c0_17, %c0_18] : memref<4x128xf32, #tpu.memory_space<vmem>>, vector<4x128xf32>
    tpu.vector_store %arg7[%c0_17, %c0_18], %21 {strides = array<i32>} : memref<4x128xf32, #tpu.memory_space<vmem>>, vector<4x128xf32>,
    return
  }
}

module attributes {stable_mosaic.version = 11 : i64} {
  func.func @qstn_conv_kernel(%arg0: i32, %arg1: memref<2x128x3xf32, #tpu.memory_space<vmem>>, %arg2: memref<3x64xf32, #tpu.memory_space<vmem>>, %arg3: memref<1x64xf32, #tpu.memory_space<vmem>>, %arg4: memref<64x128xbf16, #tpu.memory_space<vmem>>, %arg5: memref<1x128xf32, #tpu.memory_space<vmem>>, %arg6: memref<128x1024xbf16, #tpu.memory_space<vmem>>, %arg7: memref<1x1024xf32, #tpu.memory_space<vmem>>, %arg8: memref<1x2x1024xf32, #tpu.memory_space<vmem>>) attributes {dimension_semantics = [#tpu.dimension_semantics<parallel>], iteration_bounds = array<i64: 2>, scalar_prefetch = 0 : i64, scratch_operands = 0 : i64, tpu.core_type = #tpu.core_type<tc>, window_params = [{transform_indices = @transform_0, window_bounds = array<i64: 2, 128, 3>}, {pipeline_mode = #tpu.pipeline_mode<synchronous>, transform_indices = @transform_1, window_bounds = array<i64: 3, 64>}, {pipeline_mode = #tpu.pipeline_mode<synchronous>, transform_indices = @transform_2, window_bounds = array<i64: 1, 64>}, {pipeline_mode = #tpu.pipeline_mode<synchronous>, transform_indices = @transform_3, window_bounds = array<i64: 64, 128>}, {pipeline_mode = #tpu.pipeline_mode<synchronous>, transform_indices = @transform_4, window_bounds = array<i64: 1, 128>}, {pipeline_mode = #tpu.pipeline_mode<synchronous>, transform_indices = @transform_5, window_bounds = array<i64: 128, 1024>}, {pipeline_mode = #tpu.pipeline_mode<synchronous>, transform_indices = @transform_6, window_bounds = array<i64: 1, 1024>}, {transform_indices = @transform_7, window_bounds = array<i64: 1, 2, 1024>}]} {
    %c0 = arith.constant 0 : index
    %c0_0 = arith.constant 0 : index
    %c0_1 = arith.constant 0 : index
    %0 = vector.load %arg1[%c0, %c0_0, %c0_1] : memref<2x128x3xf32, #tpu.memory_space<vmem>>, vector<2x128x3xf32>
    %1 = vector.shape_cast %0 : vector<2x128x3xf32> to vector<256x3xf32>
    %c0_2 = arith.constant 0 : index
    %c0_3 = arith.constant 0 : index
    %2 = vector.load %arg2[%c0_2, %c0_3] : memref<3x64xf32, #tpu.memory_space<vmem>>, vector<3x64xf32>
    %3 = vector.extract_strided_slice %1 {offsets = [0, 0], sizes = [256, 1], strides = [1, 1]} : vector<256x3xf32> to vector<256x1xf32>
    %4 = vector.extract_strided_slice %2 {offsets = [0, 0], sizes = [1, 64], strides = [1, 1]} : vector<3x64xf32> to vector<1x64xf32>
    %5 = vector.broadcast %3 : vector<256x1xf32> to vector<256x64xf32>
    %6 = vector.broadcast %4 : vector<1x64xf32> to vector<256x64xf32>
    %7 = arith.mulf %5, %6 : vector<256x64xf32>
    %8 = vector.extract_strided_slice %1 {offsets = [0, 1], sizes = [256, 1], strides = [1, 1]} : vector<256x3xf32> to vector<256x1xf32>
    %9 = vector.extract_strided_slice %2 {offsets = [1, 0], sizes = [1, 64], strides = [1, 1]} : vector<3x64xf32> to vector<1x64xf32>
    %10 = vector.broadcast %8 : vector<256x1xf32> to vector<256x64xf32>
    %11 = vector.broadcast %9 : vector<1x64xf32> to vector<256x64xf32>
    %12 = arith.mulf %10, %11 : vector<256x64xf32>
    %13 = arith.addf %7, %12 : vector<256x64xf32>
    %14 = vector.extract_strided_slice %1 {offsets = [0, 2], sizes = [256, 1], strides = [1, 1]} : vector<256x3xf32> to vector<256x1xf32>
    %15 = vector.extract_strided_slice %2 {offsets = [2, 0], sizes = [1, 64], strides = [1, 1]} : vector<3x64xf32> to vector<1x64xf32>
    %16 = vector.broadcast %14 : vector<256x1xf32> to vector<256x64xf32>
    %17 = vector.broadcast %15 : vector<1x64xf32> to vector<256x64xf32>
    %18 = arith.mulf %16, %17 : vector<256x64xf32>
    %19 = arith.addf %13, %18 : vector<256x64xf32>
    %c0_4 = arith.constant 0 : index
    %c0_5 = arith.constant 0 : index
    %20 = vector.load %arg3[%c0_4, %c0_5] : memref<1x64xf32, #tpu.memory_space<vmem>>, vector<1x64xf32>
    %21 = vector.broadcast %20 : vector<1x64xf32> to vector<256x64xf32>
    %22 = arith.addf %19, %21 : vector<256x64xf32>
    %cst = arith.constant 0.000000e+00 : f32
    %23 = vector.broadcast %cst : f32 to vector<256x64xf32>
    %24 = arith.maximumf %22, %23 : vector<256x64xf32>
    %25 = arith.truncf %24 : vector<256x64xf32> to vector<256x64xbf16>
    %c0_6 = arith.constant 0 : index
    %c0_7 = arith.constant 0 : index
    %26 = vector.load %arg4[%c0_6, %c0_7] : memref<64x128xbf16, #tpu.memory_space<vmem>>, vector<64x128xbf16>
    %cst_8 = arith.constant dense<0.000000e+00> : vector<256x128xf32>
    %27 = tpu.matmul %25, %26, %cst_8 {dimension_numbers = #tpu.dot_dimension_numbers<[1], [0], [0], [1], [0, 0, 1, 1], [], []>} : vector<256x64xbf16>, vector<64x128xbf16>, vector<256x128xf32> -> vector<256x128xf32>
    %c0_9 = arith.constant 0 : index
    %c0_10 = arith.constant 0 : index
    %28 = vector.load %arg5[%c0_9, %c0_10] : memref<1x128xf32, #tpu.memory_space<vmem>>, vector<1x128xf32>
    %29 = vector.broadcast %28 : vector<1x128xf32> to vector<256x128xf32>
    %30 = arith.addf %27, %29 : vector<256x128xf32>
    %cst_11 = arith.constant 0.000000e+00 : f32
    %31 = vector.broadcast %cst_11 : f32 to vector<256x128xf32>
    %32 = arith.maximumf %30, %31 : vector<256x128xf32>
    %33 = arith.truncf %32 : vector<256x128xf32> to vector<256x128xbf16>
    %c0_12 = arith.constant 0 : index
    %c0_13 = arith.constant 0 : index
    %34 = vector.load %arg6[%c0_12, %c0_13] : memref<128x1024xbf16, #tpu.memory_space<vmem>>, vector<128x1024xbf16>
    %cst_14 = arith.constant dense<0.000000e+00> : vector<256x1024xf32>
    %35 = tpu.matmul %33, %34, %cst_14 {dimension_numbers = #tpu.dot_dimension_numbers<[1], [0], [0], [1], [0, 0, 1, 1], [], []>} : vector<256x128xbf16>, vector<128x1024xbf16>, vector<256x1024xf32> -> vector<256x1024xf32>
    %c0_15 = arith.constant 0 : index
    %c0_16 = arith.constant 0 : index
    %36 = vector.load %arg7[%c0_15, %c0_16] : memref<1x1024xf32, #tpu.memory_space<vmem>>, vector<1x1024xf32>
    %37 = vector.broadcast %36 : vector<1x1024xf32> to vector<256x1024xf32>
    %38 = arith.addf %35, %37 : vector<256x1024xf32>
    %cst_17 = arith.constant 0.000000e+00 : f32
    %39 = vector.broadcast %cst_17 : f32 to vector<256x1024xf32>
    %40 = arith.maximumf %38, %39 : vector<256x1024xf32>
    %41 = vector.shape_cast %40 : vector<256x1024xf32> to vector<2x128x1024xf32>
    %cst_18 = arith.constant dense<0xFF800000> : vector<2x1024xf32>
    %42 = vector.multi_reduction <maximumf>, %41, %cst_18 [1] : vector<2x128x1024xf32> to vector<2x1024xf32>
    %c0_19 = arith.constant 0 : index
    %c0_20 = arith.constant 0 : index
    %c0_21 = arith.constant 0 : index
    %43 = vector.load %arg8[%c0_19, %c0_20, %c0_21] : memref<1x2x1024xf32, #tpu.memory_space<vmem>>, vector<1x2x1024xf32>
    %44 = vector.shape_cast %43 : vector<1x2x1024xf32> to vector<2x1024xf32>
    %45 = vector.shape_cast %42 : vector<2x1024xf32> to vector<1x2x1024xf32>
    tpu.vector_store %arg8[%c0_19, %c0_20, %c0_21], %45 {strides = array<i32>} : memref<1x2x1024xf32, #tpu.memory_space<vmem>>, vector<1x2x1024xf32>,
    return
  }
  func.func @transform_0(%arg0: i32) -> (i32, i32, i32) {
    %c0_i32 = arith.constant 0 : i32
    %c0_i32_0 = arith.constant 0 : i32
    %c0_i32_1 = arith.constant 0 : i32
    return %arg0, %c0_i32, %c0_i32_0 : i32, i32, i32
  }
  func.func @transform_1(%arg0: i32) -> (i32, i32) {
    %c0_i32 = arith.constant 0 : i32
    %c0_i32_0 = arith.constant 0 : i32
    %c0_i32_1 = arith.constant 0 : i32
    return %c0_i32, %c0_i32_0 : i32, i32
  }
  func.func @transform_2(%arg0: i32) -> (i32, i32) {
    %c0_i32 = arith.constant 0 : i32
    %c0_i32_0 = arith.constant 0 : i32
    %c0_i32_1 = arith.constant 0 : i32
    return %c0_i32, %c0_i32_0 : i32, i32
  }
  func.func @transform_3(%arg0: i32) -> (i32, i32) {
    %c0_i32 = arith.constant 0 : i32
    %c0_i32_0 = arith.constant 0 : i32
    %c0_i32_1 = arith.constant 0 : i32
    return %c0_i32, %c0_i32_0 : i32, i32
  }
  func.func @transform_4(%arg0: i32) -> (i32, i32) {
    %c0_i32 = arith.constant 0 : i32
    %c0_i32_0 = arith.constant 0 : i32
    %c0_i32_1 = arith.constant 0 : i32
    return %c0_i32, %c0_i32_0 : i32, i32
  }
  func.func @transform_5(%arg0: i32) -> (i32, i32) {
    %c0_i32 = arith.constant 0 : i32
    %c0_i32_0 = arith.constant 0 : i32
    %c0_i32_1 = arith.constant 0 : i32
    return %c0_i32, %c0_i32_0 : i32, i32
  }
  func.func @transform_6(%arg0: i32) -> (i32, i32) {
    %c0_i32 = arith.constant 0 : i32
    %c0_i32_0 = arith.constant 0 : i32
    %c0_i32_1 = arith.constant 0 : i32
    return %c0_i32, %c0_i32_0 : i32, i32
  }
  func.func @transform_7(%arg0: i32) -> (i32, i32, i32) {
    %c0_i32 = arith.constant 0 : i32
    %c0_i32_0 = arith.constant 0 : i32
    %c0_i32_1 = arith.constant 0 : i32
    return %arg0, %c0_i32, %c0_i32_0 : i32, i32, i32
  }
}

</mosaic_0001>

<llo_original>
// kernel: qstn_forward.2
$region0: #{qstn_forward.2}
  #allocation0 [shape = 'u32[]', space=smem, size = 0x4, offset = 0x4, fixed_abs, tag = 'smem constant byte address 0x4 - core index']
  #allocation1 [shape = 'u32[72,128]{1,0:T(1,128)}', space=vmem, size = 0x9000, scoped, tag = 'internal scratch']
  %s0 = inlined_call_operand.vmem [shape: f32[4,128,3], index: 0, kind: input, shape index: {}]
  %s1 = inlined_call_operand.vmem [shape: f32[3,64], index: 1, kind: input, shape index: {}]
  %s2 = inlined_call_operand.vmem [shape: f32[1,64], index: 2, kind: input, shape index: {}]
  %s3 = inlined_call_operand.hbm [shape: bf16[64,128], index: 3, kind: input, shape index: {}]
  %s4 = inlined_call_operand.vmem [shape: f32[1,128], index: 4, kind: input, shape index: {}]
  %s5 = inlined_call_operand.vmem [shape: bf16[128,1024], index: 5, kind: input, shape index: {}]
  %s6 = inlined_call_operand.vmem [shape: f32[1,1024], index: 6, kind: input, shape index: {}]
  %s7 = inlined_call_operand.vmem [shape: f32[2,2,1024], index: 7, kind: output, shape index: {}]
  %s8 = sld [smem:[#allocation0]]
  $region65: #{qstn_forward.2} parent=0
    _
  %s10 = ssub.s32 1, %s8
  %s11 = scalar_select 0, %s10, %s8
  $region1: #{qstn_forward.2} parent=0
    #allocation2 [shape = 'u8[16384]{0}', space=vmem, size = 0x4000, scoped, tag = 'input window, operand 3, single buffered']
    #allocation3 [shape = 's32[2]{0}', space=sflag, size = 0x8, scoped, tag = 'scoped memory for qstn_forward.2']
    %12 = vsyncpa [#allocation3], 0
    loop: start=0, step=1, limit=4
    $region2: #{qstn_forward.2} parent=1 // loop_pre_header
      _
    $region3: #{qstn_forward.2} parent=1 // loop_header
      %s14 = sphi 0, %s18
      %p15 = scmp.ge.s32.totalorder %s14, 4
      %s24 = sphi 0, %s26
      %s27 = sphi 0, %s24
      %s28 = sphi 0, %s27
      %s44 = sphi 0, %s28
      %s48 = sphi 0, %s48
      %s50 = sphi 0, %s48
      %s51 = sphi 0, %s50
      %s65 = sphi 0, %s51
      %s69 = sphi 0, %s69
      %s71 = sphi 0, %s69
      %s72 = sphi 0, %s71
      %s86 = sphi 0, %s72
      %s90 = sphi 0, %s90
      %s92 = sphi 0, %s90
      %s93 = sphi 0, %s92
      %s107 = sphi 0, %s93
      %s111 = sphi 0, %s111
      %s113 = sphi 0, %s111
      %s114 = sphi 0, %s113
      %s128 = sphi 0, %s114
      %s132 = sphi 0, %s132
      %s134 = sphi 0, %s132
      %s135 = sphi 0, %s134
      %s149 = sphi 0, %s135
      %s153 = sphi 0, %s153
      %s155 = sphi 0, %s153
      %s156 = sphi 0, %s155
      %s170 = sphi 0, %s156
      %s176 = sphi 0, %s178
      %s179 = sphi 0, %s176
      %s180 = sphi 0, %s179
      %s196 = sphi 0, %s180
    $region4: #{qstn_forward.2} parent=1 // loop_header_branch
      %17 = sbr.rel (%p15) target = $region8
    $region5: #{qstn_forward.2} parent=1 // loop_body
      %s19 = ssub.s32 %s14, 1
      %s20 = ssub.s32 %s14, 2
      %s21 = sadd.s32 %s14, 1
      %s22 = ssub.s32 %s14, %s21
      %p23 = scmp.eq.s32.totalorder %s22, 0
      %s25 = sadd.s32 %s24, 1
      %s26 = scalar_select %p23, %s24, %s25
      %p29 = pneg %p23
      %p30 = scmp.eq.s32.totalorder %s14, 1
      %p31 = por %p29, %p30
      %p32 = scmp.ne.s32.totalorder %s24, %s27
      %p33 = scmp.eq.s32.totalorder %s14, 0
      %p34 = por %p32, %p33
      %p35 = scmp.ne.s32.totalorder %s24, %s27
      %p36 = scmp.eq.s32.totalorder %s19, 1
      %p37 = por %p35, %p36
      %p38 = scmp.ne.s32.totalorder %s27, %s28
      %p39 = scmp.eq.s32.totalorder %s19, 0
      %p40 = por %p38, %p39
      %p41 = scmp.ne.s32.totalorder %s27, %s28
      %p42 = scmp.eq.s32.totalorder %s20, 1
      %p43 = por %p41, %p42
      %p45 = scmp.ne.s32.totalorder %s28, %s44
      %p46 = scmp.eq.s32.totalorder %s20, 0
      %p47 = por %p45, %p46
      %s49 = sadd.s32 %s48, 1
      %p52 = scmp.eq.s32.totalorder %s14, 1
      %p53 = scmp.ne.s32.totalorder %s48, %s50
      %p54 = scmp.eq.s32.totalorder %s14, 0
      %p55 = por %p53, %p54
      %p56 = scmp.ne.s32.totalorder %s48, %s50
      %p57 = scmp.eq.s32.totalorder %s19, 1
      %p58 = por %p56, %p57
      %p59 = scmp.ne.s32.totalorder %s50, %s51
      %p60 = scmp.eq.s32.totalorder %s19, 0
      %p61 = por %p59, %p60
      %p62 = scmp.ne.s32.totalorder %s50, %s51
      %p63 = scmp.eq.s32.totalorder %s20, 1
      %p64 = por %p62, %p63
      %p66 = scmp.ne.s32.totalorder %s51, %s65
      %p67 = scmp.eq.s32.totalorder %s20, 0
      %p68 = por %p66, %p67
      %s70 = sadd.s32 %s69, 1
      %p73 = scmp.eq.s32.totalorder %s14, 1
      %p74 = scmp.ne.s32.totalorder %s69, %s71
      %p75 = scmp.eq.s32.totalorder %s14, 0
      %p76 = por %p74, %p75
      %p77 = scmp.ne.s32.totalorder %s69, %s71
      %p78 = scmp.eq.s32.totalorder %s19, 1
      %p79 = por %p77, %p78
      %p80 = scmp.ne.s32.totalorder %s71, %s72
      %p81 = scmp.eq.s32.totalorder %s19, 0
      %p82 = por %p80, %p81
      %p83 = scmp.ne.s32.totalorder %s71, %s72
      %p84 = scmp.eq.s32.totalorder %s20, 1
      %p85 = por %p83, %p84
      %p87 = scmp.ne.s32.totalorder %s72, %s86
      %p88 = scmp.eq.s32.totalorder %s20, 0
      %p89 = por %p87, %p88
      %s91 = sadd.s32 %s90, 1
      %p94 = scmp.eq.s32.totalorder %s14, 1
      %p95 = scmp.ne.s32.totalorder %s90, %s92
      %p96 = scmp.eq.s32.totalorder %s14, 0
      %p97 = por %p95, %p96
      %p98 = scmp.ne.s32.totalorder %s90, %s92
      %p99 = scmp.eq.s32.totalorder %s19, 1
      %p100 = por %p98, %p99
      %p101 = scmp.ne.s32.totalorder %s92, %s93
      %p102 = scmp.eq.s32.totalorder %s19, 0
      %p103 = por %p101, %p102
      %p104 = scmp.ne.s32.totalorder %s92, %s93
      %p105 = scmp.eq.s32.totalorder %s20, 1
      %p106 = por %p104, %p105
      %p108 = scmp.ne.s32.totalorder %s93, %s107
      %p109 = scmp.eq.s32.totalorder %s20, 0
      %p110 = por %p108, %p109
      %s112 = sadd.s32 %s111, 1
      %p115 = scmp.eq.s32.totalorder %s14, 1
      %p116 = scmp.ne.s32.totalorder %s111, %s113
      %p117 = scmp.eq.s32.totalorder %s14, 0
      %p118 = por %p116, %p117
      %p119 = scmp.ne.s32.totalorder %s111, %s113
      %p120 = scmp.eq.s32.totalorder %s19, 1
      %p121 = por %p119, %p120
      %p122 = scmp.ne.s32.totalorder %s113, %s114
      %p123 = scmp.eq.s32.totalorder %s19, 0
      %p124 = por %p122, %p123
      %p125 = scmp.ne.s32.totalorder %s113, %s114
      %p126 = scmp.eq.s32.totalorder %s20, 1
      %p127 = por %p125, %p126
      %p129 = scmp.ne.s32.totalorder %s114, %s128
      %p130 = scmp.eq.s32.totalorder %s20, 0
      %p131 = por %p129, %p130
      %s133 = sadd.s32 %s132, 1
      %p136 = scmp.eq.s32.totalorder %s14, 1
      %p137 = scmp.ne.s32.totalorder %s132, %s134
      %p138 = scmp.eq.s32.totalorder %s14, 0
      %p139 = por %p137, %p138
      %p140 = scmp.ne.s32.totalorder %s132, %s134
      %p141 = scmp.eq.s32.totalorder %s19, 1
      %p142 = por %p140, %p141
      %p143 = scmp.ne.s32.totalorder %s134, %s135
      %p144 = scmp.eq.s32.totalorder %s19, 0
      %p145 = por %p143, %p144
      %p146 = scmp.ne.s32.totalorder %s134, %s135
      %p147 = scmp.eq.s32.totalorder %s20, 1
      %p148 = por %p146, %p147
      %p150 = scmp.ne.s32.totalorder %s135, %s149
      %p151 = scmp.eq.s32.totalorder %s20, 0
      %p152 = por %p150, %p151
      %s154 = sadd.s32 %s153, 1
      %p157 = scmp.eq.s32.totalorder %s14, 1
      %p158 = scmp.ne.s32.totalorder %s153, %s155
      %p159 = scmp.eq.s32.totalorder %s14, 0
      %p160 = por %p158, %p159
      %p161 = scmp.ne.s32.totalorder %s153, %s155
      %p162 = scmp.eq.s32.totalorder %s19, 1
      %p163 = por %p161, %p162
      %p164 = scmp.ne.s32.totalorder %s155, %s156
      %p165 = scmp.eq.s32.totalorder %s19, 0
      %p166 = por %p164, %p165
      %p167 = scmp.ne.s32.totalorder %s155, %s156
      %p168 = scmp.eq.s32.totalorder %s20, 1
      %p169 = por %p167, %p168
      %p171 = scmp.ne.s32.totalorder %s156, %s170
      %p172 = scmp.eq.s32.totalorder %s20, 0
      %p173 = por %p171, %p172
      %s174 = ssub.s32 %s14, %s21
      %p175 = scmp.eq.s32.totalorder %s174, 0
      %s177 = sadd.s32 %s176, 1
      %s178 = scalar_select %p175, %s176, %s177
      %p181 = pneg %p175
      %p182 = scmp.eq.s32.totalorder %s14, 1
      %p183 = por %p181, %p182
      %p184 = scmp.ne.s32.totalorder %s176, %s179
      %p185 = scmp.eq.s32.totalorder %s14, 0
      %p186 = por %p184, %p185
      %p187 = scmp.ne.s32.totalorder %s176, %s179
      %p188 = scmp.eq.s32.totalorder %s19, 1
      %p189 = por %p187, %p188
      %p190 = scmp.ne.s32.totalorder %s179, %s180
      %p191 = scmp.eq.s32.totalorder %s19, 0
      %p192 = por %p190, %p191
      %p193 = scmp.ne.s32.totalorder %s179, %s180
      %p194 = scmp.eq.s32.totalorder %s20, 1
      %p195 = por %p193, %p194
      %p197 = scmp.ne.s32.totalorder %s180, %s196
      %p198 = scmp.eq.s32.totalorder %s20, 0
      %p199 = por %p197, %p198
      %p200 = scmp.le.s32.totalorder 1, %s14
      %p201 = scmp.lt.s32.totalorder %s14, 3
      %p202 = pnand %p200, %p201
      %p203 = pneg %p202
      // Predicated region
      $region9: #{qstn_forward.2} parent=5 // pred_check
        _
      $region10: #{qstn_forward.2} parent=5 // pred_check_branch
        %205 = sbr.rel (%p202) target = $region12
      $region11: #{qstn_forward.2} parent=5 // pred_region
        %s206 = ssub.s32 %s14, 1
        // Predicated region
        $region13: #{qstn_forward.2} parent=11 // pred_check
          %p207 = pneg %p61
        $region14: #{qstn_forward.2} parent=11 // pred_check_branch
          %209 = sbr.rel (%p207) target = $region16
        $region15: #{qstn_forward.2} parent=11 // pred_region
          _
        $region16: #{qstn_forward.2} parent=11 // pred_fallthru
          _
        // Predicated region
        $region17: #{qstn_forward.2} parent=11 // pred_check
          %p210 = pneg %p82
        $region18: #{qstn_forward.2} parent=11 // pred_check_branch
          %212 = sbr.rel (%p210) target = $region20
        $region19: #{qstn_forward.2} parent=11 // pred_region
          _
        $region20: #{qstn_forward.2} parent=11 // pred_fallthru
          _
        // Predicated region
        $region21: #{qstn_forward.2} parent=11 // pred_check
          %p213 = pneg %p103
        $region22: #{qstn_forward.2} parent=11 // pred_check_branch
          %215 = sbr.rel (%p213) target = $region24
        $region23: #{qstn_forward.2} parent=11 // pred_region
          %217 = vsyncadd [#allocation3], 0
          %s218 = sshll.u32 %s3, 4
          %s219 = int_to_ptr.hbm [resolvable:$true] %s218
          %s220 = sshll.u32 [#allocation2], 4
          %s221 = int_to_ptr.vmem [resolvable:$true] %s220
          %226 = dma.hbm_to_vmem [thread:$0]  %s219, 512, %s221, [#allocation3], 64, 64, 4
        $region24: #{qstn_forward.2} parent=11 // pred_fallthru
          _
        // Predicated region
        $region25: #{qstn_forward.2} parent=11 // pred_check
          %p227 = pneg %p124
        $region26: #{qstn_forward.2} parent=11 // pred_check_branch
          %229 = sbr.rel (%p227) target = $region28
        $region27: #{qstn_forward.2} parent=11 // pred_region
          _
        $region28: #{qstn_forward.2} parent=11 // pred_fallthru
          _
        // Predicated region
        $region29: #{qstn_forward.2} parent=11 // pred_check
          %p230 = pneg %p145
        $region30: #{qstn_forward.2} parent=11 // pred_check_branch
          %232 = sbr.rel (%p230) target = $region32
        $region31: #{qstn_forward.2} parent=11 // pred_region
          _
        $region32: #{qstn_forward.2} parent=11 // pred_fallthru
          _
        // Predicated region
        $region33: #{qstn_forward.2} parent=11 // pred_check
          %p233 = pneg %p166
        $region34: #{qstn_forward.2} parent=11 // pred_check_branch
          %235 = sbr.rel (%p233) target = $region36
        $region35: #{qstn_forward.2} parent=11 // pred_region
          _
        $region36: #{qstn_forward.2} parent=11 // pred_fallthru
          _
      $region12: #{qstn_forward.2} parent=5 // pred_fallthru
        _
      %p236 = scmp.lt.s32.totalorder %s14, 2
      // Predicated region
      $region37: #{qstn_forward.2} parent=5 // pred_check
        %p237 = pneg %p236
      $region38: #{qstn_forward.2} parent=5 // pred_check_branch
        %239 = sbr.rel (%p237) target = $region40
      $region39: #{qstn_forward.2} parent=5 // pred_region
        // Predicated region
        $region41: #{qstn_forward.2} parent=39 // pred_check
          %p240 = pneg %p34
        $region42: #{qstn_forward.2} parent=39 // pred_check_branch
          %242 = sbr.rel (%p240) target = $region44
        $region43: #{qstn_forward.2} parent=39 // pred_region
          %s243 = smul.u32 2, %s14
          %p244 = scmp.lt.s32.totalorder %s243, 3
          %s245 = scalar_select %p244, %s243, 3
          %s246 = smul.addr %s245, 16
          %s247 = smul.addr %s246, 8
          %s248 = scalar_lea.vmem %s0, %s247
          %s249 = smul.u32 2, %s14
        $region44: #{qstn_forward.2} parent=39 // pred_fallthru
          _
      $region40: #{qstn_forward.2} parent=5 // pred_fallthru
        _
      %p250 = scmp.le.s32.totalorder 1, %s14
      %p251 = scmp.lt.s32.totalorder %s14, 3
      %p252 = pnand %p250, %p251
      %p253 = pneg %p252
      // Predicated region
      $region45: #{qstn_forward.2} parent=5 // pred_check
        _
      $region46: #{qstn_forward.2} parent=5 // pred_check_branch
        %255 = sbr.rel (%p252) target = $region48
      $region47: #{qstn_forward.2} parent=5 // pred_region
        %s256 = ssub.s32 %s14, 1
        // Predicated region
        $region49: #{qstn_forward.2} parent=47 // pred_check
          %p257 = pneg %p103
        $region50: #{qstn_forward.2} parent=47 // pred_check_branch
          %259 = sbr.rel (%p257) target = $region52
        $region51: #{qstn_forward.2} parent=47 // pred_region
          %261 = dma.done [#allocation3], 512
        $region52: #{qstn_forward.2} parent=47 // pred_fallthru
          _
        %s262 = smul.u32 2, %s19
        %p263 = scmp.lt.s32.totalorder %s262, 3
        %s264 = scalar_select %p263, %s262, 3
        %s265 = smul.addr %s264, 16
        %s266 = smul.addr %s265, 8
        %s267 = scalar_lea.vmem %s0, %s266
        %p268 = pneg %p40
        %p269 = pneg %p37
        %p270 = pneg %p61
        %p271 = pneg %p58
        %p272 = pneg %p82
        %p273 = pneg %p79
        %p274 = pneg %p103
        %p275 = pneg %p100
        %p276 = pneg %p124
        %p277 = pneg %p121
        %p278 = pneg %p145
        %p279 = pneg %p142
        %p280 = pneg %p166
        %p281 = pneg %p163
        %p282 = pneg %p192
        %p283 = pneg %p189
        %p284 = scmp.lt.s32.totalorder %s19, 1
        %s285 = scalar_select %p284, %s19, 1
        %s286 = smul.addr %s285, 8
        %s287 = smul.addr %s286, 2
        %s288 = scalar_lea.vmem %s7, %s287
        %s289 = smul.u32 2, %s19
        %p290 = scmp.lt.s32.totalorder %s289, 3
        %s291 = scalar_select %p290, %s289, 3
        %s292 = smul.addr %s291, 16
        %s293 = smul.addr %s292, 8
        %s294 = scalar_lea.vmem %s0, %s293
        %s295 = smul.u32 2, %s19
        %p296 = scmp.lt.s32.totalorder %s19, 1
        %s297 = scalar_select %p296, %s19, 1
        %s298 = smul.addr %s297, 8
        %s299 = smul.addr %s298, 2
        %s300 = scalar_lea.vmem %s7, %s299
        %v302 = vld [vmem:[%s294] sm:$0xff]
        %v303 = vld [vmem:[%s294 + $0x8] sm:$0xff]
        %v304 = vld [vmem:[%s294 + $0x10] sm:$0xff]
        %v305 = vld [vmem:[%s294 + $0x18] sm:$0xff]
        %v306 = vld [vmem:[%s294 + $0x20] sm:$0xff]
        %v307 = vld [vmem:[%s294 + $0x28] sm:$0xff]
        %v308 = vld [vmem:[%s294 + $0x30] sm:$0xff]
        %v309 = vld [vmem:[%s294 + $0x38] sm:$0xff]
        %v310 = vld [vmem:[%s294 + $0x40] sm:$0xff]
        %v311 = vld [vmem:[%s294 + $0x48] sm:$0xff]
        %v312 = vld [vmem:[%s294 + $0x50] sm:$0xff]
        %v313 = vld [vmem:[%s294 + $0x58] sm:$0xff]
        %v314 = vld [vmem:[%s294 + $0x60] sm:$0xff]
        %v315 = vld [vmem:[%s294 + $0x68] sm:$0xff]
        %v316 = vld [vmem:[%s294 + $0x70] sm:$0xff]
        %v317 = vld [vmem:[%s294 + $0x78] sm:$0xff]
        %v318 = vld [vmem:[%s294 + $0x80] sm:$0xff]
        %v319 = vld [vmem:[%s294 + $0x88] sm:$0xff]
        %v320 = vld [vmem:[%s294 + $0x90] sm:$0xff]
        %v321 = vld [vmem:[%s294 + $0x98] sm:$0xff]
        %v322 = vld [vmem:[%s294 + $0xa0] sm:$0xff]
        %v323 = vld [vmem:[%s294 + $0xa8] sm:$0xff]
        %v324 = vld [vmem:[%s294 + $0xb0] sm:$0xff]
        %v325 = vld [vmem:[%s294 + $0xb8] sm:$0xff]
        %v326 = vld [vmem:[%s294 + $0xc0] sm:$0xff]
        %v327 = vld [vmem:[%s294 + $0xc8] sm:$0xff]
        %v328 = vld [vmem:[%s294 + $0xd0] sm:$0xff]
        %v329 = vld [vmem:[%s294 + $0xd8] sm:$0xff]
        %v330 = vld [vmem:[%s294 + $0xe0] sm:$0xff]
        %v331 = vld [vmem:[%s294 + $0xe8] sm:$0xff]
        %v332 = vld [vmem:[%s294 + $0xf0] sm:$0xff]
        %v333 = vld [vmem:[%s294 + $0xf8] sm:$0xff]
        %v334 = vld [vmem:[%s1] sm:$0x7]
        %336 = vset.pattern.permute.xlu0 0
        %337 = vperm.xlu0 %336, %v302
        %v338 = vpop.permute.xlu0 %337
        %341 = vset.pattern.permute.xlu0 0
        %342 = vperm.xlu0 %341, %v303
        %v343 = vpop.permute.xlu0 %342
        %346 = vset.pattern.permute.xlu0 0
        %347 = vperm.xlu0 %346, %v304
        %v348 = vpop.permute.xlu0 %347
        %351 = vset.pattern.permute.xlu0 0
        %352 = vperm.xlu0 %351, %v305
        %v353 = vpop.permute.xlu0 %352
        %356 = vset.pattern.permute.xlu0 0
        %357 = vperm.xlu0 %356, %v306
        %v358 = vpop.permute.xlu0 %357
        %361 = vset.pattern.permute.xlu0 0
        %362 = vperm.xlu0 %361, %v307
        %v363 = vpop.permute.xlu0 %362
        %366 = vset.pattern.permute.xlu0 0
        %367 = vperm.xlu0 %366, %v308
        %v368 = vpop.permute.xlu0 %367
        %371 = vset.pattern.permute.xlu0 0
        %372 = vperm.xlu0 %371, %v309
        %v373 = vpop.permute.xlu0 %372
        %376 = vset.pattern.permute.xlu0 0
        %377 = vperm.xlu0 %376, %v310
        %v378 = vpop.permute.xlu0 %377
        %381 = vset.pattern.permute.xlu0 0
        %382 = vperm.xlu0 %381, %v311
        %v383 = vpop.permute.xlu0 %382
        %386 = vset.pattern.permute.xlu0 0
        %387 = vperm.xlu0 %386, %v312
        %v388 = vpop.permute.xlu0 %387
        %391 = vset.pattern.permute.xlu0 0
        %392 = vperm.xlu0 %391, %v313
        %v393 = vpop.permute.xlu0 %392
        %396 = vset.pattern.permute.xlu0 0
        %397 = vperm.xlu0 %396, %v314
        %v398 = vpop.permute.xlu0 %397
        %401 = vset.pattern.permute.xlu0 0
        %402 = vperm.xlu0 %401, %v315
        %v403 = vpop.permute.xlu0 %402
        %406 = vset.pattern.permute.xlu0 0
        %407 = vperm.xlu0 %406, %v316
        %v408 = vpop.permute.xlu0 %407
        %411 = vset.pattern.permute.xlu0 0
        %412 = vperm.xlu0 %411, %v317
        %v413 = vpop.permute.xlu0 %412
        %416 = vset.pattern.permute.xlu0 0
        %417 = vperm.xlu0 %416, %v318
        %v418 = vpop.permute.xlu0 %417
        %421 = vset.pattern.permute.xlu0 0
        %422 = vperm.xlu0 %421, %v319
        %v423 = vpop.permute.xlu0 %422
        %426 = vset.pattern.permute.xlu0 0
        %427 = vperm.xlu0 %426, %v320
        %v428 = vpop.permute.xlu0 %427
        %431 = vset.pattern.permute.xlu0 0
        %432 = vperm.xlu0 %431, %v321
        %v433 = vpop.permute.xlu0 %432
        %436 = vset.pattern.permute.xlu0 0
        %437 = vperm.xlu0 %436, %v322
        %v438 = vpop.permute.xlu0 %437
        %441 = vset.pattern.permute.xlu0 0
        %442 = vperm.xlu0 %441, %v323
        %v443 = vpop.permute.xlu0 %442
        %446 = vset.pattern.permute.xlu0 0
        %447 = vperm.xlu0 %446, %v324
        %v448 = vpop.permute.xlu0 %447
        %451 = vset.pattern.permute.xlu0 0
        %452 = vperm.xlu0 %451, %v325
        %v453 = vpop.permute.xlu0 %452
        %456 = vset.pattern.permute.xlu0 0
        %457 = vperm.xlu0 %456, %v326
        %v458 = vpop.permute.xlu0 %457
        %461 = vset.pattern.permute.xlu0 0
        %462 = vperm.xlu0 %461, %v327
        %v463 = vpop.permute.xlu0 %462
        %466 = vset.pattern.permute.xlu0 0
        %467 = vperm.xlu0 %466, %v328
        %v468 = vpop.permute.xlu0 %467
        %471 = vset.pattern.permute.xlu0 0
        %472 = vperm.xlu0 %471, %v329
        %v473 = vpop.permute.xlu0 %472
        %476 = vset.pattern.permute.xlu0 0
        %477 = vperm.xlu0 %476, %v330
        %v478 = vpop.permute.xlu0 %477
        %481 = vset.pattern.permute.xlu0 0
        %482 = vperm.xlu0 %481, %v331
        %v483 = vpop.permute.xlu0 %482
        %486 = vset.pattern.permute.xlu0 0
        %487 = vperm.xlu0 %486, %v332
        %v488 = vpop.permute.xlu0 %487
        %491 = vset.pattern.permute.xlu0 0
        %492 = vperm.xlu0 %491, %v333
        %v493 = vpop.permute.xlu0 %492
        %v495 = vperm.slane %v334, 0
        %v496 = vmul.f32 %v338, %v495
        %v497 = vmul.f32 %v343, %v495
        %v498 = vmul.f32 %v348, %v495
        %v499 = vmul.f32 %v353, %v495
        %v500 = vmul.f32 %v358, %v495
        %v501 = vmul.f32 %v363, %v495
        %v502 = vmul.f32 %v368, %v495
        %v503 = vmul.f32 %v373, %v495
        %v504 = vmul.f32 %v378, %v495
        %v505 = vmul.f32 %v383, %v495
        %v506 = vmul.f32 %v388, %v495
        %v507 = vmul.f32 %v393, %v495
        %v508 = vmul.f32 %v398, %v495
        %v509 = vmul.f32 %v403, %v495
        %v510 = vmul.f32 %v408, %v495
        %v511 = vmul.f32 %v413, %v495
        %v512 = vmul.f32 %v418, %v495
        %v513 = vmul.f32 %v423, %v495
        %v514 = vmul.f32 %v428, %v495
        %v515 = vmul.f32 %v433, %v495
        %v516 = vmul.f32 %v438, %v495
        %v517 = vmul.f32 %v443, %v495
        %v518 = vmul.f32 %v448, %v495
        %v519 = vmul.f32 %v453, %v495
        %v520 = vmul.f32 %v458, %v495
        %v521 = vmul.f32 %v463, %v495
        %v522 = vmul.f32 %v468, %v495
        %v523 = vmul.f32 %v473, %v495
        %v524 = vmul.f32 %v478, %v495
        %v525 = vmul.f32 %v483, %v495
        %v526 = vmul.f32 %v488, %v495
        %v527 = vmul.f32 %v493, %v495
        %528 = vset.pattern.permute.xlu0 1
        %529 = vperm.xlu0 %528, %v302
        %v530 = vpop.permute.xlu0 %529
        %532 = vset.pattern.permute.xlu0 1
        %533 = vperm.xlu0 %532, %v303
        %v534 = vpop.permute.xlu0 %533
        %536 = vset.pattern.permute.xlu0 1
        %537 = vperm.xlu0 %536, %v304
        %v538 = vpop.permute.xlu0 %537
        %540 = vset.pattern.permute.xlu0 1
        %541 = vperm.xlu0 %540, %v305
        %v542 = vpop.permute.xlu0 %541
        %544 = vset.pattern.permute.xlu0 1
        %545 = vperm.xlu0 %544, %v306
        %v546 = vpop.permute.xlu0 %545
        %548 = vset.pattern.permute.xlu0 1
        %549 = vperm.xlu0 %548, %v307
        %v550 = vpop.permute.xlu0 %549
        %552 = vset.pattern.permute.xlu0 1
        %553 = vperm.xlu0 %552, %v308
        %v554 = vpop.permute.xlu0 %553
        %556 = vset.pattern.permute.xlu0 1
        %557 = vperm.xlu0 %556, %v309
        %v558 = vpop.permute.xlu0 %557
        %560 = vset.pattern.permute.xlu0 1
        %561 = vperm.xlu0 %560, %v310
        %v562 = vpop.permute.xlu0 %561
        %564 = vset.pattern.permute.xlu0 1
        %565 = vperm.xlu0 %564, %v311
        %v566 = vpop.permute.xlu0 %565
        %568 = vset.pattern.permute.xlu0 1
        %569 = vperm.xlu0 %568, %v312
        %v570 = vpop.permute.xlu0 %569
        %572 = vset.pattern.permute.xlu0 1
        %573 = vperm.xlu0 %572, %v313
        %v574 = vpop.permute.xlu0 %573
        %576 = vset.pattern.permute.xlu0 1
        %577 = vperm.xlu0 %576, %v314
        %v578 = vpop.permute.xlu0 %577
        %580 = vset.pattern.permute.xlu0 1
        %581 = vperm.xlu0 %580, %v315
        %v582 = vpop.permute.xlu0 %581
        %584 = vset.pattern.permute.xlu0 1
        %585 = vperm.xlu0 %584, %v316
        %v586 = vpop.permute.xlu0 %585
        %588 = vset.pattern.permute.xlu0 1
        %589 = vperm.xlu0 %588, %v317
        %v590 = vpop.permute.xlu0 %589
        %592 = vset.pattern.permute.xlu0 1
        %593 = vperm.xlu0 %592, %v318
        %v594 = vpop.permute.xlu0 %593
        %596 = vset.pattern.permute.xlu0 1
        %597 = vperm.xlu0 %596, %v319
        %v598 = vpop.permute.xlu0 %597
        %600 = vset.pattern.permute.xlu0 1
        %601 = vperm.xlu0 %600, %v320
        %v602 = vpop.permute.xlu0 %601
        %604 = vset.pattern.permute.xlu0 1
        %605 = vperm.xlu0 %604, %v321
        %v606 = vpop.permute.xlu0 %605
        %608 = vset.pattern.permute.xlu0 1
        %609 = vperm.xlu0 %608, %v322
        %v610 = vpop.permute.xlu0 %609
        %612 = vset.pattern.permute.xlu0 1
        %613 = vperm.xlu0 %612, %v323
        %v614 = vpop.permute.xlu0 %613
        %616 = vset.pattern.permute.xlu0 1
        %617 = vperm.xlu0 %616, %v324
        %v618 = vpop.permute.xlu0 %617
        %620 = vset.pattern.permute.xlu0 1
        %621 = vperm.xlu0 %620, %v325
        %v622 = vpop.permute.xlu0 %621
        %624 = vset.pattern.permute.xlu0 1
        %625 = vperm.xlu0 %624, %v326
        %v626 = vpop.permute.xlu0 %625
        %628 = vset.pattern.permute.xlu0 1
        %629 = vperm.xlu0 %628, %v327
        %v630 = vpop.permute.xlu0 %629
        %632 = vset.pattern.permute.xlu0 1
        %633 = vperm.xlu0 %632, %v328
        %v634 = vpop.permute.xlu0 %633
        %636 = vset.pattern.permute.xlu0 1
        %637 = vperm.xlu0 %636, %v329
        %v638 = vpop.permute.xlu0 %637
        %640 = vset.pattern.permute.xlu0 1
        %641 = vperm.xlu0 %640, %v330
        %v642 = vpop.permute.xlu0 %641
        %644 = vset.pattern.permute.xlu0 1
        %645 = vperm.xlu0 %644, %v331
        %v646 = vpop.permute.xlu0 %645
        %648 = vset.pattern.permute.xlu0 1
        %649 = vperm.xlu0 %648, %v332
        %v650 = vpop.permute.xlu0 %649
        %652 = vset.pattern.permute.xlu0 1
        %653 = vperm.xlu0 %652, %v333
        %v654 = vpop.permute.xlu0 %653
        %v656 = vperm.slane %v334, 1
        %v657 = vmul.f32 %v530, %v656
        %v658 = vmul.f32 %v534, %v656
        %v659 = vmul.f32 %v538, %v656
        %v660 = vmul.f32 %v542, %v656
        %v661 = vmul.f32 %v546, %v656
        %v662 = vmul.f32 %v550, %v656
        %v663 = vmul.f32 %v554, %v656
        %v664 = vmul.f32 %v558, %v656
        %v665 = vmul.f32 %v562, %v656
        %v666 = vmul.f32 %v566, %v656
        %v667 = vmul.f32 %v570, %v656
        %v668 = vmul.f32 %v574, %v656
        %v669 = vmul.f32 %v578, %v656
        %v670 = vmul.f32 %v582, %v656
        %v671 = vmul.f32 %v586, %v656
        %v672 = vmul.f32 %v590, %v656
        %v673 = vmul.f32 %v594, %v656
        %v674 = vmul.f32 %v598, %v656
        %v675 = vmul.f32 %v602, %v656
        %v676 = vmul.f32 %v606, %v656
        %v677 = vmul.f32 %v610, %v656
        %v678 = vmul.f32 %v614, %v656
        %v679 = vmul.f32 %v618, %v656
        %v680 = vmul.f32 %v622, %v656
        %v681 = vmul.f32 %v626, %v656
        %v682 = vmul.f32 %v630, %v656
        %v683 = vmul.f32 %v634, %v656
        %v684 = vmul.f32 %v638, %v656
        %v685 = vmul.f32 %v642, %v656
        %v686 = vmul.f32 %v646, %v656
        %v687 = vmul.f32 %v650, %v656
        %v688 = vmul.f32 %v654, %v656
        %v689 = vadd.f32 %v496, %v657
        %v690 = vadd.f32 %v497, %v658
        %v691 = vadd.f32 %v498, %v659
        %v692 = vadd.f32 %v499, %v660
        %v693 = vadd.f32 %v500, %v661
        %v694 = vadd.f32 %v501, %v662
        %v695 = vadd.f32 %v502, %v663
        %v696 = vadd.f32 %v503, %v664
        %v697 = vadd.f32 %v504, %v665
        %v698 = vadd.f32 %v505, %v666
        %v699 = vadd.f32 %v506, %v667
        %v700 = vadd.f32 %v507, %v668
        %v701 = vadd.f32 %v508, %v669
        %v702 = vadd.f32 %v509, %v670
        %v703 = vadd.f32 %v510, %v671
        %v704 = vadd.f32 %v511, %v672
        %v705 = vadd.f32 %v512, %v673
        %v706 = vadd.f32 %v513, %v674
        %v707 = vadd.f32 %v514, %v675
        %v708 = vadd.f32 %v515, %v676
        %v709 = vadd.f32 %v516, %v677
        %v710 = vadd.f32 %v517, %v678
        %v711 = vadd.f32 %v518, %v679
        %v712 = vadd.f32 %v519, %v680
        %v713 = vadd.f32 %v520, %v681
        %v714 = vadd.f32 %v521, %v682
        %v715 = vadd.f32 %v522, %v683
        %v716 = vadd.f32 %v523, %v684
        %v717 = vadd.f32 %v524, %v685
        %v718 = vadd.f32 %v525, %v686
        %v719 = vadd.f32 %v526, %v687
        %v720 = vadd.f32 %v527, %v688
        %721 = vset.pattern.permute.xlu0 2
        %722 = vperm.xlu0 %721, %v302
        %v723 = vpop.permute.xlu0 %722
        %725 = vset.pattern.permute.xlu0 2
        %726 = vperm.xlu0 %725, %v303
        %v727 = vpop.permute.xlu0 %726
        %729 = vset.pattern.permute.xlu0 2
        %730 = vperm.xlu0 %729, %v304
        %v731 = vpop.permute.xlu0 %730
        %733 = vset.pattern.permute.xlu0 2
        %734 = vperm.xlu0 %733, %v305
        %v735 = vpop.permute.xlu0 %734
        %737 = vset.pattern.permute.xlu0 2
        %738 = vperm.xlu0 %737, %v306
        %v739 = vpop.permute.xlu0 %738
        %741 = vset.pattern.permute.xlu0 2
        %742 = vperm.xlu0 %741, %v307
        %v743 = vpop.permute.xlu0 %742
        %745 = vset.pattern.permute.xlu0 2
        %746 = vperm.xlu0 %745, %v308
        %v747 = vpop.permute.xlu0 %746
        %749 = vset.pattern.permute.xlu0 2
        %750 = vperm.xlu0 %749, %v309
        %v751 = vpop.permute.xlu0 %750
        %753 = vset.pattern.permute.xlu0 2
        %754 = vperm.xlu0 %753, %v310
        %v755 = vpop.permute.xlu0 %754
        %757 = vset.pattern.permute.xlu0 2
        %758 = vperm.xlu0 %757, %v311
        %v759 = vpop.permute.xlu0 %758
        %761 = vset.pattern.permute.xlu0 2
        %762 = vperm.xlu0 %761, %v312
        %v763 = vpop.permute.xlu0 %762
        %765 = vset.pattern.permute.xlu0 2
        %766 = vperm.xlu0 %765, %v313
        %v767 = vpop.permute.xlu0 %766
        %769 = vset.pattern.permute.xlu0 2
        %770 = vperm.xlu0 %769, %v314
        %v771 = vpop.permute.xlu0 %770
        %773 = vset.pattern.permute.xlu0 2
        %774 = vperm.xlu0 %773, %v315
        %v775 = vpop.permute.xlu0 %774
        %777 = vset.pattern.permute.xlu0 2
        %778 = vperm.xlu0 %777, %v316
        %v779 = vpop.permute.xlu0 %778
        %781 = vset.pattern.permute.xlu0 2
        %782 = vperm.xlu0 %781, %v317
        %v783 = vpop.permute.xlu0 %782
        %785 = vset.pattern.permute.xlu0 2
        %786 = vperm.xlu0 %785, %v318
        %v787 = vpop.permute.xlu0 %786
        %789 = vset.pattern.permute.xlu0 2
        %790 = vperm.xlu0 %789, %v319
        %v791 = vpop.permute.xlu0 %790
        %793 = vset.pattern.permute.xlu0 2
        %794 = vperm.xlu0 %793, %v320
        %v795 = vpop.permute.xlu0 %794
        %797 = vset.pattern.permute.xlu0 2
        %798 = vperm.xlu0 %797, %v321
        %v799 = vpop.permute.xlu0 %798
        %801 = vset.pattern.permute.xlu0 2
        %802 = vperm.xlu0 %801, %v322
        %v803 = vpop.permute.xlu0 %802
        %805 = vset.pattern.permute.xlu0 2
        %806 = vperm.xlu0 %805, %v323
        %v807 = vpop.permute.xlu0 %806
        %809 = vset.pattern.permute.xlu0 2
        %810 = vperm.xlu0 %809, %v324
        %v811 = vpop.permute.xlu0 %810
        %813 = vset.pattern.permute.xlu0 2
        %814 = vperm.xlu0 %813, %v325
        %v815 = vpop.permute.xlu0 %814
        %817 = vset.pattern.permute.xlu0 2
        %818 = vperm.xlu0 %817, %v326
        %v819 = vpop.permute.xlu0 %818
        %821 = vset.pattern.permute.xlu0 2
        %822 = vperm.xlu0 %821, %v327
        %v823 = vpop.permute.xlu0 %822
        %825 = vset.pattern.permute.xlu0 2
        %826 = vperm.xlu0 %825, %v328
        %v827 = vpop.permute.xlu0 %826
        %829 = vset.pattern.permute.xlu0 2
        %830 = vperm.xlu0 %829, %v329
        %v831 = vpop.permute.xlu0 %830
        %833 = vset.pattern.permute.xlu0 2
        %834 = vperm.xlu0 %833, %v330
        %v835 = vpop.permute.xlu0 %834
        %837 = vset.pattern.permute.xlu0 2
        %838 = vperm.xlu0 %837, %v331
        %v839 = vpop.permute.xlu0 %838
        %841 = vset.pattern.permute.xlu0 2
        %842 = vperm.xlu0 %841, %v332
        %v843 = vpop.permute.xlu0 %842
        %845 = vset.pattern.permute.xlu0 2
        %846 = vperm.xlu0 %845, %v333
        %v847 = vpop.permute.xlu0 %846
        %v849 = vperm.slane %v334, 2
        %v850 = vmul.f32 %v723, %v849
        %v851 = vmul.f32 %v727, %v849
        %v852 = vmul.f32 %v731, %v849
        %v853 = vmul.f32 %v735, %v849
        %v854 = vmul.f32 %v739, %v849
        %v855 = vmul.f32 %v743, %v849
        %v856 = vmul.f32 %v747, %v849
        %v857 = vmul.f32 %v751, %v849
        %v858 = vmul.f32 %v755, %v849
        %v859 = vmul.f32 %v759, %v849
        %v860 = vmul.f32 %v763, %v849
        %v861 = vmul.f32 %v767, %v849
        %v862 = vmul.f32 %v771, %v849
        %v863 = vmul.f32 %v775, %v849
        %v864 = vmul.f32 %v779, %v849
        %v865 = vmul.f32 %v783, %v849
        %v866 = vmul.f32 %v787, %v849
        %v867 = vmul.f32 %v791, %v849
        %v868 = vmul.f32 %v795, %v849
        %v869 = vmul.f32 %v799, %v849
        %v870 = vmul.f32 %v803, %v849
        %v871 = vmul.f32 %v807, %v849
        %v872 = vmul.f32 %v811, %v849
        %v873 = vmul.f32 %v815, %v849
        %v874 = vmul.f32 %v819, %v849
        %v875 = vmul.f32 %v823, %v849
        %v876 = vmul.f32 %v827, %v849
        %v877 = vmul.f32 %v831, %v849
        %v878 = vmul.f32 %v835, %v849
        %v879 = vmul.f32 %v839, %v849
        %v880 = vmul.f32 %v843, %v849
        %v881 = vmul.f32 %v847, %v849
        %v882 = vadd.f32 %v689, %v850
        %v883 = vadd.f32 %v690, %v851
        %v884 = vadd.f32 %v691, %v852
        %v885 = vadd.f32 %v692, %v853
        %v886 = vadd.f32 %v693, %v854
        %v887 = vadd.f32 %v694, %v855
        %v888 = vadd.f32 %v695, %v856
        %v889 = vadd.f32 %v696, %v857
        %v890 = vadd.f32 %v697, %v858
        %v891 = vadd.f32 %v698, %v859
        %v892 = vadd.f32 %v699, %v860
        %v893 = vadd.f32 %v700, %v861
        %v894 = vadd.f32 %v701, %v862
        %v895 = vadd.f32 %v702, %v863
        %v896 = vadd.f32 %v703, %v864
        %v897 = vadd.f32 %v704, %v865
        %v898 = vadd.f32 %v705, %v866
        %v899 = vadd.f32 %v706, %v867
        %v900 = vadd.f32 %v707, %v868
        %v901 = vadd.f32 %v708, %v869
        %v902 = vadd.f32 %v709, %v870
        %v903 = vadd.f32 %v710, %v871
        %v904 = vadd.f32 %v711, %v872
        %v905 = vadd.f32 %v712, %v873
        %v906 = vadd.f32 %v713, %v874
        %v907 = vadd.f32 %v714, %v875
        %v908 = vadd.f32 %v715, %v876
        %v909 = vadd.f32 %v716, %v877
        %v910 = vadd.f32 %v717, %v878
        %v911 = vadd.f32 %v718, %v879
        %v912 = vadd.f32 %v719, %v880
        %v913 = vadd.f32 %v720, %v881
        %v914 = vld [vmem:[%s2] sm:$0x1]
        %v916 = vperm.slane %v914, 0
        %v918 = vadd.f32 %v882, %v916
        %v919 = vadd.f32 %v883, %v916
        %v920 = vadd.f32 %v884, %v916
        %v921 = vadd.f32 %v885, %v916
        %v922 = vadd.f32 %v886, %v916
        %v923 = vadd.f32 %v887, %v916
        %v924 = vadd.f32 %v888, %v916
        %v925 = vadd.f32 %v889, %v916
        %v926 = vadd.f32 %v890, %v916
        %v927 = vadd.f32 %v891, %v916
        %v928 = vadd.f32 %v892, %v916
        %v929 = vadd.f32 %v893, %v916
        %v930 = vadd.f32 %v894, %v916
        %v931 = vadd.f32 %v895, %v916
        %v932 = vadd.f32 %v896, %v916
        %v933 = vadd.f32 %v897, %v916
        %v934 = vadd.f32 %v898, %v916
        %v935 = vadd.f32 %v899, %v916
        %v936 = vadd.f32 %v900, %v916
        %v937 = vadd.f32 %v901, %v916
        %v938 = vadd.f32 %v902, %v916
        %v939 = vadd.f32 %v903, %v916
        %v940 = vadd.f32 %v904, %v916
        %v941 = vadd.f32 %v905, %v916
        %v942 = vadd.f32 %v906, %v916
        %v943 = vadd.f32 %v907, %v916
        %v944 = vadd.f32 %v908, %v916
        %v945 = vadd.f32 %v909, %v916
        %v946 = vadd.f32 %v910, %v916
        %v947 = vadd.f32 %v911, %v916
        %v948 = vadd.f32 %v912, %v916
        %v949 = vadd.f32 %v913, %v916
        %v950 = vmax.f32 %v918, 0.0
        %v951 = vmax.f32 %v919, 0.0
        %v952 = vmax.f32 %v920, 0.0
        %v953 = vmax.f32 %v921, 0.0
        %v954 = vmax.f32 %v922, 0.0
        %v955 = vmax.f32 %v923, 0.0
        %v956 = vmax.f32 %v924, 0.0
        %v957 = vmax.f32 %v925, 0.0
        %v958 = vmax.f32 %v926, 0.0
        %v959 = vmax.f32 %v927, 0.0
        %v960 = vmax.f32 %v928, 0.0
        %v961 = vmax.f32 %v929, 0.0
        %v962 = vmax.f32 %v930, 0.0
        %v963 = vmax.f32 %v931, 0.0
        %v964 = vmax.f32 %v932, 0.0
        %v965 = vmax.f32 %v933, 0.0
        %v966 = vmax.f32 %v934, 0.0
        %v967 = vmax.f32 %v935, 0.0
        %v968 = vmax.f32 %v936, 0.0
        %v969 = vmax.f32 %v937, 0.0
        %v970 = vmax.f32 %v938, 0.0
        %v971 = vmax.f32 %v939, 0.0
        %v972 = vmax.f32 %v940, 0.0
        %v973 = vmax.f32 %v941, 0.0
        %v974 = vmax.f32 %v942, 0.0
        %v975 = vmax.f32 %v943, 0.0
        %v976 = vmax.f32 %v944, 0.0
        %v977 = vmax.f32 %v945, 0.0
        %v978 = vmax.f32 %v946, 0.0
        %v979 = vmax.f32 %v947, 0.0
        %v980 = vmax.f32 %v948, 0.0
        %v981 = vmax.f32 %v949, 0.0
        %v982 = vpack.c.bf16 %v951, %v950
        %v983 = vpack.c.bf16 %v953, %v952
        %v984 = vpack.c.bf16 %v955, %v954
        %v985 = vpack.c.bf16 %v957, %v956
        %v986 = vpack.c.bf16 %v959, %v958
        %v987 = vpack.c.bf16 %v961, %v960
        %v988 = vpack.c.bf16 %v963, %v962
        %v989 = vpack.c.bf16 %v965, %v964
        %v990 = vpack.c.bf16 %v967, %v966
        %v991 = vpack.c.bf16 %v969, %v968
        %v992 = vpack.c.bf16 %v971, %v970
        %v993 = vpack.c.bf16 %v973, %v972
        %v994 = vpack.c.bf16 %v975, %v974
        %v995 = vpack.c.bf16 %v977, %v976
        %v996 = vpack.c.bf16 %v979, %v978
        %v997 = vpack.c.bf16 %v981, %v980
        %v998 = vld [vmem:[#allocation2] sm:$0xf]
        %v999 = vld [vmem:[#allocation2 + $0x4] sm:$0xf]
        %v1000 = vld [vmem:[#allocation2 + $0x8] sm:$0xf]
        %v1001 = vld [vmem:[#allocation2 + $0xc] sm:$0xf]
        %v1002 = vld [vmem:[#allocation2 + $0x10] sm:$0xf]
        %v1003 = vld [vmem:[#allocation2 + $0x14] sm:$0xf]
        %v1004 = vld [vmem:[#allocation2 + $0x18] sm:$0xf]
        %v1005 = vld [vmem:[#allocation2 + $0x1c] sm:$0xf]
        %v1006 = vld [vmem:[%s4] sm:$0x1]
        %v1008 = vperm.slane %v1006, 0
        %v1018 = vunpack.c.l.b16 %v998
        %v1019 = vunpack.c.l.b16 %v999
        %v1020 = vunpack.c.l.b16 %v1000
        %v1021 = vunpack.c.l.b16 %v1001
        %v1022 = vunpack.c.l.b16 %v1002
        %v1023 = vunpack.c.l.b16 %v1003
        %v1024 = vunpack.c.l.b16 %v1004
        %v1025 = vunpack.c.l.b16 %v1005
        %v1026 = vpack.c.b16 %v1019, %v1018
        %v1027 = vpack.c.b16 %v1021, %v1020
        %v1028 = vpack.c.b16 %v1023, %v1022
        %v1029 = vpack.c.b16 %v1025, %v1024
        %vm1034 = vcmask 523264
        %v1036 = vsel %vm1034, %v982, 0
        %v1039 = vsel %vm1034, %v983, 0
        %v1042 = vsel %vm1034, %v984, 0
        %v1045 = vsel %vm1034, %v985, 0
        %v1048 = vsel %vm1034, %v986, 0
        %v1051 = vsel %vm1034, %v987, 0
        %v1054 = vsel %vm1034, %v988, 0
        %v1057 = vsel %vm1034, %v989, 0
        %v1060 = vsel %vm1034, %v990, 0
        %v1063 = vsel %vm1034, %v991, 0
        %v1066 = vsel %vm1034, %v992, 0
        %v1069 = vsel %vm1034, %v993, 0
        %v1072 = vsel %vm1034, %v994, 0
        %v1075 = vsel %vm1034, %v995, 0
        %v1078 = vsel %vm1034, %v996, 0
        %v1081 = vsel %vm1034, %v997, 0
        %1083 = vmatpush.bf16.msra.mxu0 0
        %1084 = vmatpush.bf16.msra.mxu0 0
        %1085 = vmatpush.bf16.msra.mxu0 0
        %1086 = vmatpush.bf16.msra.mxu0 0
        %1087 = vmatpush.bf16.msra.mxu0 %v1029
        %1088 = vmatpush.bf16.msra.mxu0 %v1028
        %1089 = vmatpush.bf16.msra.mxu0 %v1027
        %1090 = vmatpush.bf16.msra.mxu0 %v1026
        %1091 = vmatmul.bf16.gmra.mxu0 %v1036
        %v1092 = vpop.f32.mrf.mxu0
        %v1093 = vadd.f32 %v1008, %v1092
        %v1094 = vpop.f32.mrf.mxu0
        %v1095 = vadd.f32 %v1008, %v1094
        %1096 = vmatmul.bf16.gmra.mxu0 %v1039
        %v1097 = vpop.f32.mrf.mxu0
        %v1098 = vadd.f32 %v1008, %v1097
        %v1099 = vpop.f32.mrf.mxu0
        %v1100 = vadd.f32 %v1008, %v1099
        %1101 = vmatmul.bf16.gmra.mxu0 %v1042
        %v1102 = vpop.f32.mrf.mxu0
        %v1103 = vadd.f32 %v1008, %v1102
        %v1104 = vpop.f32.mrf.mxu0
        %v1105 = vadd.f32 %v1008, %v1104
        %1106 = vmatmul.bf16.gmra.mxu0 %v1045
        %v1107 = vpop.f32.mrf.mxu0
        %v1108 = vadd.f32 %v1008, %v1107
        %v1109 = vpop.f32.mrf.mxu0
        %v1110 = vadd.f32 %v1008, %v1109
        %1111 = vmatmul.bf16.gmra.mxu0 %v1048
        %v1112 = vpop.f32.mrf.mxu0
        %v1113 = vadd.f32 %v1008, %v1112
        %v1114 = vpop.f32.mrf.mxu0
        %v1115 = vadd.f32 %v1008, %v1114
        %1116 = vmatmul.bf16.gmra.mxu0 %v1051
        %v1117 = vpop.f32.mrf.mxu0
        %v1118 = vadd.f32 %v1008, %v1117
        %v1119 = vpop.f32.mrf.mxu0
        %v1120 = vadd.f32 %v1008, %v1119
        %1121 = vmatmul.bf16.gmra.mxu0 %v1054
        %v1122 = vpop.f32.mrf.mxu0
        %v1123 = vadd.f32 %v1008, %v1122
        %v1124 = vpop.f32.mrf.mxu0
        %v1125 = vadd.f32 %v1008, %v1124
        %1126 = vmatmul.bf16.gmra.mxu0 %v1057
        %v1127 = vpop.f32.mrf.mxu0
        %v1128 = vadd.f32 %v1008, %v1127
        %v1129 = vpop.f32.mrf.mxu0
        %v1130 = vadd.f32 %v1008, %v1129
        %1131 = vmatmul.bf16.gmra.mxu0 %v1060
        %v1132 = vpop.f32.mrf.mxu0
        %v1133 = vadd.f32 %v1008, %v1132
        %v1134 = vpop.f32.mrf.mxu0
        %v1135 = vadd.f32 %v1008, %v1134
        %1136 = vmatmul.bf16.gmra.mxu0 %v1063
        %v1137 = vpop.f32.mrf.mxu0
        %v1138 = vadd.f32 %v1008, %v1137
        %v1139 = vpop.f32.mrf.mxu0
        %v1140 = vadd.f32 %v1008, %v1139
        %1141 = vmatmul.bf16.gmra.mxu0 %v1066
        %v1142 = vpop.f32.mrf.mxu0
        %v1143 = vadd.f32 %v1008, %v1142
        %v1144 = vpop.f32.mrf.mxu0
        %v1145 = vadd.f32 %v1008, %v1144
        %1146 = vmatmul.bf16.gmra.mxu0 %v1069
        %v1147 = vpop.f32.mrf.mxu0
        %v1148 = vadd.f32 %v1008, %v1147
        %v1149 = vpop.f32.mrf.mxu0
        %v1150 = vadd.f32 %v1008, %v1149
        %1151 = vmatmul.bf16.gmra.mxu0 %v1072
        %v1152 = vpop.f32.mrf.mxu0
        %v1153 = vadd.f32 %v1008, %v1152
        %v1154 = vpop.f32.mrf.mxu0
        %v1155 = vadd.f32 %v1008, %v1154
        %1156 = vmatmul.bf16.gmra.mxu0 %v1075
        %v1157 = vpop.f32.mrf.mxu0
        %v1158 = vadd.f32 %v1008, %v1157
        %v1159 = vpop.f32.mrf.mxu0
        %v1160 = vadd.f32 %v1008, %v1159
        %1161 = vmatmul.bf16.gmra.mxu0 %v1078
        %v1162 = vpop.f32.mrf.mxu0
        %v1163 = vadd.f32 %v1008, %v1162
        %v1164 = vpop.f32.mrf.mxu0
        %v1165 = vadd.f32 %v1008, %v1164
        %1166 = vmatmul.bf16.gmra.mxu0 %v1081
        %v1167 = vpop.f32.mrf.mxu0
        %v1168 = vadd.f32 %v1008, %v1167
        %v1169 = vpop.f32.mrf.mxu0
        %v1170 = vadd.f32 %v1008, %v1169
        %1171 = vdwg.mxu0
        %v1172 = vmax.f32 %v1093, 0.0
        %v1173 = vmax.f32 %v1095, 0.0
        %v1174 = vmax.f32 %v1098, 0.0
        %v1175 = vmax.f32 %v1100, 0.0
        %v1176 = vmax.f32 %v1103, 0.0
        %v1177 = vmax.f32 %v1105, 0.0
        %v1178 = vmax.f32 %v1108, 0.0
        %v1179 = vmax.f32 %v1110, 0.0
        %v1180 = vmax.f32 %v1113, 0.0
        %v1181 = vmax.f32 %v1115, 0.0
        %v1182 = vmax.f32 %v1118, 0.0
        %v1183 = vmax.f32 %v1120, 0.0
        %v1184 = vmax.f32 %v1123, 0.0
        %v1185 = vmax.f32 %v1125, 0.0
        %v1186 = vmax.f32 %v1128, 0.0
        %v1187 = vmax.f32 %v1130, 0.0
        %v1188 = vmax.f32 %v1133, 0.0
        %v1189 = vmax.f32 %v1135, 0.0
        %v1190 = vmax.f32 %v1138, 0.0
        %v1191 = vmax.f32 %v1140, 0.0
        %v1192 = vmax.f32 %v1143, 0.0
        %v1193 = vmax.f32 %v1145, 0.0
        %v1194 = vmax.f32 %v1148, 0.0
        %v1195 = vmax.f32 %v1150, 0.0
        %v1196 = vmax.f32 %v1153, 0.0
        %v1197 = vmax.f32 %v1155, 0.0
        %v1198 = vmax.f32 %v1158, 0.0
        %v1199 = vmax.f32 %v1160, 0.0
        %v1200 = vmax.f32 %v1163, 0.0
        %v1201 = vmax.f32 %v1165, 0.0
        %v1202 = vmax.f32 %v1168, 0.0
        %v1203 = vmax.f32 %v1170, 0.0
        %v1204 = vpack.c.bf16 %v1173, %v1172
        %v1205 = vpack.c.bf16 %v1175, %v1174
        %v1206 = vpack.c.bf16 %v1177, %v1176
        %v1207 = vpack.c.bf16 %v1179, %v1178
        %v1208 = vpack.c.bf16 %v1181, %v1180
        %v1209 = vpack.c.bf16 %v1183, %v1182
        %v1210 = vpack.c.bf16 %v1185, %v1184
        %v1211 = vpack.c.bf16 %v1187, %v1186
        %v1212 = vpack.c.bf16 %v1189, %v1188
        %v1213 = vpack.c.bf16 %v1191, %v1190
        %v1214 = vpack.c.bf16 %v1193, %v1192
        %v1215 = vpack.c.bf16 %v1195, %v1194
        %v1216 = vpack.c.bf16 %v1197, %v1196
        %v1217 = vpack.c.bf16 %v1199, %v1198
        %v1218 = vpack.c.bf16 %v1201, %v1200
        %v1219 = vpack.c.bf16 %v1203, %v1202
        %v1220 = vld [vmem:[%s5] sm:$0xff]
        %v1221 = vld [vmem:[%s5 + $0x8] sm:$0xff]
        %v1222 = vld [vmem:[%s5 + $0x10] sm:$0xff]
        %v1223 = vld [vmem:[%s5 + $0x18] sm:$0xff]
        %v1224 = vld [vmem:[%s5 + $0x20] sm:$0xff]
        %v1225 = vld [vmem:[%s5 + $0x28] sm:$0xff]
        %v1226 = vld [vmem:[%s5 + $0x30] sm:$0xff]
        %v1227 = vld [vmem:[%s5 + $0x38] sm:$0xff]
        %v1228 = vld [vmem:[%s5 + $0x40] sm:$0xff]
        %v1229 = vld [vmem:[%s5 + $0x48] sm:$0xff]
        %v1230 = vld [vmem:[%s5 + $0x50] sm:$0xff]
        %v1231 = vld [vmem:[%s5 + $0x58] sm:$0xff]
        %v1232 = vld [vmem:[%s5 + $0x60] sm:$0xff]
        %v1233 = vld [vmem:[%s5 + $0x68] sm:$0xff]
        %v1234 = vld [vmem:[%s5 + $0x70] sm:$0xff]
        %v1235 = vld [vmem:[%s5 + $0x78] sm:$0xff]
        %v1236 = vld [vmem:[%s5 + $0x80] sm:$0xff]
        %v1237 = vld [vmem:[%s5 + $0x88] sm:$0xff]
        %v1238 = vld [vmem:[%s5 + $0x90] sm:$0xff]
        %v1239 = vld [vmem:[%s5 + $0x98] sm:$0xff]
        %v1240 = vld [vmem:[%s5 + $0xa0] sm:$0xff]
        %v1241 = vld [vmem:[%s5 + $0xa8] sm:$0xff]
        %v1242 = vld [vmem:[%s5 + $0xb0] sm:$0xff]
        %v1243 = vld [vmem:[%s5 + $0xb8] sm:$0xff]
        %v1244 = vld [vmem:[%s5 + $0xc0] sm:$0xff]
        %v1245 = vld [vmem:[%s5 + $0xc8] sm:$0xff]
        %v1246 = vld [vmem:[%s5 + $0xd0] sm:$0xff]
        %v1247 = vld [vmem:[%s5 + $0xd8] sm:$0xff]
        %v1248 = vld [vmem:[%s5 + $0xe0] sm:$0xff]
        %v1249 = vld [vmem:[%s5 + $0xe8] sm:$0xff]
        %v1250 = vld [vmem:[%s5 + $0xf0] sm:$0xff]
        %v1251 = vld [vmem:[%s5 + $0xf8] sm:$0xff]
        %v1252 = vld [vmem:[%s5 + $0x100] sm:$0xff]
        %v1253 = vld [vmem:[%s5 + $0x108] sm:$0xff]
        %v1254 = vld [vmem:[%s5 + $0x110] sm:$0xff]
        %v1255 = vld [vmem:[%s5 + $0x118] sm:$0xff]
        %v1256 = vld [vmem:[%s5 + $0x120] sm:$0xff]
        %v1257 = vld [vmem:[%s5 + $0x128] sm:$0xff]
        %v1258 = vld [vmem:[%s5 + $0x130] sm:$0xff]
        %v1259 = vld [vmem:[%s5 + $0x138] sm:$0xff]
        %v1260 = vld [vmem:[%s5 + $0x140] sm:$0xff]
        %v1261 = vld [vmem:[%s5 + $0x148] sm:$0xff]
        %v1262 = vld [vmem:[%s5 + $0x150] sm:$0xff]
        %v1263 = vld [vmem:[%s5 + $0x158] sm:$0xff]
        %v1264 = vld [vmem:[%s5 + $0x160] sm:$0xff]
        %v1265 = vld [vmem:[%s5 + $0x168] sm:$0xff]
        %v1266 = vld [vmem:[%s5 + $0x170] sm:$0xff]
        %v1267 = vld [vmem:[%s5 + $0x178] sm:$0xff]
        %v1268 = vld [vmem:[%s5 + $0x180] sm:$0xff]
        %v1269 = vld [vmem:[%s5 + $0x188] sm:$0xff]
        %v1270 = vld [vmem:[%s5 + $0x190] sm:$0xff]
        %v1271 = vld [vmem:[%s5 + $0x198] sm:$0xff]
        %v1272 = vld [vmem:[%s5 + $0x1a0] sm:$0xff]
        %v1273 = vld [vmem:[%s5 + $0x1a8] sm:$0xff]
        %v1274 = vld [vmem:[%s5 + $0x1b0] sm:$0xff]
        %v1275 = vld [vmem:[%s5 + $0x1b8] sm:$0xff]
        %v1276 = vld [vmem:[%s5 + $0x1c0] sm:$0xff]
        %v1277 = vld [vmem:[%s5 + $0x1c8] sm:$0xff]
        %v1278 = vld [vmem:[%s5 + $0x1d0] sm:$0xff]
        %v1279 = vld [vmem:[%s5 + $0x1d8] sm:$0xff]
        %v1280 = vld [vmem:[%s5 + $0x1e0] sm:$0xff]
        %v1281 = vld [vmem:[%s5 + $0x1e8] sm:$0xff]
        %v1282 = vld [vmem:[%s5 + $0x1f0] sm:$0xff]
        %v1283 = vld [vmem:[%s5 + $0x1f8] sm:$0xff]
        %v1284 = vld [vmem:[%s6] sm:$0xff]
        %v1286 = vperm.slane %v1284, 0
        %v1287 = vperm.slane %v1284, 1
        %v1288 = vperm.slane %v1284, 2
        %v1289 = vperm.slane %v1284, 3
        %v1290 = vperm.slane %v1284, 4
        %v1291 = vperm.slane %v1284, 5
        %v1292 = vperm.slane %v1284, 6
        %v1293 = vperm.slane %v1284, 7
        %v1366 = vunpack.c.l.b16 %v1220
        %v1367 = vunpack.c.h.b16 %v1220
        %v1368 = vunpack.c.l.b16 %v1221
        %v1369 = vunpack.c.h.b16 %v1221
        %v1370 = vunpack.c.l.b16 %v1222
        %v1371 = vunpack.c.h.b16 %v1222
        %v1372 = vunpack.c.l.b16 %v1223
        %v1373 = vunpack.c.h.b16 %v1223
        %v1374 = vunpack.c.l.b16 %v1224
        %v1375 = vunpack.c.h.b16 %v1224
        %v1376 = vunpack.c.l.b16 %v1225
        %v1377 = vunpack.c.h.b16 %v1225
        %v1378 = vunpack.c.l.b16 %v1226
        %v1379 = vunpack.c.h.b16 %v1226
        %v1380 = vunpack.c.l.b16 %v1227
        %v1381 = vunpack.c.h.b16 %v1227
        %v1382 = vunpack.c.l.b16 %v1228
        %v1383 = vunpack.c.h.b16 %v1228
        %v1384 = vunpack.c.l.b16 %v1229
        %v1385 = vunpack.c.h.b16 %v1229
        %v1386 = vunpack.c.l.b16 %v1230
        %v1387 = vunpack.c.h.b16 %v1230
        %v1388 = vunpack.c.l.b16 %v1231
        %v1389 = vunpack.c.h.b16 %v1231
        %v1390 = vunpack.c.l.b16 %v1232
        %v1391 = vunpack.c.h.b16 %v1232
        %v1392 = vunpack.c.l.b16 %v1233
        %v1393 = vunpack.c.h.b16 %v1233
        %v1394 = vunpack.c.l.b16 %v1234
        %v1395 = vunpack.c.h.b16 %v1234
        %v1396 = vunpack.c.l.b16 %v1235
        %v1397 = vunpack.c.h.b16 %v1235
        %v1398 = vunpack.c.l.b16 %v1236
        %v1399 = vunpack.c.h.b16 %v1236
        %v1400 = vunpack.c.l.b16 %v1237
        %v1401 = vunpack.c.h.b16 %v1237
        %v1402 = vunpack.c.l.b16 %v1238
        %v1403 = vunpack.c.h.b16 %v1238
        %v1404 = vunpack.c.l.b16 %v1239
        %v1405 = vunpack.c.h.b16 %v1239
        %v1406 = vunpack.c.l.b16 %v1240
        %v1407 = vunpack.c.h.b16 %v1240
        %v1408 = vunpack.c.l.b16 %v1241
        %v1409 = vunpack.c.h.b16 %v1241
        %v1410 = vunpack.c.l.b16 %v1242
        %v1411 = vunpack.c.h.b16 %v1242
        %v1412 = vunpack.c.l.b16 %v1243
        %v1413 = vunpack.c.h.b16 %v1243
        %v1414 = vunpack.c.l.b16 %v1244
        %v1415 = vunpack.c.h.b16 %v1244
        %v1416 = vunpack.c.l.b16 %v1245
        %v1417 = vunpack.c.h.b16 %v1245
        %v1418 = vunpack.c.l.b16 %v1246
        %v1419 = vunpack.c.h.b16 %v1246
        %v1420 = vunpack.c.l.b16 %v1247
        %v1421 = vunpack.c.h.b16 %v1247
        %v1422 = vunpack.c.l.b16 %v1248
        %v1423 = vunpack.c.h.b16 %v1248
        %v1424 = vunpack.c.l.b16 %v1249
        %v1425 = vunpack.c.h.b16 %v1249
        %v1426 = vunpack.c.l.b16 %v1250
        %v1427 = vunpack.c.h.b16 %v1250
        %v1428 = vunpack.c.l.b16 %v1251
        %v1429 = vunpack.c.h.b16 %v1251
        %v1430 = vunpack.c.l.b16 %v1252
        %v1431 = vunpack.c.h.b16 %v1252
        %v1432 = vunpack.c.l.b16 %v1253
        %v1433 = vunpack.c.h.b16 %v1253
        %v1434 = vunpack.c.l.b16 %v1254
        %v1435 = vunpack.c.h.b16 %v1254
        %v1436 = vunpack.c.l.b16 %v1255
        %v1437 = vunpack.c.h.b16 %v1255
        %v1438 = vunpack.c.l.b16 %v1256
        %v1439 = vunpack.c.h.b16 %v1256
        %v1440 = vunpack.c.l.b16 %v1257
        %v1441 = vunpack.c.h.b16 %v1257
        %v1442 = vunpack.c.l.b16 %v1258
        %v1443 = vunpack.c.h.b16 %v1258
        %v1444 = vunpack.c.l.b16 %v1259
        %v1445 = vunpack.c.h.b16 %v1259
        %v1446 = vunpack.c.l.b16 %v1260
        %v1447 = vunpack.c.h.b16 %v1260
        %v1448 = vunpack.c.l.b16 %v1261
        %v1449 = vunpack.c.h.b16 %v1261
        %v1450 = vunpack.c.l.b16 %v1262
        %v1451 = vunpack.c.h.b16 %v1262
        %v1452 = vunpack.c.l.b16 %v1263
        %v1453 = vunpack.c.h.b16 %v1263
        %v1454 = vunpack.c.l.b16 %v1264
        %v1455 = vunpack.c.h.b16 %v1264
        %v1456 = vunpack.c.l.b16 %v1265
        %v1457 = vunpack.c.h.b16 %v1265
        %v1458 = vunpack.c.l.b16 %v1266
        %v1459 = vunpack.c.h.b16 %v1266
        %v1460 = vunpack.c.l.b16 %v1267
        %v1461 = vunpack.c.h.b16 %v1267
        %v1462 = vunpack.c.l.b16 %v1268
        %v1463 = vunpack.c.h.b16 %v1268
        %v1464 = vunpack.c.l.b16 %v1269
        %v1465 = vunpack.c.h.b16 %v1269
        %v1466 = vunpack.c.l.b16 %v1270
        %v1467 = vunpack.c.h.b16 %v1270
        %v1468 = vunpack.c.l.b16 %v1271
        %v1469 = vunpack.c.h.b16 %v1271
        %v1470 = vunpack.c.l.b16 %v1272
        %v1471 = vunpack.c.h.b16 %v1272
        %v1472 = vunpack.c.l.b16 %v1273
        %v1473 = vunpack.c.h.b16 %v1273
        %v1474 = vunpack.c.l.b16 %v1274
        %v1475 = vunpack.c.h.b16 %v1274
        %v1476 = vunpack.c.l.b16 %v1275
        %v1477 = vunpack.c.h.b16 %v1275
        %v1478 = vunpack.c.l.b16 %v1276
        %v1479 = vunpack.c.h.b16 %v1276
        %v1480 = vunpack.c.l.b16 %v1277
        %v1481 = vunpack.c.h.b16 %v1277
        %v1482 = vunpack.c.l.b16 %v1278
        %v1483 = vunpack.c.h.b16 %v1278
        %v1484 = vunpack.c.l.b16 %v1279
        %v1485 = vunpack.c.h.b16 %v1279
        %v1486 = vunpack.c.l.b16 %v1280
        %v1487 = vunpack.c.h.b16 %v1280
        %v1488 = vunpack.c.l.b16 %v1281
        %v1489 = vunpack.c.h.b16 %v1281
        %v1490 = vunpack.c.l.b16 %v1282
        %v1491 = vunpack.c.h.b16 %v1282
        %v1492 = vunpack.c.l.b16 %v1283
        %v1493 = vunpack.c.h.b16 %v1283
        %v1494 = vpack.c.b16 %v1374, %v1366
        %v1495 = vpack.c.b16 %v1375, %v1367
        %v1496 = vpack.c.b16 %v1376, %v1368
        %v1497 = vpack.c.b16 %v1377, %v1369
        %v1498 = vpack.c.b16 %v1378, %v1370
        %v1499 = vpack.c.b16 %v1379, %v1371
        %v1500 = vpack.c.b16 %v1380, %v1372
        %v1501 = vpack.c.b16 %v1381, %v1373
        %v1502 = vpack.c.b16 %v1390, %v1382
        %v1503 = vpack.c.b16 %v1391, %v1383
        %v1504 = vpack.c.b16 %v1392, %v1384
        %v1505 = vpack.c.b16 %v1393, %v1385
        %v1506 = vpack.c.b16 %v1394, %v1386
        %v1507 = vpack.c.b16 %v1395, %v1387
        %v1508 = vpack.c.b16 %v1396, %v1388
        %v1509 = vpack.c.b16 %v1397, %v1389
        %v1510 = vpack.c.b16 %v1406, %v1398
        %v1511 = vpack.c.b16 %v1407, %v1399
        %v1512 = vpack.c.b16 %v1408, %v1400
        %v1513 = vpack.c.b16 %v1409, %v1401
        %v1514 = vpack.c.b16 %v1410, %v1402
        %v1515 = vpack.c.b16 %v1411, %v1403
        %v1516 = vpack.c.b16 %v1412, %v1404
        %v1517 = vpack.c.b16 %v1413, %v1405
        %v1518 = vpack.c.b16 %v1422, %v1414
        %v1519 = vpack.c.b16 %v1423, %v1415
        %v1520 = vpack.c.b16 %v1424, %v1416
        %v1521 = vpack.c.b16 %v1425, %v1417
        %v1522 = vpack.c.b16 %v1426, %v1418
        %v1523 = vpack.c.b16 %v1427, %v1419
        %v1524 = vpack.c.b16 %v1428, %v1420
        %v1525 = vpack.c.b16 %v1429, %v1421
        %v1526 = vpack.c.b16 %v1438, %v1430
        %v1527 = vpack.c.b16 %v1439, %v1431
        %v1528 = vpack.c.b16 %v1440, %v1432
        %v1529 = vpack.c.b16 %v1441, %v1433
        %v1530 = vpack.c.b16 %v1442, %v1434
        %v1531 = vpack.c.b16 %v1443, %v1435
        %v1532 = vpack.c.b16 %v1444, %v1436
        %v1533 = vpack.c.b16 %v1445, %v1437
        %v1534 = vpack.c.b16 %v1454, %v1446
        %v1535 = vpack.c.b16 %v1455, %v1447
        %v1536 = vpack.c.b16 %v1456, %v1448
        %v1537 = vpack.c.b16 %v1457, %v1449
        %v1538 = vpack.c.b16 %v1458, %v1450
        %v1539 = vpack.c.b16 %v1459, %v1451
        %v1540 = vpack.c.b16 %v1460, %v1452
        %v1541 = vpack.c.b16 %v1461, %v1453
        %v1542 = vpack.c.b16 %v1470, %v1462
        %v1543 = vpack.c.b16 %v1471, %v1463
        %v1544 = vpack.c.b16 %v1472, %v1464
        %v1545 = vpack.c.b16 %v1473, %v1465
        %v1546 = vpack.c.b16 %v1474, %v1466
        %v1547 = vpack.c.b16 %v1475, %v1467
        %v1548 = vpack.c.b16 %v1476, %v1468
        %v1549 = vpack.c.b16 %v1477, %v1469
        %v1550 = vpack.c.b16 %v1486, %v1478
        %v1551 = vpack.c.b16 %v1487, %v1479
        %v1552 = vpack.c.b16 %v1488, %v1480
        %v1553 = vpack.c.b16 %v1489, %v1481
        %v1554 = vpack.c.b16 %v1490, %v1482
        %v1555 = vpack.c.b16 %v1491, %v1483
        %v1556 = vpack.c.b16 %v1492, %v1484
        %v1557 = vpack.c.b16 %v1493, %v1485
        %1622 = vmatpush.bf16.msra.mxu0 %v1550
        %1623 = vmatpush.bf16.msra.mxu0 %v1542
        %1624 = vmatpush.bf16.msra.mxu0 %v1534
        %1625 = vmatpush.bf16.msra.mxu0 %v1526
        %1626 = vmatpush.bf16.msra.mxu0 %v1518
        %1627 = vmatpush.bf16.msra.mxu0 %v1510
        %1628 = vmatpush.bf16.msra.mxu0 %v1502
        %1629 = vmatpush.bf16.msra.mxu0 %v1494
        %1630 = vmatmul.bf16.gmra.mxu0 %v1204
        %v1631 = vpop.f32.mrf.mxu0
        %v1632 = vadd.f32 %v1286, %v1631
        %v1633 = vpop.f32.mrf.mxu0
        %v1634 = vadd.f32 %v1286, %v1633
        %1635 = vmatmul.bf16.gmra.mxu0 %v1205
        %v1636 = vpop.f32.mrf.mxu0
        %v1637 = vadd.f32 %v1286, %v1636
        %v1638 = vpop.f32.mrf.mxu0
        %v1639 = vadd.f32 %v1286, %v1638
        %1640 = vmatmul.bf16.gmra.mxu0 %v1206
        %v1641 = vpop.f32.mrf.mxu0
        %v1642 = vadd.f32 %v1286, %v1641
        %v1643 = vpop.f32.mrf.mxu0
        %v1644 = vadd.f32 %v1286, %v1643
        %1645 = vmatmul.bf16.gmra.mxu0 %v1207
        %v1646 = vpop.f32.mrf.mxu0
        %v1647 = vadd.f32 %v1286, %v1646
        %v1648 = vpop.f32.mrf.mxu0
        %v1649 = vadd.f32 %v1286, %v1648
        %1650 = vmatmul.bf16.gmra.mxu0 %v1208
        %v1651 = vpop.f32.mrf.mxu0
        %v1652 = vadd.f32 %v1286, %v1651
        %v1653 = vpop.f32.mrf.mxu0
        %v1654 = vadd.f32 %v1286, %v1653
        %1655 = vmatmul.bf16.gmra.mxu0 %v1209
        %v1656 = vpop.f32.mrf.mxu0
        %v1657 = vadd.f32 %v1286, %v1656
        %v1658 = vpop.f32.mrf.mxu0
        %v1659 = vadd.f32 %v1286, %v1658
        %1660 = vmatmul.bf16.gmra.mxu0 %v1210
        %v1661 = vpop.f32.mrf.mxu0
        %v1662 = vadd.f32 %v1286, %v1661
        %v1663 = vpop.f32.mrf.mxu0
        %v1664 = vadd.f32 %v1286, %v1663
        %1665 = vmatmul.bf16.gmra.mxu0 %v1211
        %v1666 = vpop.f32.mrf.mxu0
        %v1667 = vadd.f32 %v1286, %v1666
        %v1668 = vpop.f32.mrf.mxu0
        %v1669 = vadd.f32 %v1286, %v1668
        %1670 = vmatmul.bf16.gmra.mxu0 %v1212
        %v1671 = vpop.f32.mrf.mxu0
        %v1672 = vadd.f32 %v1286, %v1671
        %v1673 = vpop.f32.mrf.mxu0
        %v1674 = vadd.f32 %v1286, %v1673
        %1675 = vmatmul.bf16.gmra.mxu0 %v1213
        %v1676 = vpop.f32.mrf.mxu0
        %v1677 = vadd.f32 %v1286, %v1676
        %v1678 = vpop.f32.mrf.mxu0
        %v1679 = vadd.f32 %v1286, %v1678
        %1680 = vmatmul.bf16.gmra.mxu0 %v1214
        %v1681 = vpop.f32.mrf.mxu0
        %v1682 = vadd.f32 %v1286, %v1681
        %v1683 = vpop.f32.mrf.mxu0
        %v1684 = vadd.f32 %v1286, %v1683
        %1685 = vmatmul.bf16.gmra.mxu0 %v1215
        %v1686 = vpop.f32.mrf.mxu0
        %v1687 = vadd.f32 %v1286, %v1686
        %v1688 = vpop.f32.mrf.mxu0
        %v1689 = vadd.f32 %v1286, %v1688
        %1690 = vmatmul.bf16.gmra.mxu0 %v1216
        %v1691 = vpop.f32.mrf.mxu0
        %v1692 = vadd.f32 %v1286, %v1691
        %v1693 = vpop.f32.mrf.mxu0
        %v1694 = vadd.f32 %v1286, %v1693
        %1695 = vmatmul.bf16.gmra.mxu0 %v1217
        %v1696 = vpop.f32.mrf.mxu0
        %v1697 = vadd.f32 %v1286, %v1696
        %v1698 = vpop.f32.mrf.mxu0
        %v1699 = vadd.f32 %v1286, %v1698
        %1700 = vmatmul.bf16.gmra.mxu0 %v1218
        %v1701 = vpop.f32.mrf.mxu0
        %v1702 = vadd.f32 %v1286, %v1701
        %v1703 = vpop.f32.mrf.mxu0
        %v1704 = vadd.f32 %v1286, %v1703
        %1705 = vmatmul.bf16.gmra.mxu0 %v1219
        %v1706 = vpop.f32.mrf.mxu0
        %v1707 = vadd.f32 %v1286, %v1706
        %v1708 = vpop.f32.mrf.mxu0
        %v1709 = vadd.f32 %v1286, %v1708
        %1710 = vdwg.mxu0
        %1711 = vmatpush.bf16.msra.mxu0 %v1551
        %1712 = vmatpush.bf16.msra.mxu0 %v1543
        %1713 = vmatpush.bf16.msra.mxu0 %v1535
        %1714 = vmatpush.bf16.msra.mxu0 %v1527
        %1715 = vmatpush.bf16.msra.mxu0 %v1519
        %1716 = vmatpush.bf16.msra.mxu0 %v1511
        %1717 = vmatpush.bf16.msra.mxu0 %v1503
        %1718 = vmatpush.bf16.msra.mxu0 %v1495
        %1719 = vmatmul.bf16.gmra.mxu0 %v1204
        %v1720 = vpop.f32.mrf.mxu0
        %v1721 = vadd.f32 %v1287, %v1720
        %v1722 = vpop.f32.mrf.mxu0
        %v1723 = vadd.f32 %v1287, %v1722
        %1724 = vmatmul.bf16.gmra.mxu0 %v1205
        %v1725 = vpop.f32.mrf.mxu0
        %v1726 = vadd.f32 %v1287, %v1725
        %v1727 = vpop.f32.mrf.mxu0
        %v1728 = vadd.f32 %v1287, %v1727
        %1729 = vmatmul.bf16.gmra.mxu0 %v1206
        %v1730 = vpop.f32.mrf.mxu0
        %v1731 = vadd.f32 %v1287, %v1730
        %v1732 = vpop.f32.mrf.mxu0
        %v1733 = vadd.f32 %v1287, %v1732
        %1734 = vmatmul.bf16.gmra.mxu0 %v1207
        %v1735 = vpop.f32.mrf.mxu0
        %v1736 = vadd.f32 %v1287, %v1735
        %v1737 = vpop.f32.mrf.mxu0
        %v1738 = vadd.f32 %v1287, %v1737
        %1739 = vmatmul.bf16.gmra.mxu0 %v1208
        %v1740 = vpop.f32.mrf.mxu0
        %v1741 = vadd.f32 %v1287, %v1740
        %v1742 = vpop.f32.mrf.mxu0
        %v1743 = vadd.f32 %v1287, %v1742
        %1744 = vmatmul.bf16.gmra.mxu0 %v1209
        %v1745 = vpop.f32.mrf.mxu0
        %v1746 = vadd.f32 %v1287, %v1745
        %v1747 = vpop.f32.mrf.mxu0
        %v1748 = vadd.f32 %v1287, %v1747
        %1749 = vmatmul.bf16.gmra.mxu0 %v1210
        %v1750 = vpop.f32.mrf.mxu0
        %v1751 = vadd.f32 %v1287, %v1750
        %v1752 = vpop.f32.mrf.mxu0
        %v1753 = vadd.f32 %v1287, %v1752
        %1754 = vmatmul.bf16.gmra.mxu0 %v1211
        %v1755 = vpop.f32.mrf.mxu0
        %v1756 = vadd.f32 %v1287, %v1755
        %v1757 = vpop.f32.mrf.mxu0
        %v1758 = vadd.f32 %v1287, %v1757
        %1759 = vmatmul.bf16.gmra.mxu0 %v1212
        %v1760 = vpop.f32.mrf.mxu0
        %v1761 = vadd.f32 %v1287, %v1760
        %v1762 = vpop.f32.mrf.mxu0
        %v1763 = vadd.f32 %v1287, %v1762
        %1764 = vmatmul.bf16.gmra.mxu0 %v1213
        %v1765 = vpop.f32.mrf.mxu0
        %v1766 = vadd.f32 %v1287, %v1765
        %v1767 = vpop.f32.mrf.mxu0
        %v1768 = vadd.f32 %v1287, %v1767
        %1769 = vmatmul.bf16.gmra.mxu0 %v1214
        %v1770 = vpop.f32.mrf.mxu0
        %v1771 = vadd.f32 %v1287, %v1770
        %v1772 = vpop.f32.mrf.mxu0
        %v1773 = vadd.f32 %v1287, %v1772
        %1774 = vmatmul.bf16.gmra.mxu0 %v1215
        %v1775 = vpop.f32.mrf.mxu0
        %v1776 = vadd.f32 %v1287, %v1775
        %v1777 = vpop.f32.mrf.mxu0
        %v1778 = vadd.f32 %v1287, %v1777
        %1779 = vmatmul.bf16.gmra.mxu0 %v1216
        %v1780 = vpop.f32.mrf.mxu0
        %v1781 = vadd.f32 %v1287, %v1780
        %v1782 = vpop.f32.mrf.mxu0
        %v1783 = vadd.f32 %v1287, %v1782
        %1784 = vmatmul.bf16.gmra.mxu0 %v1217
        %v1785 = vpop.f32.mrf.mxu0
        %v1786 = vadd.f32 %v1287, %v1785
        %v1787 = vpop.f32.mrf.mxu0
        %v1788 = vadd.f32 %v1287, %v1787
        %1789 = vmatmul.bf16.gmra.mxu0 %v1218
        %v1790 = vpop.f32.mrf.mxu0
        %v1791 = vadd.f32 %v1287, %v1790
        %v1792 = vpop.f32.mrf.mxu0
        %v1793 = vadd.f32 %v1287, %v1792
        %1794 = vmatmul.bf16.gmra.mxu0 %v1219
        %v1795 = vpop.f32.mrf.mxu0
        %v1796 = vadd.f32 %v1287, %v1795
        %v1797 = vpop.f32.mrf.mxu0
        %v1798 = vadd.f32 %v1287, %v1797
        %1799 = vdwg.mxu0
        %1800 = vmatpush.bf16.msra.mxu0 %v1552
        %1801 = vmatpush.bf16.msra.mxu0 %v1544
        %1802 = vmatpush.bf16.msra.mxu0 %v1536
        %1803 = vmatpush.bf16.msra.mxu0 %v1528
        %1804 = vmatpush.bf16.msra.mxu0 %v1520
        %1805 = vmatpush.bf16.msra.mxu0 %v1512
        %1806 = vmatpush.bf16.msra.mxu0 %v1504
        %1807 = vmatpush.bf16.msra.mxu0 %v1496
        %1808 = vmatmul.bf16.gmra.mxu0 %v1204
        %v1809 = vpop.f32.mrf.mxu0
        %v1810 = vadd.f32 %v1288, %v1809
        %v1811 = vpop.f32.mrf.mxu0
        %v1812 = vadd.f32 %v1288, %v1811
        %1813 = vmatmul.bf16.gmra.mxu0 %v1205
        %v1814 = vpop.f32.mrf.mxu0
        %v1815 = vadd.f32 %v1288, %v1814
        %v1816 = vpop.f32.mrf.mxu0
        %v1817 = vadd.f32 %v1288, %v1816
        %1818 = vmatmul.bf16.gmra.mxu0 %v1206
        %v1819 = vpop.f32.mrf.mxu0
        %v1820 = vadd.f32 %v1288, %v1819
        %v1821 = vpop.f32.mrf.mxu0
        %v1822 = vadd.f32 %v1288, %v1821
        %1823 = vmatmul.bf16.gmra.mxu0 %v1207
        %v1824 = vpop.f32.mrf.mxu0
        %v1825 = vadd.f32 %v1288, %v1824
        %v1826 = vpop.f32.mrf.mxu0
        %v1827 = vadd.f32 %v1288, %v1826
        %1828 = vmatmul.bf16.gmra.mxu0 %v1208
        %v1829 = vpop.f32.mrf.mxu0
        %v1830 = vadd.f32 %v1288, %v1829
        %v1831 = vpop.f32.mrf.mxu0
        %v1832 = vadd.f32 %v1288, %v1831
        %1833 = vmatmul.bf16.gmra.mxu0 %v1209
        %v1834 = vpop.f32.mrf.mxu0
        %v1835 = vadd.f32 %v1288, %v1834
        %v1836 = vpop.f32.mrf.mxu0
        %v1837 = vadd.f32 %v1288, %v1836
        %1838 = vmatmul.bf16.gmra.mxu0 %v1210
        %v1839 = vpop.f32.mrf.mxu0
        %v1840 = vadd.f32 %v1288, %v1839
        %v1841 = vpop.f32.mrf.mxu0
        %v1842 = vadd.f32 %v1288, %v1841
        %1843 = vmatmul.bf16.gmra.mxu0 %v1211
        %v1844 = vpop.f32.mrf.mxu0
        %v1845 = vadd.f32 %v1288, %v1844
        %v1846 = vpop.f32.mrf.mxu0
        %v1847 = vadd.f32 %v1288, %v1846
        %1848 = vmatmul.bf16.gmra.mxu0 %v1212
        %v1849 = vpop.f32.mrf.mxu0
        %v1850 = vadd.f32 %v1288, %v1849
        %v1851 = vpop.f32.mrf.mxu0
        %v1852 = vadd.f32 %v1288, %v1851
        %1853 = vmatmul.bf16.gmra.mxu0 %v1213
        %v1854 = vpop.f32.mrf.mxu0
        %v1855 = vadd.f32 %v1288, %v1854
        %v1856 = vpop.f32.mrf.mxu0
        %v1857 = vadd.f32 %v1288, %v1856
        %1858 = vmatmul.bf16.gmra.mxu0 %v1214
        %v1859 = vpop.f32.mrf.mxu0
        %v1860 = vadd.f32 %v1288, %v1859
        %v1861 = vpop.f32.mrf.mxu0
        %v1862 = vadd.f32 %v1288, %v1861
        %1863 = vmatmul.bf16.gmra.mxu0 %v1215
        %v1864 = vpop.f32.mrf.mxu0
        %v1865 = vadd.f32 %v1288, %v1864
        %v1866 = vpop.f32.mrf.mxu0
        %v1867 = vadd.f32 %v1288, %v1866
        %1868 = vmatmul.bf16.gmra.mxu0 %v1216
        %v1869 = vpop.f32.mrf.mxu0
        %v1870 = vadd.f32 %v1288, %v1869
        %v1871 = vpop.f32.mrf.mxu0
        %v1872 = vadd.f32 %v1288, %v1871
        %1873 = vmatmul.bf16.gmra.mxu0 %v1217
        %v1874 = vpop.f32.mrf.mxu0
        %v1875 = vadd.f32 %v1288, %v1874
        %v1876 = vpop.f32.mrf.mxu0
        %v1877 = vadd.f32 %v1288, %v1876
        %1878 = vmatmul.bf16.gmra.mxu0 %v1218
        %v1879 = vpop.f32.mrf.mxu0
        %v1880 = vadd.f32 %v1288, %v1879
        %v1881 = vpop.f32.mrf.mxu0
        %v1882 = vadd.f32 %v1288, %v1881
        %1883 = vmatmul.bf16.gmra.mxu0 %v1219
        %v1884 = vpop.f32.mrf.mxu0
        %v1885 = vadd.f32 %v1288, %v1884
        %v1886 = vpop.f32.mrf.mxu0
        %v1887 = vadd.f32 %v1288, %v1886
        %1888 = vdwg.mxu0
        %1889 = vmatpush.bf16.msra.mxu0 %v1553
        %1890 = vmatpush.bf16.msra.mxu0 %v1545
        %1891 = vmatpush.bf16.msra.mxu0 %v1537
        %1892 = vmatpush.bf16.msra.mxu0 %v1529
        %1893 = vmatpush.bf16.msra.mxu0 %v1521
        %1894 = vmatpush.bf16.msra.mxu0 %v1513
        %1895 = vmatpush.bf16.msra.mxu0 %v1505
        %1896 = vmatpush.bf16.msra.mxu0 %v1497
        %1897 = vmatmul.bf16.gmra.mxu0 %v1204
        %v1898 = vpop.f32.mrf.mxu0
        %v1899 = vadd.f32 %v1289, %v1898
        %v1900 = vpop.f32.mrf.mxu0
        %v1901 = vadd.f32 %v1289, %v1900
        %1902 = vmatmul.bf16.gmra.mxu0 %v1205
        %v1903 = vpop.f32.mrf.mxu0
        %v1904 = vadd.f32 %v1289, %v1903
        %v1905 = vpop.f32.mrf.mxu0
        %v1906 = vadd.f32 %v1289, %v1905
        %1907 = vmatmul.bf16.gmra.mxu0 %v1206
        %v1908 = vpop.f32.mrf.mxu0
        %v1909 = vadd.f32 %v1289, %v1908
        %v1910 = vpop.f32.mrf.mxu0
        %v1911 = vadd.f32 %v1289, %v1910
        %1912 = vmatmul.bf16.gmra.mxu0 %v1207
        %v1913 = vpop.f32.mrf.mxu0
        %v1914 = vadd.f32 %v1289, %v1913
        %v1915 = vpop.f32.mrf.mxu0
        %v1916 = vadd.f32 %v1289, %v1915
        %1917 = vmatmul.bf16.gmra.mxu0 %v1208
        %v1918 = vpop.f32.mrf.mxu0
        %v1919 = vadd.f32 %v1289, %v1918
        %v1920 = vpop.f32.mrf.mxu0
        %v1921 = vadd.f32 %v1289, %v1920
        %1922 = vmatmul.bf16.gmra.mxu0 %v1209
        %v1923 = vpop.f32.mrf.mxu0
        %v1924 = vadd.f32 %v1289, %v1923
        %v1925 = vpop.f32.mrf.mxu0
        %v1926 = vadd.f32 %v1289, %v1925
        %1927 = vmatmul.bf16.gmra.mxu0 %v1210
        %v1928 = vpop.f32.mrf.mxu0
        %v1929 = vadd.f32 %v1289, %v1928
        %v1930 = vpop.f32.mrf.mxu0
        %v1931 = vadd.f32 %v1289, %v1930
        %1932 = vmatmul.bf16.gmra.mxu0 %v1211
        %v1933 = vpop.f32.mrf.mxu0
        %v1934 = vadd.f32 %v1289, %v1933
        %v1935 = vpop.f32.mrf.mxu0
        %v1936 = vadd.f32 %v1289, %v1935
        %1937 = vmatmul.bf16.gmra.mxu0 %v1212
        %v1938 = vpop.f32.mrf.mxu0
        %v1939 = vadd.f32 %v1289, %v1938
        %v1940 = vpop.f32.mrf.mxu0
        %v1941 = vadd.f32 %v1289, %v1940
        %1942 = vmatmul.bf16.gmra.mxu0 %v1213
        %v1943 = vpop.f32.mrf.mxu0
        %v1944 = vadd.f32 %v1289, %v1943
        %v1945 = vpop.f32.mrf.mxu0
        %v1946 = vadd.f32 %v1289, %v1945
        %1947 = vmatmul.bf16.gmra.mxu0 %v1214
        %v1948 = vpop.f32.mrf.mxu0
        %v1949 = vadd.f32 %v1289, %v1948
        %v1950 = vpop.f32.mrf.mxu0
        %v1951 = vadd.f32 %v1289, %v1950
        %1952 = vmatmul.bf16.gmra.mxu0 %v1215
        %v1953 = vpop.f32.mrf.mxu0
        %v1954 = vadd.f32 %v1289, %v1953
        %v1955 = vpop.f32.mrf.mxu0
        %v1956 = vadd.f32 %v1289, %v1955
        %1957 = vmatmul.bf16.gmra.mxu0 %v1216
        %v1958 = vpop.f32.mrf.mxu0
        %v1959 = vadd.f32 %v1289, %v1958
        %v1960 = vpop.f32.mrf.mxu0
        %v1961 = vadd.f32 %v1289, %v1960
        %1962 = vmatmul.bf16.gmra.mxu0 %v1217
        %v1963 = vpop.f32.mrf.mxu0
        %v1964 = vadd.f32 %v1289, %v1963
        %v1965 = vpop.f32.mrf.mxu0
        %v1966 = vadd.f32 %v1289, %v1965
        %1967 = vmatmul.bf16.gmra.mxu0 %v1218
        %v1968 = vpop.f32.mrf.mxu0
        %v1969 = vadd.f32 %v1289, %v1968
        %v1970 = vpop.f32.mrf.mxu0
        %v1971 = vadd.f32 %v1289, %v1970
        %1972 = vmatmul.bf16.gmra.mxu0 %v1219
        %v1973 = vpop.f32.mrf.mxu0
        %v1974 = vadd.f32 %v1289, %v1973
        %v1975 = vpop.f32.mrf.mxu0
        %v1976 = vadd.f32 %v1289, %v1975
        %1977 = vdwg.mxu0
        %1978 = vmatpush.bf16.msra.mxu0 %v1554
        %1979 = vmatpush.bf16.msra.mxu0 %v1546
        %1980 = vmatpush.bf16.msra.mxu0 %v1538
        %1981 = vmatpush.bf16.msra.mxu0 %v1530
        %1982 = vmatpush.bf16.msra.mxu0 %v1522
        %1983 = vmatpush.bf16.msra.mxu0 %v1514
        %1984 = vmatpush.bf16.msra.mxu0 %v1506
        %1985 = vmatpush.bf16.msra.mxu0 %v1498
        %1986 = vmatmul.bf16.gmra.mxu0 %v1204
        %v1987 = vpop.f32.mrf.mxu0
        %v1988 = vadd.f32 %v1290, %v1987
        %v1989 = vpop.f32.mrf.mxu0
        %v1990 = vadd.f32 %v1290, %v1989
        %1991 = vmatmul.bf16.gmra.mxu0 %v1205
        %v1992 = vpop.f32.mrf.mxu0
        %v1993 = vadd.f32 %v1290, %v1992
        %v1994 = vpop.f32.mrf.mxu0
        %v1995 = vadd.f32 %v1290, %v1994
        %1996 = vmatmul.bf16.gmra.mxu0 %v1206
        %v1997 = vpop.f32.mrf.mxu0
        %v1998 = vadd.f32 %v1290, %v1997
        %v1999 = vpop.f32.mrf.mxu0
        %v2000 = vadd.f32 %v1290, %v1999
        %2001 = vmatmul.bf16.gmra.mxu0 %v1207
        %v2002 = vpop.f32.mrf.mxu0
        %v2003 = vadd.f32 %v1290, %v2002
        %v2004 = vpop.f32.mrf.mxu0
        %v2005 = vadd.f32 %v1290, %v2004
        %2006 = vmatmul.bf16.gmra.mxu0 %v1208
        %v2007 = vpop.f32.mrf.mxu0
        %v2008 = vadd.f32 %v1290, %v2007
        %v2009 = vpop.f32.mrf.mxu0
        %v2010 = vadd.f32 %v1290, %v2009
        %2011 = vmatmul.bf16.gmra.mxu0 %v1209
        %v2012 = vpop.f32.mrf.mxu0
        %v2013 = vadd.f32 %v1290, %v2012
        %v2014 = vpop.f32.mrf.mxu0
        %v2015 = vadd.f32 %v1290, %v2014
        %2016 = vmatmul.bf16.gmra.mxu0 %v1210
        %v2017 = vpop.f32.mrf.mxu0
        %v2018 = vadd.f32 %v1290, %v2017
        %v2019 = vpop.f32.mrf.mxu0
        %v2020 = vadd.f32 %v1290, %v2019
        %2021 = vmatmul.bf16.gmra.mxu0 %v1211
        %v2022 = vpop.f32.mrf.mxu0
        %v2023 = vadd.f32 %v1290, %v2022
        %v2024 = vpop.f32.mrf.mxu0
        %v2025 = vadd.f32 %v1290, %v2024
        %2026 = vmatmul.bf16.gmra.mxu0 %v1212
        %v2027 = vpop.f32.mrf.mxu0
        %v2028 = vadd.f32 %v1290, %v2027
        %v2029 = vpop.f32.mrf.mxu0
        %v2030 = vadd.f32 %v1290, %v2029
        %2031 = vmatmul.bf16.gmra.mxu0 %v1213
        %v2032 = vpop.f32.mrf.mxu0
        %v2033 = vadd.f32 %v1290, %v2032
        %v2034 = vpop.f32.mrf.mxu0
        %v2035 = vadd.f32 %v1290, %v2034
        %2036 = vmatmul.bf16.gmra.mxu0 %v1214
        %v2037 = vpop.f32.mrf.mxu0
        %v2038 = vadd.f32 %v1290, %v2037
        %v2039 = vpop.f32.mrf.mxu0
        %v2040 = vadd.f32 %v1290, %v2039
        %2041 = vmatmul.bf16.gmra.mxu0 %v1215
        %v2042 = vpop.f32.mrf.mxu0
        %v2043 = vadd.f32 %v1290, %v2042
        %v2044 = vpop.f32.mrf.mxu0
        %v2045 = vadd.f32 %v1290, %v2044
        %2046 = vmatmul.bf16.gmra.mxu0 %v1216
        %v2047 = vpop.f32.mrf.mxu0
        %v2048 = vadd.f32 %v1290, %v2047
        %v2049 = vpop.f32.mrf.mxu0
        %v2050 = vadd.f32 %v1290, %v2049
        %2051 = vmatmul.bf16.gmra.mxu0 %v1217
        %v2052 = vpop.f32.mrf.mxu0
        %v2053 = vadd.f32 %v1290, %v2052
        %v2054 = vpop.f32.mrf.mxu0
        %v2055 = vadd.f32 %v1290, %v2054
        %2056 = vmatmul.bf16.gmra.mxu0 %v1218
        %v2057 = vpop.f32.mrf.mxu0
        %v2058 = vadd.f32 %v1290, %v2057
        %v2059 = vpop.f32.mrf.mxu0
        %v2060 = vadd.f32 %v1290, %v2059
        %2061 = vmatmul.bf16.gmra.mxu0 %v1219
        %v2062 = vpop.f32.mrf.mxu0
        %v2063 = vadd.f32 %v1290, %v2062
        %v2064 = vpop.f32.mrf.mxu0
        %v2065 = vadd.f32 %v1290, %v2064
        %2066 = vdwg.mxu0
        %2067 = vmatpush.bf16.msra.mxu0 %v1555
        %2068 = vmatpush.bf16.msra.mxu0 %v1547
        %2069 = vmatpush.bf16.msra.mxu0 %v1539
        %2070 = vmatpush.bf16.msra.mxu0 %v1531
        %2071 = vmatpush.bf16.msra.mxu0 %v1523
        %2072 = vmatpush.bf16.msra.mxu0 %v1515
        %2073 = vmatpush.bf16.msra.mxu0 %v1507
        %2074 = vmatpush.bf16.msra.mxu0 %v1499
        %2075 = vmatmul.bf16.gmra.mxu0 %v1204
        %v2076 = vpop.f32.mrf.mxu0
        %v2077 = vadd.f32 %v1291, %v2076
        %v2078 = vpop.f32.mrf.mxu0
        %v2079 = vadd.f32 %v1291, %v2078
        %2080 = vmatmul.bf16.gmra.mxu0 %v1205
        %v2081 = vpop.f32.mrf.mxu0
        %v2082 = vadd.f32 %v1291, %v2081
        %v2083 = vpop.f32.mrf.mxu0
        %v2084 = vadd.f32 %v1291, %v2083
        %2085 = vmatmul.bf16.gmra.mxu0 %v1206
        %v2086 = vpop.f32.mrf.mxu0
        %v2087 = vadd.f32 %v1291, %v2086
        %v2088 = vpop.f32.mrf.mxu0
        %v2089 = vadd.f32 %v1291, %v2088
        %2090 = vmatmul.bf16.gmra.mxu0 %v1207
        %v2091 = vpop.f32.mrf.mxu0
        %v2092 = vadd.f32 %v1291, %v2091
        %v2093 = vpop.f32.mrf.mxu0
        %v2094 = vadd.f32 %v1291, %v2093
        %2095 = vmatmul.bf16.gmra.mxu0 %v1208
        %v2096 = vpop.f32.mrf.mxu0
        %v2097 = vadd.f32 %v1291, %v2096
        %v2098 = vpop.f32.mrf.mxu0
        %v2099 = vadd.f32 %v1291, %v2098
        %2100 = vmatmul.bf16.gmra.mxu0 %v1209
        %v2101 = vpop.f32.mrf.mxu0
        %v2102 = vadd.f32 %v1291, %v2101
        %v2103 = vpop.f32.mrf.mxu0
        %v2104 = vadd.f32 %v1291, %v2103
        %2105 = vmatmul.bf16.gmra.mxu0 %v1210
        %v2106 = vpop.f32.mrf.mxu0
        %v2107 = vadd.f32 %v1291, %v2106
        %v2108 = vpop.f32.mrf.mxu0
        %v2109 = vadd.f32 %v1291, %v2108
        %2110 = vmatmul.bf16.gmra.mxu0 %v1211
        %v2111 = vpop.f32.mrf.mxu0
        %v2112 = vadd.f32 %v1291, %v2111
        %v2113 = vpop.f32.mrf.mxu0
        %v2114 = vadd.f32 %v1291, %v2113
        %2115 = vmatmul.bf16.gmra.mxu0 %v1212
        %v2116 = vpop.f32.mrf.mxu0
        %v2117 = vadd.f32 %v1291, %v2116
        %v2118 = vpop.f32.mrf.mxu0
        %v2119 = vadd.f32 %v1291, %v2118
        %2120 = vmatmul.bf16.gmra.mxu0 %v1213
        %v2121 = vpop.f32.mrf.mxu0
        %v2122 = vadd.f32 %v1291, %v2121
        %v2123 = vpop.f32.mrf.mxu0
        %v2124 = vadd.f32 %v1291, %v2123
        %2125 = vmatmul.bf16.gmra.mxu0 %v1214
        %v2126 = vpop.f32.mrf.mxu0
        %v2127 = vadd.f32 %v1291, %v2126
        %v2128 = vpop.f32.mrf.mxu0
        %v2129 = vadd.f32 %v1291, %v2128
        %2130 = vmatmul.bf16.gmra.mxu0 %v1215
        %v2131 = vpop.f32.mrf.mxu0
        %v2132 = vadd.f32 %v1291, %v2131
        %v2133 = vpop.f32.mrf.mxu0
        %v2134 = vadd.f32 %v1291, %v2133
        %2135 = vmatmul.bf16.gmra.mxu0 %v1216
        %v2136 = vpop.f32.mrf.mxu0
        %v2137 = vadd.f32 %v1291, %v2136
        %v2138 = vpop.f32.mrf.mxu0
        %v2139 = vadd.f32 %v1291, %v2138
        %2140 = vmatmul.bf16.gmra.mxu0 %v1217
        %v2141 = vpop.f32.mrf.mxu0
        %v2142 = vadd.f32 %v1291, %v2141
        %v2143 = vpop.f32.mrf.mxu0
        %v2144 = vadd.f32 %v1291, %v2143
        %2145 = vmatmul.bf16.gmra.mxu0 %v1218
        %v2146 = vpop.f32.mrf.mxu0
        %v2147 = vadd.f32 %v1291, %v2146
        %v2148 = vpop.f32.mrf.mxu0
        %v2149 = vadd.f32 %v1291, %v2148
        %2150 = vmatmul.bf16.gmra.mxu0 %v1219
        %v2151 = vpop.f32.mrf.mxu0
        %v2152 = vadd.f32 %v1291, %v2151
        %v2153 = vpop.f32.mrf.mxu0
        %v2154 = vadd.f32 %v1291, %v2153
        %2155 = vdwg.mxu0
        %2156 = vmatpush.bf16.msra.mxu0 %v1556
        %2157 = vmatpush.bf16.msra.mxu0 %v1548
        %2158 = vmatpush.bf16.msra.mxu0 %v1540
        %2159 = vmatpush.bf16.msra.mxu0 %v1532
        %2160 = vmatpush.bf16.msra.mxu0 %v1524
        %2161 = vmatpush.bf16.msra.mxu0 %v1516
        %2162 = vmatpush.bf16.msra.mxu0 %v1508
        %2163 = vmatpush.bf16.msra.mxu0 %v1500
        %2164 = vmatmul.bf16.gmra.mxu0 %v1204
        %v2165 = vpop.f32.mrf.mxu0
        %v2166 = vadd.f32 %v1292, %v2165
        %v2167 = vpop.f32.mrf.mxu0
        %v2168 = vadd.f32 %v1292, %v2167
        %2169 = vmatmul.bf16.gmra.mxu0 %v1205
        %v2170 = vpop.f32.mrf.mxu0
        %v2171 = vadd.f32 %v1292, %v2170
        %v2172 = vpop.f32.mrf.mxu0
        %v2173 = vadd.f32 %v1292, %v2172
        %2174 = vmatmul.bf16.gmra.mxu0 %v1206
        %v2175 = vpop.f32.mrf.mxu0
        %v2176 = vadd.f32 %v1292, %v2175
        %v2177 = vpop.f32.mrf.mxu0
        %v2178 = vadd.f32 %v1292, %v2177
        %2179 = vmatmul.bf16.gmra.mxu0 %v1207
        %v2180 = vpop.f32.mrf.mxu0
        %v2181 = vadd.f32 %v1292, %v2180
        %v2182 = vpop.f32.mrf.mxu0
        %v2183 = vadd.f32 %v1292, %v2182
        %2184 = vmatmul.bf16.gmra.mxu0 %v1208
        %v2185 = vpop.f32.mrf.mxu0
        %v2186 = vadd.f32 %v1292, %v2185
        %v2187 = vpop.f32.mrf.mxu0
        %v2188 = vadd.f32 %v1292, %v2187
        %2189 = vmatmul.bf16.gmra.mxu0 %v1209
        %v2190 = vpop.f32.mrf.mxu0
        %v2191 = vadd.f32 %v1292, %v2190
        %v2192 = vpop.f32.mrf.mxu0
        %v2193 = vadd.f32 %v1292, %v2192
        %2194 = vmatmul.bf16.gmra.mxu0 %v1210
        %v2195 = vpop.f32.mrf.mxu0
        %v2196 = vadd.f32 %v1292, %v2195
        %v2197 = vpop.f32.mrf.mxu0
        %v2198 = vadd.f32 %v1292, %v2197
        %2199 = vmatmul.bf16.gmra.mxu0 %v1211
        %v2200 = vpop.f32.mrf.mxu0
        %v2201 = vadd.f32 %v1292, %v2200
        %v2202 = vpop.f32.mrf.mxu0
        %v2203 = vadd.f32 %v1292, %v2202
        %2204 = vmatmul.bf16.gmra.mxu0 %v1212
        %v2205 = vpop.f32.mrf.mxu0
        %v2206 = vadd.f32 %v1292, %v2205
        %v2207 = vpop.f32.mrf.mxu0
        %v2208 = vadd.f32 %v1292, %v2207
        %2209 = vmatmul.bf16.gmra.mxu0 %v1213
        %v2210 = vpop.f32.mrf.mxu0
        %v2211 = vadd.f32 %v1292, %v2210
        %v2212 = vpop.f32.mrf.mxu0
        %v2213 = vadd.f32 %v1292, %v2212
        %2214 = vmatmul.bf16.gmra.mxu0 %v1214
        %v2215 = vpop.f32.mrf.mxu0
        %v2216 = vadd.f32 %v1292, %v2215
        %v2217 = vpop.f32.mrf.mxu0
        %v2218 = vadd.f32 %v1292, %v2217
        %2219 = vmatmul.bf16.gmra.mxu0 %v1215
        %v2220 = vpop.f32.mrf.mxu0
        %v2221 = vadd.f32 %v1292, %v2220
        %v2222 = vpop.f32.mrf.mxu0
        %v2223 = vadd.f32 %v1292, %v2222
        %2224 = vmatmul.bf16.gmra.mxu0 %v1216
        %v2225 = vpop.f32.mrf.mxu0
        %v2226 = vadd.f32 %v1292, %v2225
        %v2227 = vpop.f32.mrf.mxu0
        %v2228 = vadd.f32 %v1292, %v2227
        %2229 = vmatmul.bf16.gmra.mxu0 %v1217
        %v2230 = vpop.f32.mrf.mxu0
        %v2231 = vadd.f32 %v1292, %v2230
        %v2232 = vpop.f32.mrf.mxu0
        %v2233 = vadd.f32 %v1292, %v2232
        %2234 = vmatmul.bf16.gmra.mxu0 %v1218
        %v2235 = vpop.f32.mrf.mxu0
        %v2236 = vadd.f32 %v1292, %v2235
        %v2237 = vpop.f32.mrf.mxu0
        %v2238 = vadd.f32 %v1292, %v2237
        %2239 = vmatmul.bf16.gmra.mxu0 %v1219
        %v2240 = vpop.f32.mrf.mxu0
        %v2241 = vadd.f32 %v1292, %v2240
        %v2242 = vpop.f32.mrf.mxu0
        %v2243 = vadd.f32 %v1292, %v2242
        %2244 = vdwg.mxu0
        %2245 = vmatpush.bf16.msra.mxu0 %v1557
        %2246 = vmatpush.bf16.msra.mxu0 %v1549
        %2247 = vmatpush.bf16.msra.mxu0 %v1541
        %2248 = vmatpush.bf16.msra.mxu0 %v1533
        %2249 = vmatpush.bf16.msra.mxu0 %v1525
        %2250 = vmatpush.bf16.msra.mxu0 %v1517
        %2251 = vmatpush.bf16.msra.mxu0 %v1509
        %2252 = vmatpush.bf16.msra.mxu0 %v1501
        %2253 = vmatmul.bf16.gmra.mxu0 %v1204
        %v2254 = vpop.f32.mrf.mxu0
        %v2255 = vadd.f32 %v1293, %v2254
        %v2256 = vpop.f32.mrf.mxu0
        %v2257 = vadd.f32 %v1293, %v2256
        %2258 = vmatmul.bf16.gmra.mxu0 %v1205
        %v2259 = vpop.f32.mrf.mxu0
        %v2260 = vadd.f32 %v1293, %v2259
        %v2261 = vpop.f32.mrf.mxu0
        %v2262 = vadd.f32 %v1293, %v2261
        %2263 = vmatmul.bf16.gmra.mxu0 %v1206
        %v2264 = vpop.f32.mrf.mxu0
        %v2265 = vadd.f32 %v1293, %v2264
        %v2266 = vpop.f32.mrf.mxu0
        %v2267 = vadd.f32 %v1293, %v2266
        %2268 = vmatmul.bf16.gmra.mxu0 %v1207
        %v2269 = vpop.f32.mrf.mxu0
        %v2270 = vadd.f32 %v1293, %v2269
        %v2271 = vpop.f32.mrf.mxu0
        %v2272 = vadd.f32 %v1293, %v2271
        %2273 = vmatmul.bf16.gmra.mxu0 %v1208
        %v2274 = vpop.f32.mrf.mxu0
        %v2275 = vadd.f32 %v1293, %v2274
        %v2276 = vpop.f32.mrf.mxu0
        %v2277 = vadd.f32 %v1293, %v2276
        %2278 = vmatmul.bf16.gmra.mxu0 %v1209
        %v2279 = vpop.f32.mrf.mxu0
        %v2280 = vadd.f32 %v1293, %v2279
        %v2281 = vpop.f32.mrf.mxu0
        %v2282 = vadd.f32 %v1293, %v2281
        %2283 = vmatmul.bf16.gmra.mxu0 %v1210
        %v2284 = vpop.f32.mrf.mxu0
        %v2285 = vadd.f32 %v1293, %v2284
        %v2286 = vpop.f32.mrf.mxu0
        %v2287 = vadd.f32 %v1293, %v2286
        %2288 = vmatmul.bf16.gmra.mxu0 %v1211
        %v2289 = vpop.f32.mrf.mxu0
        %v2290 = vadd.f32 %v1293, %v2289
        %v2291 = vpop.f32.mrf.mxu0
        %v2292 = vadd.f32 %v1293, %v2291
        %2293 = vmatmul.bf16.gmra.mxu0 %v1212
        %v2294 = vpop.f32.mrf.mxu0
        %v2295 = vadd.f32 %v1293, %v2294
        %v2296 = vpop.f32.mrf.mxu0
        %v2297 = vadd.f32 %v1293, %v2296
        %2298 = vmatmul.bf16.gmra.mxu0 %v1213
        %v2299 = vpop.f32.mrf.mxu0
        %v2300 = vadd.f32 %v1293, %v2299
        %v2301 = vpop.f32.mrf.mxu0
        %v2302 = vadd.f32 %v1293, %v2301
        %2303 = vmatmul.bf16.gmra.mxu0 %v1214
        %v2304 = vpop.f32.mrf.mxu0
        %v2305 = vadd.f32 %v1293, %v2304
        %v2306 = vpop.f32.mrf.mxu0
        %v2307 = vadd.f32 %v1293, %v2306
        %2308 = vmatmul.bf16.gmra.mxu0 %v1215
        %v2309 = vpop.f32.mrf.mxu0
        %v2310 = vadd.f32 %v1293, %v2309
        %v2311 = vpop.f32.mrf.mxu0
        %v2312 = vadd.f32 %v1293, %v2311
        %2313 = vmatmul.bf16.gmra.mxu0 %v1216
        %v2314 = vpop.f32.mrf.mxu0
        %v2315 = vadd.f32 %v1293, %v2314
        %v2316 = vpop.f32.mrf.mxu0
        %v2317 = vadd.f32 %v1293, %v2316
        %2318 = vmatmul.bf16.gmra.mxu0 %v1217
        %v2319 = vpop.f32.mrf.mxu0
        %v2320 = vadd.f32 %v1293, %v2319
        %v2321 = vpop.f32.mrf.mxu0
        %v2322 = vadd.f32 %v1293, %v2321
        %2323 = vmatmul.bf16.gmra.mxu0 %v1218
        %v2324 = vpop.f32.mrf.mxu0
        %v2325 = vadd.f32 %v1293, %v2324
        %v2326 = vpop.f32.mrf.mxu0
        %v2327 = vadd.f32 %v1293, %v2326
        %2328 = vmatmul.bf16.gmra.mxu0 %v1219
        %v2329 = vpop.f32.mrf.mxu0
        %v2330 = vadd.f32 %v1293, %v2329
        %v2331 = vpop.f32.mrf.mxu0
        %v2332 = vadd.f32 %v1293, %v2331
        %2333 = vdwg.mxu0
        %v2334 = vmax.f32 %v1632, 0.0
        %v2335 = vmax.f32 %v1721, 0.0
        %v2336 = vmax.f32 %v1810, 0.0
        %v2337 = vmax.f32 %v1899, 0.0
        %v2338 = vmax.f32 %v1988, 0.0
        %v2339 = vmax.f32 %v2077, 0.0
        %v2340 = vmax.f32 %v2166, 0.0
        %v2341 = vmax.f32 %v2255, 0.0
        %v2342 = vmax.f32 %v1634, 0.0
        %v2343 = vmax.f32 %v1723, 0.0
        %v2344 = vmax.f32 %v1812, 0.0
        %v2345 = vmax.f32 %v1901, 0.0
        %v2346 = vmax.f32 %v1990, 0.0
        %v2347 = vmax.f32 %v2079, 0.0
        %v2348 = vmax.f32 %v2168, 0.0
        %v2349 = vmax.f32 %v2257, 0.0
        %v2350 = vmax.f32 %v1637, 0.0
        %v2351 = vmax.f32 %v1726, 0.0
        %v2352 = vmax.f32 %v1815, 0.0
        %v2353 = vmax.f32 %v1904, 0.0
        %v2354 = vmax.f32 %v1993, 0.0
        %v2355 = vmax.f32 %v2082, 0.0
        %v2356 = vmax.f32 %v2171, 0.0
        %v2357 = vmax.f32 %v2260, 0.0
        %v2358 = vmax.f32 %v1639, 0.0
        %v2359 = vmax.f32 %v1728, 0.0
        %v2360 = vmax.f32 %v1817, 0.0
        %v2361 = vmax.f32 %v1906, 0.0
        %v2362 = vmax.f32 %v1995, 0.0
        %v2363 = vmax.f32 %v2084, 0.0
        %v2364 = vmax.f32 %v2173, 0.0
        %v2365 = vmax.f32 %v2262, 0.0
        %v2366 = vmax.f32 %v1642, 0.0
        %v2367 = vmax.f32 %v1731, 0.0
        %v2368 = vmax.f32 %v1820, 0.0
        %v2369 = vmax.f32 %v1909, 0.0
        %v2370 = vmax.f32 %v1998, 0.0
        %v2371 = vmax.f32 %v2087, 0.0
        %v2372 = vmax.f32 %v2176, 0.0
        %v2373 = vmax.f32 %v2265, 0.0
        %v2374 = vmax.f32 %v1644, 0.0
        %v2375 = vmax.f32 %v1733, 0.0
        %v2376 = vmax.f32 %v1822, 0.0
        %v2377 = vmax.f32 %v1911, 0.0
        %v2378 = vmax.f32 %v2000, 0.0
        %v2379 = vmax.f32 %v2089, 0.0
        %v2380 = vmax.f32 %v2178, 0.0
        %v2381 = vmax.f32 %v2267, 0.0
        %v2382 = vmax.f32 %v1647, 0.0
        %v2383 = vmax.f32 %v1736, 0.0
        %v2384 = vmax.f32 %v1825, 0.0
        %v2385 = vmax.f32 %v1914, 0.0
        %v2386 = vmax.f32 %v2003, 0.0
        %v2387 = vmax.f32 %v2092, 0.0
        %v2388 = vmax.f32 %v2181, 0.0
        %v2389 = vmax.f32 %v2270, 0.0
        %v2390 = vmax.f32 %v1649, 0.0
        %v2391 = vmax.f32 %v1738, 0.0
        %v2392 = vmax.f32 %v1827, 0.0
        %v2393 = vmax.f32 %v1916, 0.0
        %v2394 = vmax.f32 %v2005, 0.0
        %v2395 = vmax.f32 %v2094, 0.0
        %v2396 = vmax.f32 %v2183, 0.0
        %v2397 = vmax.f32 %v2272, 0.0
        %v2398 = vmax.f32 %v1652, 0.0
        %v2399 = vmax.f32 %v1741, 0.0
        %v2400 = vmax.f32 %v1830, 0.0
        %v2401 = vmax.f32 %v1919, 0.0
        %v2402 = vmax.f32 %v2008, 0.0
        %v2403 = vmax.f32 %v2097, 0.0
        %v2404 = vmax.f32 %v2186, 0.0
        %v2405 = vmax.f32 %v2275, 0.0
        %v2406 = vmax.f32 %v1654, 0.0
        %v2407 = vmax.f32 %v1743, 0.0
        %v2408 = vmax.f32 %v1832, 0.0
        %v2409 = vmax.f32 %v1921, 0.0
        %v2410 = vmax.f32 %v2010, 0.0
        %v2411 = vmax.f32 %v2099, 0.0
        %v2412 = vmax.f32 %v2188, 0.0
        %v2413 = vmax.f32 %v2277, 0.0
        %v2414 = vmax.f32 %v1657, 0.0
        %v2415 = vmax.f32 %v1746, 0.0
        %v2416 = vmax.f32 %v1835, 0.0
        %v2417 = vmax.f32 %v1924, 0.0
        %v2418 = vmax.f32 %v2013, 0.0
        %v2419 = vmax.f32 %v2102, 0.0
        %v2420 = vmax.f32 %v2191, 0.0
        %v2421 = vmax.f32 %v2280, 0.0
        %v2422 = vmax.f32 %v1659, 0.0
        %v2423 = vmax.f32 %v1748, 0.0
        %v2424 = vmax.f32 %v1837, 0.0
        %v2425 = vmax.f32 %v1926, 0.0
        %v2426 = vmax.f32 %v2015, 0.0
        %v2427 = vmax.f32 %v2104, 0.0
        %v2428 = vmax.f32 %v2193, 0.0
        %v2429 = vmax.f32 %v2282, 0.0
        %v2430 = vmax.f32 %v1662, 0.0
        %v2431 = vmax.f32 %v1751, 0.0
        %v2432 = vmax.f32 %v1840, 0.0
        %v2433 = vmax.f32 %v1929, 0.0
        %v2434 = vmax.f32 %v2018, 0.0
        %v2435 = vmax.f32 %v2107, 0.0
        %v2436 = vmax.f32 %v2196, 0.0
        %v2437 = vmax.f32 %v2285, 0.0
        %v2438 = vmax.f32 %v1664, 0.0
        %v2439 = vmax.f32 %v1753, 0.0
        %v2440 = vmax.f32 %v1842, 0.0
        %v2441 = vmax.f32 %v1931, 0.0
        %v2442 = vmax.f32 %v2020, 0.0
        %v2443 = vmax.f32 %v2109, 0.0
        %v2444 = vmax.f32 %v2198, 0.0
        %v2445 = vmax.f32 %v2287, 0.0
        %v2446 = vmax.f32 %v1667, 0.0
        %v2447 = vmax.f32 %v1756, 0.0
        %v2448 = vmax.f32 %v1845, 0.0
        %v2449 = vmax.f32 %v1934, 0.0
        %v2450 = vmax.f32 %v2023, 0.0
        %v2451 = vmax.f32 %v2112, 0.0
        %v2452 = vmax.f32 %v2201, 0.0
        %v2453 = vmax.f32 %v2290, 0.0
        %v2454 = vmax.f32 %v1669, 0.0
        %v2455 = vmax.f32 %v1758, 0.0
        %v2456 = vmax.f32 %v1847, 0.0
        %v2457 = vmax.f32 %v1936, 0.0
        %v2458 = vmax.f32 %v2025, 0.0
        %v2459 = vmax.f32 %v2114, 0.0
        %v2460 = vmax.f32 %v2203, 0.0
        %v2461 = vmax.f32 %v2292, 0.0
        %v2462 = vmax.f32 %v1672, 0.0
        %v2463 = vmax.f32 %v1761, 0.0
        %v2464 = vmax.f32 %v1850, 0.0
        %v2465 = vmax.f32 %v1939, 0.0
        %v2466 = vmax.f32 %v2028, 0.0
        %v2467 = vmax.f32 %v2117, 0.0
        %v2468 = vmax.f32 %v2206, 0.0
        %v2469 = vmax.f32 %v2295, 0.0
        %v2470 = vmax.f32 %v1674, 0.0
        %v2471 = vmax.f32 %v1763, 0.0
        %v2472 = vmax.f32 %v1852, 0.0
        %v2473 = vmax.f32 %v1941, 0.0
        %v2474 = vmax.f32 %v2030, 0.0
        %v2475 = vmax.f32 %v2119, 0.0
        %v2476 = vmax.f32 %v2208, 0.0
        %v2477 = vmax.f32 %v2297, 0.0
        %v2478 = vmax.f32 %v1677, 0.0
        %v2479 = vmax.f32 %v1766, 0.0
        %v2480 = vmax.f32 %v1855, 0.0
        %v2481 = vmax.f32 %v1944, 0.0
        %v2482 = vmax.f32 %v2033, 0.0
        %v2483 = vmax.f32 %v2122, 0.0
        %v2484 = vmax.f32 %v2211, 0.0
        %v2485 = vmax.f32 %v2300, 0.0
        %v2486 = vmax.f32 %v1679, 0.0
        %v2487 = vmax.f32 %v1768, 0.0
        %v2488 = vmax.f32 %v1857, 0.0
        %v2489 = vmax.f32 %v1946, 0.0
        %v2490 = vmax.f32 %v2035, 0.0
        %v2491 = vmax.f32 %v2124, 0.0
        %v2492 = vmax.f32 %v2213, 0.0
        %v2493 = vmax.f32 %v2302, 0.0
        %v2494 = vmax.f32 %v1682, 0.0
        %v2495 = vmax.f32 %v1771, 0.0
        %v2496 = vmax.f32 %v1860, 0.0
        %v2497 = vmax.f32 %v1949, 0.0
        %v2498 = vmax.f32 %v2038, 0.0
        %v2499 = vmax.f32 %v2127, 0.0
        %v2500 = vmax.f32 %v2216, 0.0
        %v2501 = vmax.f32 %v2305, 0.0
        %v2502 = vmax.f32 %v1684, 0.0
        %v2503 = vmax.f32 %v1773, 0.0
        %v2504 = vmax.f32 %v1862, 0.0
        %v2505 = vmax.f32 %v1951, 0.0
        %v2506 = vmax.f32 %v2040, 0.0
        %v2507 = vmax.f32 %v2129, 0.0
        %v2508 = vmax.f32 %v2218, 0.0
        %v2509 = vmax.f32 %v2307, 0.0
        %v2510 = vmax.f32 %v1687, 0.0
        %v2511 = vmax.f32 %v1776, 0.0
        %v2512 = vmax.f32 %v1865, 0.0
        %v2513 = vmax.f32 %v1954, 0.0
        %v2514 = vmax.f32 %v2043, 0.0
        %v2515 = vmax.f32 %v2132, 0.0
        %v2516 = vmax.f32 %v2221, 0.0
        %v2517 = vmax.f32 %v2310, 0.0
        %v2518 = vmax.f32 %v1689, 0.0
        %v2519 = vmax.f32 %v1778, 0.0
        %v2520 = vmax.f32 %v1867, 0.0
        %v2521 = vmax.f32 %v1956, 0.0
        %v2522 = vmax.f32 %v2045, 0.0
        %v2523 = vmax.f32 %v2134, 0.0
        %v2524 = vmax.f32 %v2223, 0.0
        %v2525 = vmax.f32 %v2312, 0.0
        %v2526 = vmax.f32 %v1692, 0.0
        %v2527 = vmax.f32 %v1781, 0.0
        %v2528 = vmax.f32 %v1870, 0.0
        %v2529 = vmax.f32 %v1959, 0.0
        %v2530 = vmax.f32 %v2048, 0.0
        %v2531 = vmax.f32 %v2137, 0.0
        %v2532 = vmax.f32 %v2226, 0.0
        %v2533 = vmax.f32 %v2315, 0.0
        %v2534 = vmax.f32 %v1694, 0.0
        %v2535 = vmax.f32 %v1783, 0.0
        %v2536 = vmax.f32 %v1872, 0.0
        %v2537 = vmax.f32 %v1961, 0.0
        %v2538 = vmax.f32 %v2050, 0.0
        %v2539 = vmax.f32 %v2139, 0.0
        %v2540 = vmax.f32 %v2228, 0.0
        %v2541 = vmax.f32 %v2317, 0.0
        %v2542 = vmax.f32 %v1697, 0.0
        %v2543 = vmax.f32 %v1786, 0.0
        %v2544 = vmax.f32 %v1875, 0.0
        %v2545 = vmax.f32 %v1964, 0.0
        %v2546 = vmax.f32 %v2053, 0.0
        %v2547 = vmax.f32 %v2142, 0.0
        %v2548 = vmax.f32 %v2231, 0.0
        %v2549 = vmax.f32 %v2320, 0.0
        %v2550 = vmax.f32 %v1699, 0.0
        %v2551 = vmax.f32 %v1788, 0.0
        %v2552 = vmax.f32 %v1877, 0.0
        %v2553 = vmax.f32 %v1966, 0.0
        %v2554 = vmax.f32 %v2055, 0.0
        %v2555 = vmax.f32 %v2144, 0.0
        %v2556 = vmax.f32 %v2233, 0.0
        %v2557 = vmax.f32 %v2322, 0.0
        %v2558 = vmax.f32 %v1702, 0.0
        %v2559 = vmax.f32 %v1791, 0.0
        %v2560 = vmax.f32 %v1880, 0.0
        %v2561 = vmax.f32 %v1969, 0.0
        %v2562 = vmax.f32 %v2058, 0.0
        %v2563 = vmax.f32 %v2147, 0.0
        %v2564 = vmax.f32 %v2236, 0.0
        %v2565 = vmax.f32 %v2325, 0.0
        %v2566 = vmax.f32 %v1704, 0.0
        %v2567 = vmax.f32 %v1793, 0.0
        %v2568 = vmax.f32 %v1882, 0.0
        %v2569 = vmax.f32 %v1971, 0.0
        %v2570 = vmax.f32 %v2060, 0.0
        %v2571 = vmax.f32 %v2149, 0.0
        %v2572 = vmax.f32 %v2238, 0.0
        %v2573 = vmax.f32 %v2327, 0.0
        %v2574 = vmax.f32 %v1707, 0.0
        %v2575 = vmax.f32 %v1796, 0.0
        %v2576 = vmax.f32 %v1885, 0.0
        %v2577 = vmax.f32 %v1974, 0.0
        %v2578 = vmax.f32 %v2063, 0.0
        %v2579 = vmax.f32 %v2152, 0.0
        %v2580 = vmax.f32 %v2241, 0.0
        %v2581 = vmax.f32 %v2330, 0.0
        %v2582 = vmax.f32 %v1709, 0.0
        %v2583 = vmax.f32 %v1798, 0.0
        %v2584 = vmax.f32 %v1887, 0.0
        %v2585 = vmax.f32 %v1976, 0.0
        %v2586 = vmax.f32 %v2065, 0.0
        %v2587 = vmax.f32 %v2154, 0.0
        %v2588 = vmax.f32 %v2243, 0.0
        %v2589 = vmax.f32 %v2332, 0.0
        %v2590 = vmax.f32 %v2334, %v2342
        %v2591 = vmax.f32 %v2590, %v2350
        %v2592 = vmax.f32 %v2591, %v2358
        %v2593 = vmax.f32 %v2592, %v2366
        %v2594 = vmax.f32 %v2593, %v2374
        %v2595 = vmax.f32 %v2594, %v2382
        %v2596 = vmax.f32 %v2595, %v2390
        %v2597 = vmax.f32 %v2596, %v2398
        %v2598 = vmax.f32 %v2597, %v2406
        %v2599 = vmax.f32 %v2598, %v2414
        %v2600 = vmax.f32 %v2599, %v2422
        %v2601 = vmax.f32 %v2600, %v2430
        %v2602 = vmax.f32 %v2601, %v2438
        %v2603 = vmax.f32 %v2602, %v2446
        %v2604 = vmax.f32 %v2603, %v2454
        %v2605 = vrot.slane %v2604, 4
        %v2606 = vmax.f32 %v2604, %v2605
        %v2607 = vrot.slane %v2606, 2
        %v2608 = vmax.f32 %v2606, %v2607
        %v2609 = vrot.slane %v2608, 1
        %v2610 = vmax.f32 %v2608, %v2609
        %v2611 = vmax.f32 %v2335, %v2343
        %v2612 = vmax.f32 %v2611, %v2351
        %v2613 = vmax.f32 %v2612, %v2359
        %v2614 = vmax.f32 %v2613, %v2367
        %v2615 = vmax.f32 %v2614, %v2375
        %v2616 = vmax.f32 %v2615, %v2383
        %v2617 = vmax.f32 %v2616, %v2391
        %v2618 = vmax.f32 %v2617, %v2399
        %v2619 = vmax.f32 %v2618, %v2407
        %v2620 = vmax.f32 %v2619, %v2415
        %v2621 = vmax.f32 %v2620, %v2423
        %v2622 = vmax.f32 %v2621, %v2431
        %v2623 = vmax.f32 %v2622, %v2439
        %v2624 = vmax.f32 %v2623, %v2447
        %v2625 = vmax.f32 %v2624, %v2455
        %v2626 = vrot.slane %v2625, 4
        %v2627 = vmax.f32 %v2625, %v2626
        %v2628 = vrot.slane %v2627, 2
        %v2629 = vmax.f32 %v2627, %v2628
        %v2630 = vrot.slane %v2629, 1
        %v2631 = vmax.f32 %v2629, %v2630
        %v2632 = vmax.f32 %v2336, %v2344
        %v2633 = vmax.f32 %v2632, %v2352
        %v2634 = vmax.f32 %v2633, %v2360
        %v2635 = vmax.f32 %v2634, %v2368
        %v2636 = vmax.f32 %v2635, %v2376
        %v2637 = vmax.f32 %v2636, %v2384
        %v2638 = vmax.f32 %v2637, %v2392
        %v2639 = vmax.f32 %v2638, %v2400
        %v2640 = vmax.f32 %v2639, %v2408
        %v2641 = vmax.f32 %v2640, %v2416
        %v2642 = vmax.f32 %v2641, %v2424
        %v2643 = vmax.f32 %v2642, %v2432
        %v2644 = vmax.f32 %v2643, %v2440
        %v2645 = vmax.f32 %v2644, %v2448
        %v2646 = vmax.f32 %v2645, %v2456
        %v2647 = vrot.slane %v2646, 4
        %v2648 = vmax.f32 %v2646, %v2647
        %v2649 = vrot.slane %v2648, 2
        %v2650 = vmax.f32 %v2648, %v2649
        %v2651 = vrot.slane %v2650, 1
        %v2652 = vmax.f32 %v2650, %v2651
        %v2653 = vmax.f32 %v2337, %v2345
        %v2654 = vmax.f32 %v2653, %v2353
        %v2655 = vmax.f32 %v2654, %v2361
        %v2656 = vmax.f32 %v2655, %v2369
        %v2657 = vmax.f32 %v2656, %v2377
        %v2658 = vmax.f32 %v2657, %v2385
        %v2659 = vmax.f32 %v2658, %v2393
        %v2660 = vmax.f32 %v2659, %v2401
        %v2661 = vmax.f32 %v2660, %v2409
        %v2662 = vmax.f32 %v2661, %v2417
        %v2663 = vmax.f32 %v2662, %v2425
        %v2664 = vmax.f32 %v2663, %v2433
        %v2665 = vmax.f32 %v2664, %v2441
        %v2666 = vmax.f32 %v2665, %v2449
        %v2667 = vmax.f32 %v2666, %v2457
        %v2668 = vrot.slane %v2667, 4
        %v2669 = vmax.f32 %v2667, %v2668
        %v2670 = vrot.slane %v2669, 2
        %v2671 = vmax.f32 %v2669, %v2670
        %v2672 = vrot.slane %v2671, 1
        %v2673 = vmax.f32 %v2671, %v2672
        %v2674 = vmax.f32 %v2338, %v2346
        %v2675 = vmax.f32 %v2674, %v2354
        %v2676 = vmax.f32 %v2675, %v2362
        %v2677 = vmax.f32 %v2676, %v2370
        %v2678 = vmax.f32 %v2677, %v2378
        %v2679 = vmax.f32 %v2678, %v2386
        %v2680 = vmax.f32 %v2679, %v2394
        %v2681 = vmax.f32 %v2680, %v2402
        %v2682 = vmax.f32 %v2681, %v2410
        %v2683 = vmax.f32 %v2682, %v2418
        %v2684 = vmax.f32 %v2683, %v2426
        %v2685 = vmax.f32 %v2684, %v2434
        %v2686 = vmax.f32 %v2685, %v2442
        %v2687 = vmax.f32 %v2686, %v2450
        %v2688 = vmax.f32 %v2687, %v2458
        %v2689 = vrot.slane %v2688, 4
        %v2690 = vmax.f32 %v2688, %v2689
        %v2691 = vrot.slane %v2690, 2
        %v2692 = vmax.f32 %v2690, %v2691
        %v2693 = vrot.slane %v2692, 1
        %v2694 = vmax.f32 %v2692, %v2693
        %v2695 = vmax.f32 %v2339, %v2347
        %v2696 = vmax.f32 %v2695, %v2355
        %v2697 = vmax.f32 %v2696, %v2363
        %v2698 = vmax.f32 %v2697, %v2371
        %v2699 = vmax.f32 %v2698, %v2379
        %v2700 = vmax.f32 %v2699, %v2387
        %v2701 = vmax.f32 %v2700, %v2395
        %v2702 = vmax.f32 %v2701, %v2403
        %v2703 = vmax.f32 %v2702, %v2411
        %v2704 = vmax.f32 %v2703, %v2419
        %v2705 = vmax.f32 %v2704, %v2427
        %v2706 = vmax.f32 %v2705, %v2435
        %v2707 = vmax.f32 %v2706, %v2443
        %v2708 = vmax.f32 %v2707, %v2451
        %v2709 = vmax.f32 %v2708, %v2459
        %v2710 = vrot.slane %v2709, 4
        %v2711 = vmax.f32 %v2709, %v2710
        %v2712 = vrot.slane %v2711, 2
        %v2713 = vmax.f32 %v2711, %v2712
        %v2714 = vrot.slane %v2713, 1
        %v2715 = vmax.f32 %v2713, %v2714
        %v2716 = vmax.f32 %v2340, %v2348
        %v2717 = vmax.f32 %v2716, %v2356
        %v2718 = vmax.f32 %v2717, %v2364
        %v2719 = vmax.f32 %v2718, %v2372
        %v2720 = vmax.f32 %v2719, %v2380
        %v2721 = vmax.f32 %v2720, %v2388
        %v2722 = vmax.f32 %v2721, %v2396
        %v2723 = vmax.f32 %v2722, %v2404
        %v2724 = vmax.f32 %v2723, %v2412
        %v2725 = vmax.f32 %v2724, %v2420
        %v2726 = vmax.f32 %v2725, %v2428
        %v2727 = vmax.f32 %v2726, %v2436
        %v2728 = vmax.f32 %v2727, %v2444
        %v2729 = vmax.f32 %v2728, %v2452
        %v2730 = vmax.f32 %v2729, %v2460
        %v2731 = vrot.slane %v2730, 4
        %v2732 = vmax.f32 %v2730, %v2731
        %v2733 = vrot.slane %v2732, 2
        %v2734 = vmax.f32 %v2732, %v2733
        %v2735 = vrot.slane %v2734, 1
        %v2736 = vmax.f32 %v2734, %v2735
        %v2737 = vmax.f32 %v2341, %v2349
        %v2738 = vmax.f32 %v2737, %v2357
        %v2739 = vmax.f32 %v2738, %v2365
        %v2740 = vmax.f32 %v2739, %v2373
        %v2741 = vmax.f32 %v2740, %v2381
        %v2742 = vmax.f32 %v2741, %v2389
        %v2743 = vmax.f32 %v2742, %v2397
        %v2744 = vmax.f32 %v2743, %v2405
        %v2745 = vmax.f32 %v2744, %v2413
        %v2746 = vmax.f32 %v2745, %v2421
        %v2747 = vmax.f32 %v2746, %v2429
        %v2748 = vmax.f32 %v2747, %v2437
        %v2749 = vmax.f32 %v2748, %v2445
        %v2750 = vmax.f32 %v2749, %v2453
        %v2751 = vmax.f32 %v2750, %v2461
        %v2752 = vrot.slane %v2751, 4
        %v2753 = vmax.f32 %v2751, %v2752
        %v2754 = vrot.slane %v2753, 2
        %v2755 = vmax.f32 %v2753, %v2754
        %v2756 = vrot.slane %v2755, 1
        %v2757 = vmax.f32 %v2755, %v2756
        %v2758 = vmax.f32 %v2462, %v2470
        %v2759 = vmax.f32 %v2758, %v2478
        %v2760 = vmax.f32 %v2759, %v2486
        %v2761 = vmax.f32 %v2760, %v2494
        %v2762 = vmax.f32 %v2761, %v2502
        %v2763 = vmax.f32 %v2762, %v2510
        %v2764 = vmax.f32 %v2763, %v2518
        %v2765 = vmax.f32 %v2764, %v2526
        %v2766 = vmax.f32 %v2765, %v2534
        %v2767 = vmax.f32 %v2766, %v2542
        %v2768 = vmax.f32 %v2767, %v2550
        %v2769 = vmax.f32 %v2768, %v2558
        %v2770 = vmax.f32 %v2769, %v2566
        %v2771 = vmax.f32 %v2770, %v2574
        %v2772 = vmax.f32 %v2771, %v2582
        %v2773 = vrot.slane %v2772, 4
        %v2774 = vmax.f32 %v2772, %v2773
        %v2775 = vrot.slane %v2774, 2
        %v2776 = vmax.f32 %v2774, %v2775
        %v2777 = vrot.slane %v2776, 1
        %v2778 = vmax.f32 %v2776, %v2777
        %v2779 = vmax.f32 %v2463, %v2471
        %v2780 = vmax.f32 %v2779, %v2479
        %v2781 = vmax.f32 %v2780, %v2487
        %v2782 = vmax.f32 %v2781, %v2495
        %v2783 = vmax.f32 %v2782, %v2503
        %v2784 = vmax.f32 %v2783, %v2511
        %v2785 = vmax.f32 %v2784, %v2519
        %v2786 = vmax.f32 %v2785, %v2527
        %v2787 = vmax.f32 %v2786, %v2535
        %v2788 = vmax.f32 %v2787, %v2543
        %v2789 = vmax.f32 %v2788, %v2551
        %v2790 = vmax.f32 %v2789, %v2559
        %v2791 = vmax.f32 %v2790, %v2567
        %v2792 = vmax.f32 %v2791, %v2575
        %v2793 = vmax.f32 %v2792, %v2583
        %v2794 = vrot.slane %v2793, 4
        %v2795 = vmax.f32 %v2793, %v2794
        %v2796 = vrot.slane %v2795, 2
        %v2797 = vmax.f32 %v2795, %v2796
        %v2798 = vrot.slane %v2797, 1
        %v2799 = vmax.f32 %v2797, %v2798
        %v2800 = vmax.f32 %v2464, %v2472
        %v2801 = vmax.f32 %v2800, %v2480
        %v2802 = vmax.f32 %v2801, %v2488
        %v2803 = vmax.f32 %v2802, %v2496
        %v2804 = vmax.f32 %v2803, %v2504
        %v2805 = vmax.f32 %v2804, %v2512
        %v2806 = vmax.f32 %v2805, %v2520
        %v2807 = vmax.f32 %v2806, %v2528
        %v2808 = vmax.f32 %v2807, %v2536
        %v2809 = vmax.f32 %v2808, %v2544
        %v2810 = vmax.f32 %v2809, %v2552
        %v2811 = vmax.f32 %v2810, %v2560
        %v2812 = vmax.f32 %v2811, %v2568
        %v2813 = vmax.f32 %v2812, %v2576
        %v2814 = vmax.f32 %v2813, %v2584
        %v2815 = vrot.slane %v2814, 4
        %v2816 = vmax.f32 %v2814, %v2815
        %v2817 = vrot.slane %v2816, 2
        %v2818 = vmax.f32 %v2816, %v2817
        %v2819 = vrot.slane %v2818, 1
        %v2820 = vmax.f32 %v2818, %v2819
        %v2821 = vmax.f32 %v2465, %v2473
        %v2822 = vmax.f32 %v2821, %v2481
        %v2823 = vmax.f32 %v2822, %v2489
        %v2824 = vmax.f32 %v2823, %v2497
        %v2825 = vmax.f32 %v2824, %v2505
        %v2826 = vmax.f32 %v2825, %v2513
        %v2827 = vmax.f32 %v2826, %v2521
        %v2828 = vmax.f32 %v2827, %v2529
        %v2829 = vmax.f32 %v2828, %v2537
        %v2830 = vmax.f32 %v2829, %v2545
        %v2831 = vmax.f32 %v2830, %v2553
        %v2832 = vmax.f32 %v2831, %v2561
        %v2833 = vmax.f32 %v2832, %v2569
        %v2834 = vmax.f32 %v2833, %v2577
        %v2835 = vmax.f32 %v2834, %v2585
        %v2836 = vrot.slane %v2835, 4
        %v2837 = vmax.f32 %v2835, %v2836
        %v2838 = vrot.slane %v2837, 2
        %v2839 = vmax.f32 %v2837, %v2838
        %v2840 = vrot.slane %v2839, 1
        %v2841 = vmax.f32 %v2839, %v2840
        %v2842 = vmax.f32 %v2466, %v2474
        %v2843 = vmax.f32 %v2842, %v2482
        %v2844 = vmax.f32 %v2843, %v2490
        %v2845 = vmax.f32 %v2844, %v2498
        %v2846 = vmax.f32 %v2845, %v2506
        %v2847 = vmax.f32 %v2846, %v2514
        %v2848 = vmax.f32 %v2847, %v2522
        %v2849 = vmax.f32 %v2848, %v2530
        %v2850 = vmax.f32 %v2849, %v2538
        %v2851 = vmax.f32 %v2850, %v2546
        %v2852 = vmax.f32 %v2851, %v2554
        %v2853 = vmax.f32 %v2852, %v2562
        %v2854 = vmax.f32 %v2853, %v2570
        %v2855 = vmax.f32 %v2854, %v2578
        %v2856 = vmax.f32 %v2855, %v2586
        %v2857 = vrot.slane %v2856, 4
        %v2858 = vmax.f32 %v2856, %v2857
        %v2859 = vrot.slane %v2858, 2
        %v2860 = vmax.f32 %v2858, %v2859
        %v2861 = vrot.slane %v2860, 1
        %v2862 = vmax.f32 %v2860, %v2861
        %v2863 = vmax.f32 %v2467, %v2475
        %v2864 = vmax.f32 %v2863, %v2483
        %v2865 = vmax.f32 %v2864, %v2491
        %v2866 = vmax.f32 %v2865, %v2499
        %v2867 = vmax.f32 %v2866, %v2507
        %v2868 = vmax.f32 %v2867, %v2515
        %v2869 = vmax.f32 %v2868, %v2523
        %v2870 = vmax.f32 %v2869, %v2531
        %v2871 = vmax.f32 %v2870, %v2539
        %v2872 = vmax.f32 %v2871, %v2547
        %v2873 = vmax.f32 %v2872, %v2555
        %v2874 = vmax.f32 %v2873, %v2563
        %v2875 = vmax.f32 %v2874, %v2571
        %v2876 = vmax.f32 %v2875, %v2579
        %v2877 = vmax.f32 %v2876, %v2587
        %v2878 = vrot.slane %v2877, 4
        %v2879 = vmax.f32 %v2877, %v2878
        %v2880 = vrot.slane %v2879, 2
        %v2881 = vmax.f32 %v2879, %v2880
        %v2882 = vrot.slane %v2881, 1
        %v2883 = vmax.f32 %v2881, %v2882
        %v2884 = vmax.f32 %v2468, %v2476
        %v2885 = vmax.f32 %v2884, %v2484
        %v2886 = vmax.f32 %v2885, %v2492
        %v2887 = vmax.f32 %v2886, %v2500
        %v2888 = vmax.f32 %v2887, %v2508
        %v2889 = vmax.f32 %v2888, %v2516
        %v2890 = vmax.f32 %v2889, %v2524
        %v2891 = vmax.f32 %v2890, %v2532
        %v2892 = vmax.f32 %v2891, %v2540
        %v2893 = vmax.f32 %v2892, %v2548
        %v2894 = vmax.f32 %v2893, %v2556
        %v2895 = vmax.f32 %v2894, %v2564
        %v2896 = vmax.f32 %v2895, %v2572
        %v2897 = vmax.f32 %v2896, %v2580
        %v2898 = vmax.f32 %v2897, %v2588
        %v2899 = vrot.slane %v2898, 4
        %v2900 = vmax.f32 %v2898, %v2899
        %v2901 = vrot.slane %v2900, 2
        %v2902 = vmax.f32 %v2900, %v2901
        %v2903 = vrot.slane %v2902, 1
        %v2904 = vmax.f32 %v2902, %v2903
        %v2905 = vmax.f32 %v2469, %v2477
        %v2906 = vmax.f32 %v2905, %v2485
        %v2907 = vmax.f32 %v2906, %v2493
        %v2908 = vmax.f32 %v2907, %v2501
        %v2909 = vmax.f32 %v2908, %v2509
        %v2910 = vmax.f32 %v2909, %v2517
        %v2911 = vmax.f32 %v2910, %v2525
        %v2912 = vmax.f32 %v2911, %v2533
        %v2913 = vmax.f32 %v2912, %v2541
        %v2914 = vmax.f32 %v2913, %v2549
        %v2915 = vmax.f32 %v2914, %v2557
        %v2916 = vmax.f32 %v2915, %v2565
        %v2917 = vmax.f32 %v2916, %v2573
        %v2918 = vmax.f32 %v2917, %v2581
        %v2919 = vmax.f32 %v2918, %v2589
        %v2920 = vrot.slane %v2919, 4
        %v2921 = vmax.f32 %v2919, %v2920
        %v2922 = vrot.slane %v2921, 2
        %v2923 = vmax.f32 %v2921, %v2922
        %v2924 = vrot.slane %v2923, 1
        %v2925 = vmax.f32 %v2923, %v2924
        %v2942 = vrot.slane %v2631, 6
        %v2943 = vrot.slane %v2652, 4
        %v2944 = vrot.slane %v2673, 2
        %v2945 = vrot.slane %v2715, 6
        %v2946 = vrot.slane %v2736, 4
        %v2947 = vrot.slane %v2757, 2
        %v2948 = vrot.slane %v2799, 6
        %v2949 = vrot.slane %v2820, 4
        %v2950 = vrot.slane %v2841, 2
        %v2951 = vrot.slane %v2883, 6
        %v2952 = vrot.slane %v2904, 4
        %v2953 = vrot.slane %v2925, 2
        %vm2954 = vcmask 1041408
        %v2955 = vsel %vm2954, %v2610, %v2942
        %vm2956 = vcmask 1045508
        %v2957 = vsel %vm2956, %v2943, %v2944
        %vm2958 = vcmask 1043456
        %v2959 = vsel %vm2958, %v2955, %v2957
        %v2960 = vsel %vm2954, %v2694, %v2945
        %v2961 = vsel %vm2956, %v2946, %v2947
        %v2962 = vsel %vm2958, %v2960, %v2961
        %v2963 = vsel %vm2954, %v2778, %v2948
        %v2964 = vsel %vm2956, %v2949, %v2950
        %v2965 = vsel %vm2958, %v2963, %v2964
        %v2966 = vsel %vm2954, %v2862, %v2951
        %v2967 = vsel %vm2956, %v2952, %v2953
        %v2968 = vsel %vm2958, %v2966, %v2967
        %vm2969 = vcmask 1044484
        %v2970 = vsel %vm2969, %v2959, %v2959
        %vm2971 = vcmask 1046534
        %v2972 = vsel %vm2971, %v2959, %v2970
        %v2973 = vrot.slane %v2965, 7
        %vm2974 = vcmask 1041409
        %v2975 = vsel %vm2974, %v2973, %v2972
        %vm2976 = vcmask 1043459
        %v2977 = vsel %vm2976, %v2973, %v2975
        %vm2978 = vcmask 1045509
        %v2979 = vsel %vm2978, %v2973, %v2977
        %vm2980 = vcmask 1047559
        %v2981 = vsel %vm2980, %v2973, %v2979
        %v2982 = vsel %vm2969, %v2962, %v2962
        %v2983 = vsel %vm2971, %v2962, %v2982
        %v2984 = vrot.slane %v2968, 7
        %v2985 = vsel %vm2974, %v2984, %v2983
        %v2986 = vsel %vm2976, %v2984, %v2985
        %v2987 = vsel %vm2978, %v2984, %v2986
        %v2988 = vsel %vm2980, %v2984, %v2987
        %2991 = vst [vmem:[%s300] sm:$0xff] %v2981
        %2992 = vst [vmem:[%s300 + $0x8] sm:$0xff] %v2988
        %p2993 = scmp.lt.s32.totalorder %s19, 1
        %s2994 = scalar_select %p2993, %s19, 1
        %s2995 = smul.addr %s2994, 8
        %s2996 = smul.addr %s2995, 2
        %s2997 = scalar_lea.vmem %s7, %s2996
        // Predicated region
        $region53: #{qstn_forward.2} parent=47 // pred_check
          %p2998 = pneg %p189
        $region54: #{qstn_forward.2} parent=47 // pred_check_branch
          %3000 = sbr.rel (%p2998) target = $region56
        $region55: #{qstn_forward.2} parent=47 // pred_region
          _
        $region56: #{qstn_forward.2} parent=47 // pred_fallthru
          _
      $region48: #{qstn_forward.2} parent=5 // pred_fallthru
        _
      %p3001 = scmp.le.s32.totalorder 2, %s14
      // Predicated region
      $region57: #{qstn_forward.2} parent=5 // pred_check
        %p3002 = pneg %p3001
      $region58: #{qstn_forward.2} parent=5 // pred_check_branch
        %3004 = sbr.rel (%p3002) target = $region60
      $region59: #{qstn_forward.2} parent=5 // pred_region
        %s3005 = ssub.s32 %s14, 2
        // Predicated region
        $region61: #{qstn_forward.2} parent=59 // pred_check
          %p3006 = pneg %p195
        $region62: #{qstn_forward.2} parent=59 // pred_check_branch
          %3008 = sbr.rel (%p3006) target = $region64
        $region63: #{qstn_forward.2} parent=59 // pred_region
          %p3009 = scmp.lt.s32.totalorder %s20, 1
          %s3010 = scalar_select %p3009, %s20, 1
          %s3011 = smul.addr %s3010, 8
          %s3012 = smul.addr %s3011, 2
          %s3013 = scalar_lea.vmem %s7, %s3012
        $region64: #{qstn_forward.2} parent=59 // pred_fallthru
          _
      $region60: #{qstn_forward.2} parent=5 // pred_fallthru
        _
    $region6: #{qstn_forward.2} parent=1 // loop_footer
      %s18 = sadd.s32 1, %s14
    $region7: #{qstn_forward.2} parent=1 // loop_footer_branch
      %13 = sbr.rel target = $region3
    $region8: #{qstn_forward.2} parent=1 // loop_exit
      _
    %3014 = vsyncpa [#allocation3], 1
    %s3015 = scalar_lea.sflag [#allocation3], 1
    %3016 = vsyncpa %s3015, 1

// kernel: qstn_forward.3
$region0: #{qstn_forward.3}
  #allocation0 [shape = 'u32[]', space=smem, size = 0x4, offset = 0x4, fixed_abs, tag = 'smem constant byte address 0x4 - core index']
  #allocation1 [shape = 'u32[72,128]{1,0:T(1,128)}', space=vmem, size = 0x9000, scoped, tag = 'internal scratch']
  %s0 = inlined_call_operand.vmem [shape: f32[4,1024], index: 0, kind: input, shape index: {}]
  %s1 = inlined_call_operand.hbm [shape: bf16[1024,512], index: 1, kind: input, shape index: {}]
  %s2 = inlined_call_operand.vmem [shape: f32[1,512], index: 2, kind: input, shape index: {}]
  %s3 = inlined_call_operand.vmem [shape: bf16[512,256], index: 3, kind: input, shape index: {}]
  %s4 = inlined_call_operand.vmem [shape: f32[1,256], index: 4, kind: input, shape index: {}]
  %s5 = inlined_call_operand.vmem [shape: f32[256,128], index: 5, kind: input, shape index: {}]
  %s6 = inlined_call_operand.vmem [shape: f32[1,128], index: 6, kind: input, shape index: {}]
  %s7 = inlined_call_operand.vmem [shape: f32[4,128], index: 7, kind: output, shape index: {}]
  %s8 = sld [smem:[#allocation0]]
  $region42: #{qstn_forward.3} parent=0
    _
  %s10 = ssub.s32 1, %s8
  %s11 = scalar_select 0, %s10, %s8
  $region1: #{qstn_forward.3} parent=0
    #allocation2 [shape = 'u8[1048576]{0}', space=vmem, size = 0x100000, scoped, tag = 'input window, operand 1, single buffered']
    #allocation3 [shape = 's32[1]{0}', space=sflag, size = 0x4, scoped, tag = 'scoped memory for qstn_forward.3']
    %12 = vsyncpa [#allocation3], 0
    // Predicated region
    $region2: #{qstn_forward.3} parent=1 // pred_check
      _
    $region3: #{qstn_forward.3} parent=1 // pred_check_branch
      %14 = sbr.rel (0) target = $region5
    $region4: #{qstn_forward.3} parent=1 // pred_region
      _
    $region5: #{qstn_forward.3} parent=1 // pred_fallthru
      _
    // Predicated region
    $region6: #{qstn_forward.3} parent=1 // pred_check
      _
    $region7: #{qstn_forward.3} parent=1 // pred_check_branch
      %16 = sbr.rel (0) target = $region9
    $region8: #{qstn_forward.3} parent=1 // pred_region
      %18 = vsyncadd [#allocation3], 0
      %s19 = sshll.u32 %s1, 4
      %s20 = int_to_ptr.hbm [resolvable:$true] %s19
      %s21 = sshll.u32 [#allocation2], 4
      %s22 = int_to_ptr.vmem [resolvable:$true] %s21
      %27 = dma.hbm_to_vmem [thread:$0]  %s20, 32768, %s22, [#allocation3], 256, 256, 16
    $region9: #{qstn_forward.3} parent=1 // pred_fallthru
      _
    // Predicated region
    $region10: #{qstn_forward.3} parent=1 // pred_check
      _
    $region11: #{qstn_forward.3} parent=1 // pred_check_branch
      %29 = sbr.rel (0) target = $region13
    $region12: #{qstn_forward.3} parent=1 // pred_region
      _
    $region13: #{qstn_forward.3} parent=1 // pred_fallthru
      _
    // Predicated region
    $region14: #{qstn_forward.3} parent=1 // pred_check
      _
    $region15: #{qstn_forward.3} parent=1 // pred_check_branch
      %31 = sbr.rel (0) target = $region17
    $region16: #{qstn_forward.3} parent=1 // pred_region
      _
    $region17: #{qstn_forward.3} parent=1 // pred_fallthru
      _
    // Predicated region
    $region18: #{qstn_forward.3} parent=1 // pred_check
      _
    $region19: #{qstn_forward.3} parent=1 // pred_check_branch
      %33 = sbr.rel (0) target = $region21
    $region20: #{qstn_forward.3} parent=1 // pred_region
      _
    $region21: #{qstn_forward.3} parent=1 // pred_fallthru
      _
    // Predicated region
    $region22: #{qstn_forward.3} parent=1 // pred_check
      _
    $region23: #{qstn_forward.3} parent=1 // pred_check_branch
      %35 = sbr.rel (0) target = $region25
    $region24: #{qstn_forward.3} parent=1 // pred_region
      _
    $region25: #{qstn_forward.3} parent=1 // pred_fallthru
      _
    // Predicated region
    $region26: #{qstn_forward.3} parent=1 // pred_check
      _
    $region27: #{qstn_forward.3} parent=1 // pred_check_branch
      %37 = sbr.rel (0) target = $region29
    $region28: #{qstn_forward.3} parent=1 // pred_region
      _
    $region29: #{qstn_forward.3} parent=1 // pred_fallthru
      _
    // Predicated region
    $region30: #{qstn_forward.3} parent=1 // pred_check
      _
    $region31: #{qstn_forward.3} parent=1 // pred_check_branch
      %39 = sbr.rel (0) target = $region33
    $region32: #{qstn_forward.3} parent=1 // pred_region
      %41 = dma.done [#allocation3], 32768
    $region33: #{qstn_forward.3} parent=1 // pred_fallthru
      _
    %v42 = vld [vmem:[%s0] sm:$0xff]
    %v43 = vld [vmem:[%s0 + $0x8] sm:$0xff]
    %v44 = vld [vmem:[%s0 + $0x10] sm:$0xff]
    %v45 = vld [vmem:[%s0 + $0x18] sm:$0xff]
    %50 = vst [vmem:[#allocation1] ss:$2 sm:$0xff] %v42
    %s51 = scalar_lea.vmem [#allocation1], 16
    %52 = vst [vmem:[%s51] ss:$2 sm:$0xff] %v43
    %s53 = scalar_lea.vmem [#allocation1], 32
    %54 = vst [vmem:[%s53] ss:$2 sm:$0xff] %v44
    %s55 = scalar_lea.vmem [#allocation1], 48
    %56 = vst [vmem:[%s55] ss:$2 sm:$0xff] %v45
    %v57 = vld.sshfl [vmem:[#allocation1] sm:$0xff pattern:$0x75316420]
    %v58 = vld.sshfl [vmem:[#allocation1 + $0x8] sm:$0xff pattern:$0x75316420]
    %v59 = vld.sshfl [vmem:[#allocation1 + $0x10] sm:$0xff pattern:$0x75316420]
    %v60 = vld.sshfl [vmem:[#allocation1 + $0x18] sm:$0xff pattern:$0x75316420]
    %v61 = vld.sshfl [vmem:[#allocation1 + $0x20] sm:$0xff pattern:$0x75316420]
    %v62 = vld.sshfl [vmem:[#allocation1 + $0x28] sm:$0xff pattern:$0x75316420]
    %v63 = vld.sshfl [vmem:[#allocation1 + $0x30] sm:$0xff pattern:$0x75316420]
    %v64 = vld.sshfl [vmem:[#allocation1 + $0x38] sm:$0xff pattern:$0x75316420]
    %v73 = vpack.c.bf16 %v57, %v57
    %v74 = vpack.c.bf16 %v58, %v58
    %v75 = vpack.c.bf16 %v59, %v59
    %v76 = vpack.c.bf16 %v60, %v60
    %v77 = vpack.c.bf16 %v61, %v61
    %v78 = vpack.c.bf16 %v62, %v62
    %v79 = vpack.c.bf16 %v63, %v63
    %v80 = vpack.c.bf16 %v64, %v64
    %v81 = vld [vmem:[#allocation2] sm:$0xff]
    %v82 = vld [vmem:[#allocation2 + $0x8] sm:$0xff]
    %v83 = vld [vmem:[#allocation2 + $0x10] sm:$0xff]
    %v84 = vld [vmem:[#allocation2 + $0x18] sm:$0xff]
    %v85 = vld [vmem:[#allocation2 + $0x20] sm:$0xff]
    %v86 = vld [vmem:[#allocation2 + $0x28] sm:$0xff]
    %v87 = vld [vmem:[#allocation2 + $0x30] sm:$0xff]
    %v88 = vld [vmem:[#allocation2 + $0x38] sm:$0xff]
    %v89 = vld [vmem:[#allocation2 + $0x40] sm:$0xff]
    %v90 = vld [vmem:[#allocation2 + $0x48] sm:$0xff]
    %v91 = vld [vmem:[#allocation2 + $0x50] sm:$0xff]
    %v92 = vld [vmem:[#allocation2 + $0x58] sm:$0xff]
    %v93 = vld [vmem:[#allocation2 + $0x60] sm:$0xff]
    %v94 = vld [vmem:[#allocation2 + $0x68] sm:$0xff]
    %v95 = vld [vmem:[#allocation2 + $0x70] sm:$0xff]
    %v96 = vld [vmem:[#allocation2 + $0x78] sm:$0xff]
    %v97 = vld [vmem:[#allocation2 + $0x80] sm:$0xff]
    %v98 = vld [vmem:[#allocation2 + $0x88] sm:$0xff]
    %v99 = vld [vmem:[#allocation2 + $0x90] sm:$0xff]
    %v100 = vld [vmem:[#allocation2 + $0x98] sm:$0xff]
    %v101 = vld [vmem:[#allocation2 + $0xa0] sm:$0xff]
    %v102 = vld [vmem:[#allocation2 + $0xa8] sm:$0xff]
    %v103 = vld [vmem:[#allocation2 + $0xb0] sm:$0xff]
    %v104 = vld [vmem:[#allocation2 + $0xb8] sm:$0xff]
    %v105 = vld [vmem:[#allocation2 + $0xc0] sm:$0xff]
    %v106 = vld [vmem:[#allocation2 + $0xc8] sm:$0xff]
    %v107 = vld [vmem:[#allocation2 + $0xd0] sm:$0xff]
    %v108 = vld [vmem:[#allocation2 + $0xd8] sm:$0xff]
    %v109 = vld [vmem:[#allocation2 + $0xe0] sm:$0xff]
    %v110 = vld [vmem:[#allocation2 + $0xe8] sm:$0xff]
    %v111 = vld [vmem:[#allocation2 + $0xf0] sm:$0xff]
    %v112 = vld [vmem:[#allocation2 + $0xf8] sm:$0xff]
    %v113 = vld [vmem:[#allocation2 + $0x100] sm:$0xff]
    %v114 = vld [vmem:[#allocation2 + $0x108] sm:$0xff]
    %v115 = vld [vmem:[#allocation2 + $0x110] sm:$0xff]
    %v116 = vld [vmem:[#allocation2 + $0x118] sm:$0xff]
    %v117 = vld [vmem:[#allocation2 + $0x120] sm:$0xff]
    %v118 = vld [vmem:[#allocation2 + $0x128] sm:$0xff]
    %v119 = vld [vmem:[#allocation2 + $0x130] sm:$0xff]
    %v120 = vld [vmem:[#allocation2 + $0x138] sm:$0xff]
    %v121 = vld [vmem:[#allocation2 + $0x140] sm:$0xff]
    %v122 = vld [vmem:[#allocation2 + $0x148] sm:$0xff]
    %v123 = vld [vmem:[#allocation2 + $0x150] sm:$0xff]
    %v124 = vld [vmem:[#allocation2 + $0x158] sm:$0xff]
    %v125 = vld [vmem:[#allocation2 + $0x160] sm:$0xff]
    %v126 = vld [vmem:[#allocation2 + $0x168] sm:$0xff]
    %v127 = vld [vmem:[#allocation2 + $0x170] sm:$0xff]
    %v128 = vld [vmem:[#allocation2 + $0x178] sm:$0xff]
    %v129 = vld [vmem:[#allocation2 + $0x180] sm:$0xff]
    %v130 = vld [vmem:[#allocation2 + $0x188] sm:$0xff]
    %v131 = vld [vmem:[#allocation2 + $0x190] sm:$0xff]
    %v132 = vld [vmem:[#allocation2 + $0x198] sm:$0xff]
    %v133 = vld [vmem:[#allocation2 + $0x1a0] sm:$0xff]
    %v134 = vld [vmem:[#allocation2 + $0x1a8] sm:$0xff]
    %v135 = vld [vmem:[#allocation2 + $0x1b0] sm:$0xff]
    %v136 = vld [vmem:[#allocation2 + $0x1b8] sm:$0xff]
    %v137 = vld [vmem:[#allocation2 + $0x1c0] sm:$0xff]
    %v138 = vld [vmem:[#allocation2 + $0x1c8] sm:$0xff]
    %v139 = vld [vmem:[#allocation2 + $0x1d0] sm:$0xff]
    %v140 = vld [vmem:[#allocation2 + $0x1d8] sm:$0xff]
    %v141 = vld [vmem:[#allocation2 + $0x1e0] sm:$0xff]
    %v142 = vld [vmem:[#allocation2 + $0x1e8] sm:$0xff]
    %v143 = vld [vmem:[#allocation2 + $0x1f0] sm:$0xff]
    %v144 = vld [vmem:[#allocation2 + $0x1f8] sm:$0xff]
    %v145 = vld [vmem:[#allocation2 + $0x200] sm:$0xff]
    %v146 = vld [vmem:[#allocation2 + $0x208] sm:$0xff]
    %v147 = vld [vmem:[#allocation2 + $0x210] sm:$0xff]
    %v148 = vld [vmem:[#allocation2 + $0x218] sm:$0xff]
    %v149 = vld [vmem:[#allocation2 + $0x220] sm:$0xff]
    %v150 = vld [vmem:[#allocation2 + $0x228] sm:$0xff]
    %v151 = vld [vmem:[#allocation2 + $0x230] sm:$0xff]
    %v152 = vld [vmem:[#allocation2 + $0x238] sm:$0xff]
    %v153 = vld [vmem:[#allocation2 + $0x240] sm:$0xff]
    %v154 = vld [vmem:[#allocation2 + $0x248] sm:$0xff]
    %v155 = vld [vmem:[#allocation2 + $0x250] sm:$0xff]
    %v156 = vld [vmem:[#allocation2 + $0x258] sm:$0xff]
    %v157 = vld [vmem:[#allocation2 + $0x260] sm:$0xff]
    %v158 = vld [vmem:[#allocation2 + $0x268] sm:$0xff]
    %v159 = vld [vmem:[#allocation2 + $0x270] sm:$0xff]
    %v160 = vld [vmem:[#allocation2 + $0x278] sm:$0xff]
    %v161 = vld [vmem:[#allocation2 + $0x280] sm:$0xff]
    %v162 = vld [vmem:[#allocation2 + $0x288] sm:$0xff]
    %v163 = vld [vmem:[#allocation2 + $0x290] sm:$0xff]
    %v164 = vld [vmem:[#allocation2 + $0x298] sm:$0xff]
    %v165 = vld [vmem:[#allocation2 + $0x2a0] sm:$0xff]
    %v166 = vld [vmem:[#allocation2 + $0x2a8] sm:$0xff]
    %v167 = vld [vmem:[#allocation2 + $0x2b0] sm:$0xff]
    %v168 = vld [vmem:[#allocation2 + $0x2b8] sm:$0xff]
    %v169 = vld [vmem:[#allocation2 + $0x2c0] sm:$0xff]
    %v170 = vld [vmem:[#allocation2 + $0x2c8] sm:$0xff]
    %v171 = vld [vmem:[#allocation2 + $0x2d0] sm:$0xff]
    %v172 = vld [vmem:[#allocation2 + $0x2d8] sm:$0xff]
    %v173 = vld [vmem:[#allocation2 + $0x2e0] sm:$0xff]
    %v174 = vld [vmem:[#allocation2 + $0x2e8] sm:$0xff]
    %v175 = vld [vmem:[#allocation2 + $0x2f0] sm:$0xff]
    %v176 = vld [vmem:[#allocation2 + $0x2f8] sm:$0xff]
    %v177 = vld [vmem:[#allocation2 + $0x300] sm:$0xff]
    %v178 = vld [vmem:[#allocation2 + $0x308] sm:$0xff]
    %v179 = vld [vmem:[#allocation2 + $0x310] sm:$0xff]
    %v180 = vld [vmem:[#allocation2 + $0x318] sm:$0xff]
    %v181 = vld [vmem:[#allocation2 + $0x320] sm:$0xff]
    %v182 = vld [vmem:[#allocation2 + $0x328] sm:$0xff]
    %v183 = vld [vmem:[#allocation2 + $0x330] sm:$0xff]
    %v184 = vld [vmem:[#allocation2 + $0x338] sm:$0xff]
    %v185 = vld [vmem:[#allocation2 + $0x340] sm:$0xff]
    %v186 = vld [vmem:[#allocation2 + $0x348] sm:$0xff]
    %v187 = vld [vmem:[#allocation2 + $0x350] sm:$0xff]
    %v188 = vld [vmem:[#allocation2 + $0x358] sm:$0xff]
    %v189 = vld [vmem:[#allocation2 + $0x360] sm:$0xff]
    %v190 = vld [vmem:[#allocation2 + $0x368] sm:$0xff]
    %v191 = vld [vmem:[#allocation2 + $0x370] sm:$0xff]
    %v192 = vld [vmem:[#allocation2 + $0x378] sm:$0xff]
    %v193 = vld [vmem:[#allocation2 + $0x380] sm:$0xff]
    %v194 = vld [vmem:[#allocation2 + $0x388] sm:$0xff]
    %v195 = vld [vmem:[#allocation2 + $0x390] sm:$0xff]
    %v196 = vld [vmem:[#allocation2 + $0x398] sm:$0xff]
    %v197 = vld [vmem:[#allocation2 + $0x3a0] sm:$0xff]
    %v198 = vld [vmem:[#allocation2 + $0x3a8] sm:$0xff]
    %v199 = vld [vmem:[#allocation2 + $0x3b0] sm:$0xff]
    %v200 = vld [vmem:[#allocation2 + $0x3b8] sm:$0xff]
    %v201 = vld [vmem:[#allocation2 + $0x3c0] sm:$0xff]
    %v202 = vld [vmem:[#allocation2 + $0x3c8] sm:$0xff]
    %v203 = vld [vmem:[#allocation2 + $0x3d0] sm:$0xff]
    %v204 = vld [vmem:[#allocation2 + $0x3d8] sm:$0xff]
    %v205 = vld [vmem:[#allocation2 + $0x3e0] sm:$0xff]
    %v206 = vld [vmem:[#allocation2 + $0x3e8] sm:$0xff]
    %v207 = vld [vmem:[#allocation2 + $0x3f0] sm:$0xff]
    %v208 = vld [vmem:[#allocation2 + $0x3f8] sm:$0xff]
    %v209 = vld [vmem:[#allocation2 + $0x400] sm:$0xff]
    %v210 = vld [vmem:[#allocation2 + $0x408] sm:$0xff]
    %v211 = vld [vmem:[#allocation2 + $0x410] sm:$0xff]
    %v212 = vld [vmem:[#allocation2 + $0x418] sm:$0xff]
    %v213 = vld [vmem:[#allocation2 + $0x420] sm:$0xff]
    %v214 = vld [vmem:[#allocation2 + $0x428] sm:$0xff]
    %v215 = vld [vmem:[#allocation2 + $0x430] sm:$0xff]
    %v216 = vld [vmem:[#allocation2 + $0x438] sm:$0xff]
    %v217 = vld [vmem:[#allocation2 + $0x440] sm:$0xff]
    %v218 = vld [vmem:[#allocation2 + $0x448] sm:$0xff]
    %v219 = vld [vmem:[#allocation2 + $0x450] sm:$0xff]
    %v220 = vld [vmem:[#allocation2 + $0x458] sm:$0xff]
    %v221 = vld [vmem:[#allocation2 + $0x460] sm:$0xff]
    %v222 = vld [vmem:[#allocation2 + $0x468] sm:$0xff]
    %v223 = vld [vmem:[#allocation2 + $0x470] sm:$0xff]
    %v224 = vld [vmem:[#allocation2 + $0x478] sm:$0xff]
    %v225 = vld [vmem:[#allocation2 + $0x480] sm:$0xff]
    %v226 = vld [vmem:[#allocation2 + $0x488] sm:$0xff]
    %v227 = vld [vmem:[#allocation2 + $0x490] sm:$0xff]
    %v228 = vld [vmem:[#allocation2 + $0x498] sm:$0xff]
    %v229 = vld [vmem:[#allocation2 + $0x4a0] sm:$0xff]
    %v230 = vld [vmem:[#allocation2 + $0x4a8] sm:$0xff]
    %v231 = vld [vmem:[#allocation2 + $0x4b0] sm:$0xff]
    %v232 = vld [vmem:[#allocation2 + $0x4b8] sm:$0xff]
    %v233 = vld [vmem:[#allocation2 + $0x4c0] sm:$0xff]
    %v234 = vld [vmem:[#allocation2 + $0x4c8] sm:$0xff]
    %v235 = vld [vmem:[#allocation2 + $0x4d0] sm:$0xff]
    %v236 = vld [vmem:[#allocation2 + $0x4d8] sm:$0xff]
    %v237 = vld [vmem:[#allocation2 + $0x4e0] sm:$0xff]
    %v238 = vld [vmem:[#allocation2 + $0x4e8] sm:$0xff]
    %v239 = vld [vmem:[#allocation2 + $0x4f0] sm:$0xff]
    %v240 = vld [vmem:[#allocation2 + $0x4f8] sm:$0xff]
    %v241 = vld [vmem:[#allocation2 + $0x500] sm:$0xff]
    %v242 = vld [vmem:[#allocation2 + $0x508] sm:$0xff]
    %v243 = vld [vmem:[#allocation2 + $0x510] sm:$0xff]
    %v244 = vld [vmem:[#allocation2 + $0x518] sm:$0xff]
    %v245 = vld [vmem:[#allocation2 + $0x520] sm:$0xff]
    %v246 = vld [vmem:[#allocation2 + $0x528] sm:$0xff]
    %v247 = vld [vmem:[#allocation2 + $0x530] sm:$0xff]
    %v248 = vld [vmem:[#allocation2 + $0x538] sm:$0xff]
    %v249 = vld [vmem:[#allocation2 + $0x540] sm:$0xff]
    %v250 = vld [vmem:[#allocation2 + $0x548] sm:$0xff]
    %v251 = vld [vmem:[#allocation2 + $0x550] sm:$0xff]
    %v252 = vld [vmem:[#allocation2 + $0x558] sm:$0xff]
    %v253 = vld [vmem:[#allocation2 + $0x560] sm:$0xff]
    %v254 = vld [vmem:[#allocation2 + $0x568] sm:$0xff]
    %v255 = vld [vmem:[#allocation2 + $0x570] sm:$0xff]
    %v256 = vld [vmem:[#allocation2 + $0x578] sm:$0xff]
    %v257 = vld [vmem:[#allocation2 + $0x580] sm:$0xff]
    %v258 = vld [vmem:[#allocation2 + $0x588] sm:$0xff]
    %v259 = vld [vmem:[#allocation2 + $0x590] sm:$0xff]
    %v260 = vld [vmem:[#allocation2 + $0x598] sm:$0xff]
    %v261 = vld [vmem:[#allocation2 + $0x5a0] sm:$0xff]
    %v262 = vld [vmem:[#allocation2 + $0x5a8] sm:$0xff]
    %v263 = vld [vmem:[#allocation2 + $0x5b0] sm:$0xff]
    %v264 = vld [vmem:[#allocation2 + $0x5b8] sm:$0xff]
    %v265 = vld [vmem:[#allocation2 + $0x5c0] sm:$0xff]
    %v266 = vld [vmem:[#allocation2 + $0x5c8] sm:$0xff]
    %v267 = vld [vmem:[#allocation2 + $0x5d0] sm:$0xff]
    %v268 = vld [vmem:[#allocation2 + $0x5d8] sm:$0xff]
    %v269 = vld [vmem:[#allocation2 + $0x5e0] sm:$0xff]
    %v270 = vld [vmem:[#allocation2 + $0x5e8] sm:$0xff]
    %v271 = vld [vmem:[#allocation2 + $0x5f0] sm:$0xff]
    %v272 = vld [vmem:[#allocation2 + $0x5f8] sm:$0xff]
    %v273 = vld [vmem:[#allocation2 + $0x600] sm:$0xff]
    %v274 = vld [vmem:[#allocation2 + $0x608] sm:$0xff]
    %v275 = vld [vmem:[#allocation2 + $0x610] sm:$0xff]
    %v276 = vld [vmem:[#allocation2 + $0x618] sm:$0xff]
    %v277 = vld [vmem:[#allocation2 + $0x620] sm:$0xff]
    %v278 = vld [vmem:[#allocation2 + $0x628] sm:$0xff]
    %v279 = vld [vmem:[#allocation2 + $0x630] sm:$0xff]
    %v280 = vld [vmem:[#allocation2 + $0x638] sm:$0xff]
    %v281 = vld [vmem:[#allocation2 + $0x640] sm:$0xff]
    %v282 = vld [vmem:[#allocation2 + $0x648] sm:$0xff]
    %v283 = vld [vmem:[#allocation2 + $0x650] sm:$0xff]
    %v284 = vld [vmem:[#allocation2 + $0x658] sm:$0xff]
    %v285 = vld [vmem:[#allocation2 + $0x660] sm:$0xff]
    %v286 = vld [vmem:[#allocation2 + $0x668] sm:$0xff]
    %v287 = vld [vmem:[#allocation2 + $0x670] sm:$0xff]
    %v288 = vld [vmem:[#allocation2 + $0x678] sm:$0xff]
    %v289 = vld [vmem:[#allocation2 + $0x680] sm:$0xff]
    %v290 = vld [vmem:[#allocation2 + $0x688] sm:$0xff]
    %v291 = vld [vmem:[#allocation2 + $0x690] sm:$0xff]
    %v292 = vld [vmem:[#allocation2 + $0x698] sm:$0xff]
    %v293 = vld [vmem:[#allocation2 + $0x6a0] sm:$0xff]
    %v294 = vld [vmem:[#allocation2 + $0x6a8] sm:$0xff]
    %v295 = vld [vmem:[#allocation2 + $0x6b0] sm:$0xff]
    %v296 = vld [vmem:[#allocation2 + $0x6b8] sm:$0xff]
    %v297 = vld [vmem:[#allocation2 + $0x6c0] sm:$0xff]
    %v298 = vld [vmem:[#allocation2 + $0x6c8] sm:$0xff]
    %v299 = vld [vmem:[#allocation2 + $0x6d0] sm:$0xff]
    %v300 = vld [vmem:[#allocation2 + $0x6d8] sm:$0xff]
    %v301 = vld [vmem:[#allocation2 + $0x6e0] sm:$0xff]
    %v302 = vld [vmem:[#allocation2 + $0x6e8] sm:$0xff]
    %v303 = vld [vmem:[#allocation2 + $0x6f0] sm:$0xff]
    %v304 = vld [vmem:[#allocation2 + $0x6f8] sm:$0xff]
    %v305 = vld [vmem:[#allocation2 + $0x700] sm:$0xff]
    %v306 = vld [vmem:[#allocation2 + $0x708] sm:$0xff]
    %v307 = vld [vmem:[#allocation2 + $0x710] sm:$0xff]
    %v308 = vld [vmem:[#allocation2 + $0x718] sm:$0xff]
    %v309 = vld [vmem:[#allocation2 + $0x720] sm:$0xff]
    %v310 = vld [vmem:[#allocation2 + $0x728] sm:$0xff]
    %v311 = vld [vmem:[#allocation2 + $0x730] sm:$0xff]
    %v312 = vld [vmem:[#allocation2 + $0x738] sm:$0xff]
    %v313 = vld [vmem:[#allocation2 + $0x740] sm:$0xff]
    %v314 = vld [vmem:[#allocation2 + $0x748] sm:$0xff]
    %v315 = vld [vmem:[#allocation2 + $0x750] sm:$0xff]
    %v316 = vld [vmem:[#allocation2 + $0x758] sm:$0xff]
    %v317 = vld [vmem:[#allocation2 + $0x760] sm:$0xff]
    %v318 = vld [vmem:[#allocation2 + $0x768] sm:$0xff]
    %v319 = vld [vmem:[#allocation2 + $0x770] sm:$0xff]
    %v320 = vld [vmem:[#allocation2 + $0x778] sm:$0xff]
    %v321 = vld [vmem:[#allocation2 + $0x780] sm:$0xff]
    %v322 = vld [vmem:[#allocation2 + $0x788] sm:$0xff]
    %v323 = vld [vmem:[#allocation2 + $0x790] sm:$0xff]
    %v324 = vld [vmem:[#allocation2 + $0x798] sm:$0xff]
    %v325 = vld [vmem:[#allocation2 + $0x7a0] sm:$0xff]
    %v326 = vld [vmem:[#allocation2 + $0x7a8] sm:$0xff]
    %v327 = vld [vmem:[#allocation2 + $0x7b0] sm:$0xff]
    %v328 = vld [vmem:[#allocation2 + $0x7b8] sm:$0xff]
    %v329 = vld [vmem:[#allocation2 + $0x7c0] sm:$0xff]
    %v330 = vld [vmem:[#allocation2 + $0x7c8] sm:$0xff]
    %v331 = vld [vmem:[#allocation2 + $0x7d0] sm:$0xff]
    %v332 = vld [vmem:[#allocation2 + $0x7d8] sm:$0xff]
    %v333 = vld [vmem:[#allocation2 + $0x7e0] sm:$0xff]
    %v334 = vld [vmem:[#allocation2 + $0x7e8] sm:$0xff]
    %v335 = vld [vmem:[#allocation2 + $0x7f0] sm:$0xff]
    %v336 = vld [vmem:[#allocation2 + $0x7f8] sm:$0xff]
    %v337 = vld [vmem:[%s2] sm:$0xf]
    %v339 = vperm.slane %v337, 0
    %v340 = vperm.slane %v337, 1
    %v341 = vperm.slane %v337, 2
    %v342 = vperm.slane %v337, 3
    %v603 = vunpack.c.l.b16 %v81
    %v604 = vunpack.c.h.b16 %v81
    %v605 = vunpack.c.l.b16 %v82
    %v606 = vunpack.c.h.b16 %v82
    %v607 = vunpack.c.l.b16 %v83
    %v608 = vunpack.c.h.b16 %v83
    %v609 = vunpack.c.l.b16 %v84
    %v610 = vunpack.c.h.b16 %v84
    %v611 = vunpack.c.l.b16 %v85
    %v612 = vunpack.c.h.b16 %v85
    %v613 = vunpack.c.l.b16 %v86
    %v614 = vunpack.c.h.b16 %v86
    %v615 = vunpack.c.l.b16 %v87
    %v616 = vunpack.c.h.b16 %v87
    %v617 = vunpack.c.l.b16 %v88
    %v618 = vunpack.c.h.b16 %v88
    %v619 = vunpack.c.l.b16 %v89
    %v620 = vunpack.c.h.b16 %v89
    %v621 = vunpack.c.l.b16 %v90
    %v622 = vunpack.c.h.b16 %v90
    %v623 = vunpack.c.l.b16 %v91
    %v624 = vunpack.c.h.b16 %v91
    %v625 = vunpack.c.l.b16 %v92
    %v626 = vunpack.c.h.b16 %v92
    %v627 = vunpack.c.l.b16 %v93
    %v628 = vunpack.c.h.b16 %v93
    %v629 = vunpack.c.l.b16 %v94
    %v630 = vunpack.c.h.b16 %v94
    %v631 = vunpack.c.l.b16 %v95
    %v632 = vunpack.c.h.b16 %v95
    %v633 = vunpack.c.l.b16 %v96
    %v634 = vunpack.c.h.b16 %v96
    %v635 = vunpack.c.l.b16 %v97
    %v636 = vunpack.c.h.b16 %v97
    %v637 = vunpack.c.l.b16 %v98
    %v638 = vunpack.c.h.b16 %v98
    %v639 = vunpack.c.l.b16 %v99
    %v640 = vunpack.c.h.b16 %v99
    %v641 = vunpack.c.l.b16 %v100
    %v642 = vunpack.c.h.b16 %v100
    %v643 = vunpack.c.l.b16 %v101
    %v644 = vunpack.c.h.b16 %v101
    %v645 = vunpack.c.l.b16 %v102
    %v646 = vunpack.c.h.b16 %v102
    %v647 = vunpack.c.l.b16 %v103
    %v648 = vunpack.c.h.b16 %v103
    %v649 = vunpack.c.l.b16 %v104
    %v650 = vunpack.c.h.b16 %v104
    %v651 = vunpack.c.l.b16 %v105
    %v652 = vunpack.c.h.b16 %v105
    %v653 = vunpack.c.l.b16 %v106
    %v654 = vunpack.c.h.b16 %v106
    %v655 = vunpack.c.l.b16 %v107
    %v656 = vunpack.c.h.b16 %v107
    %v657 = vunpack.c.l.b16 %v108
    %v658 = vunpack.c.h.b16 %v108
    %v659 = vunpack.c.l.b16 %v109
    %v660 = vunpack.c.h.b16 %v109
    %v661 = vunpack.c.l.b16 %v110
    %v662 = vunpack.c.h.b16 %v110
    %v663 = vunpack.c.l.b16 %v111
    %v664 = vunpack.c.h.b16 %v111
    %v665 = vunpack.c.l.b16 %v112
    %v666 = vunpack.c.h.b16 %v112
    %v667 = vunpack.c.l.b16 %v113
    %v668 = vunpack.c.h.b16 %v113
    %v669 = vunpack.c.l.b16 %v114
    %v670 = vunpack.c.h.b16 %v114
    %v671 = vunpack.c.l.b16 %v115
    %v672 = vunpack.c.h.b16 %v115
    %v673 = vunpack.c.l.b16 %v116
    %v674 = vunpack.c.h.b16 %v116
    %v675 = vunpack.c.l.b16 %v117
    %v676 = vunpack.c.h.b16 %v117
    %v677 = vunpack.c.l.b16 %v118
    %v678 = vunpack.c.h.b16 %v118
    %v679 = vunpack.c.l.b16 %v119
    %v680 = vunpack.c.h.b16 %v119
    %v681 = vunpack.c.l.b16 %v120
    %v682 = vunpack.c.h.b16 %v120
    %v683 = vunpack.c.l.b16 %v121
    %v684 = vunpack.c.h.b16 %v121
    %v685 = vunpack.c.l.b16 %v122
    %v686 = vunpack.c.h.b16 %v122
    %v687 = vunpack.c.l.b16 %v123
    %v688 = vunpack.c.h.b16 %v123
    %v689 = vunpack.c.l.b16 %v124
    %v690 = vunpack.c.h.b16 %v124
    %v691 = vunpack.c.l.b16 %v125
    %v692 = vunpack.c.h.b16 %v125
    %v693 = vunpack.c.l.b16 %v126
    %v694 = vunpack.c.h.b16 %v126
    %v695 = vunpack.c.l.b16 %v127
    %v696 = vunpack.c.h.b16 %v127
    %v697 = vunpack.c.l.b16 %v128
    %v698 = vunpack.c.h.b16 %v128
    %v699 = vunpack.c.l.b16 %v129
    %v700 = vunpack.c.h.b16 %v129
    %v701 = vunpack.c.l.b16 %v130
    %v702 = vunpack.c.h.b16 %v130
    %v703 = vunpack.c.l.b16 %v131
    %v704 = vunpack.c.h.b16 %v131
    %v705 = vunpack.c.l.b16 %v132
    %v706 = vunpack.c.h.b16 %v132
    %v707 = vunpack.c.l.b16 %v133
    %v708 = vunpack.c.h.b16 %v133
    %v709 = vunpack.c.l.b16 %v134
    %v710 = vunpack.c.h.b16 %v134
    %v711 = vunpack.c.l.b16 %v135
    %v712 = vunpack.c.h.b16 %v135
    %v713 = vunpack.c.l.b16 %v136
    %v714 = vunpack.c.h.b16 %v136
    %v715 = vunpack.c.l.b16 %v137
    %v716 = vunpack.c.h.b16 %v137
    %v717 = vunpack.c.l.b16 %v138
    %v718 = vunpack.c.h.b16 %v138
    %v719 = vunpack.c.l.b16 %v139
    %v720 = vunpack.c.h.b16 %v139
    %v721 = vunpack.c.l.b16 %v140
    %v722 = vunpack.c.h.b16 %v140
    %v723 = vunpack.c.l.b16 %v141
    %v724 = vunpack.c.h.b16 %v141
    %v725 = vunpack.c.l.b16 %v142
    %v726 = vunpack.c.h.b16 %v142
    %v727 = vunpack.c.l.b16 %v143
    %v728 = vunpack.c.h.b16 %v143
    %v729 = vunpack.c.l.b16 %v144
    %v730 = vunpack.c.h.b16 %v144
    %v731 = vunpack.c.l.b16 %v145
    %v732 = vunpack.c.h.b16 %v145
    %v733 = vunpack.c.l.b16 %v146
    %v734 = vunpack.c.h.b16 %v146
    %v735 = vunpack.c.l.b16 %v147
    %v736 = vunpack.c.h.b16 %v147
    %v737 = vunpack.c.l.b16 %v148
    %v738 = vunpack.c.h.b16 %v148
    %v739 = vunpack.c.l.b16 %v149
    %v740 = vunpack.c.h.b16 %v149
    %v741 = vunpack.c.l.b16 %v150
    %v742 = vunpack.c.h.b16 %v150
    %v743 = vunpack.c.l.b16 %v151
    %v744 = vunpack.c.h.b16 %v151
    %v745 = vunpack.c.l.b16 %v152
    %v746 = vunpack.c.h.b16 %v152
    %v747 = vunpack.c.l.b16 %v153
    %v748 = vunpack.c.h.b16 %v153
    %v749 = vunpack.c.l.b16 %v154
    %v750 = vunpack.c.h.b16 %v154
    %v751 = vunpack.c.l.b16 %v155
    %v752 = vunpack.c.h.b16 %v155
    %v753 = vunpack.c.l.b16 %v156
    %v754 = vunpack.c.h.b16 %v156
    %v755 = vunpack.c.l.b16 %v157
    %v756 = vunpack.c.h.b16 %v157
    %v757 = vunpack.c.l.b16 %v158
    %v758 = vunpack.c.h.b16 %v158
    %v759 = vunpack.c.l.b16 %v159
    %v760 = vunpack.c.h.b16 %v159
    %v761 = vunpack.c.l.b16 %v160
    %v762 = vunpack.c.h.b16 %v160
    %v763 = vunpack.c.l.b16 %v161
    %v764 = vunpack.c.h.b16 %v161
    %v765 = vunpack.c.l.b16 %v162
    %v766 = vunpack.c.h.b16 %v162
    %v767 = vunpack.c.l.b16 %v163
    %v768 = vunpack.c.h.b16 %v163
    %v769 = vunpack.c.l.b16 %v164
    %v770 = vunpack.c.h.b16 %v164
    %v771 = vunpack.c.l.b16 %v165
    %v772 = vunpack.c.h.b16 %v165
    %v773 = vunpack.c.l.b16 %v166
    %v774 = vunpack.c.h.b16 %v166
    %v775 = vunpack.c.l.b16 %v167
    %v776 = vunpack.c.h.b16 %v167
    %v777 = vunpack.c.l.b16 %v168
    %v778 = vunpack.c.h.b16 %v168
    %v779 = vunpack.c.l.b16 %v169
    %v780 = vunpack.c.h.b16 %v169
    %v781 = vunpack.c.l.b16 %v170
    %v782 = vunpack.c.h.b16 %v170
    %v783 = vunpack.c.l.b16 %v171
    %v784 = vunpack.c.h.b16 %v171
    %v785 = vunpack.c.l.b16 %v172
    %v786 = vunpack.c.h.b16 %v172
    %v787 = vunpack.c.l.b16 %v173
    %v788 = vunpack.c.h.b16 %v173
    %v789 = vunpack.c.l.b16 %v174
    %v790 = vunpack.c.h.b16 %v174
    %v791 = vunpack.c.l.b16 %v175
    %v792 = vunpack.c.h.b16 %v175
    %v793 = vunpack.c.l.b16 %v176
    %v794 = vunpack.c.h.b16 %v176
    %v795 = vunpack.c.l.b16 %v177
    %v796 = vunpack.c.h.b16 %v177
    %v797 = vunpack.c.l.b16 %v178
    %v798 = vunpack.c.h.b16 %v178
    %v799 = vunpack.c.l.b16 %v179
    %v800 = vunpack.c.h.b16 %v179
    %v801 = vunpack.c.l.b16 %v180
    %v802 = vunpack.c.h.b16 %v180
    %v803 = vunpack.c.l.b16 %v181
    %v804 = vunpack.c.h.b16 %v181
    %v805 = vunpack.c.l.b16 %v182
    %v806 = vunpack.c.h.b16 %v182
    %v807 = vunpack.c.l.b16 %v183
    %v808 = vunpack.c.h.b16 %v183
    %v809 = vunpack.c.l.b16 %v184
    %v810 = vunpack.c.h.b16 %v184
    %v811 = vunpack.c.l.b16 %v185
    %v812 = vunpack.c.h.b16 %v185
    %v813 = vunpack.c.l.b16 %v186
    %v814 = vunpack.c.h.b16 %v186
    %v815 = vunpack.c.l.b16 %v187
    %v816 = vunpack.c.h.b16 %v187
    %v817 = vunpack.c.l.b16 %v188
    %v818 = vunpack.c.h.b16 %v188
    %v819 = vunpack.c.l.b16 %v189
    %v820 = vunpack.c.h.b16 %v189
    %v821 = vunpack.c.l.b16 %v190
    %v822 = vunpack.c.h.b16 %v190
    %v823 = vunpack.c.l.b16 %v191
    %v824 = vunpack.c.h.b16 %v191
    %v825 = vunpack.c.l.b16 %v192
    %v826 = vunpack.c.h.b16 %v192
    %v827 = vunpack.c.l.b16 %v193
    %v828 = vunpack.c.h.b16 %v193
    %v829 = vunpack.c.l.b16 %v194
    %v830 = vunpack.c.h.b16 %v194
    %v831 = vunpack.c.l.b16 %v195
    %v832 = vunpack.c.h.b16 %v195
    %v833 = vunpack.c.l.b16 %v196
    %v834 = vunpack.c.h.b16 %v196
    %v835 = vunpack.c.l.b16 %v197
    %v836 = vunpack.c.h.b16 %v197
    %v837 = vunpack.c.l.b16 %v198
    %v838 = vunpack.c.h.b16 %v198
    %v839 = vunpack.c.l.b16 %v199
    %v840 = vunpack.c.h.b16 %v199
    %v841 = vunpack.c.l.b16 %v200
    %v842 = vunpack.c.h.b16 %v200
    %v843 = vunpack.c.l.b16 %v201
    %v844 = vunpack.c.h.b16 %v201
    %v845 = vunpack.c.l.b16 %v202
    %v846 = vunpack.c.h.b16 %v202
    %v847 = vunpack.c.l.b16 %v203
    %v848 = vunpack.c.h.b16 %v203
    %v849 = vunpack.c.l.b16 %v204
    %v850 = vunpack.c.h.b16 %v204
    %v851 = vunpack.c.l.b16 %v205
    %v852 = vunpack.c.h.b16 %v205
    %v853 = vunpack.c.l.b16 %v206
    %v854 = vunpack.c.h.b16 %v206
    %v855 = vunpack.c.l.b16 %v207
    %v856 = vunpack.c.h.b16 %v207
    %v857 = vunpack.c.l.b16 %v208
    %v858 = vunpack.c.h.b16 %v208
    %v859 = vunpack.c.l.b16 %v209
    %v860 = vunpack.c.h.b16 %v209
    %v861 = vunpack.c.l.b16 %v210
    %v862 = vunpack.c.h.b16 %v210
    %v863 = vunpack.c.l.b16 %v211
    %v864 = vunpack.c.h.b16 %v211
    %v865 = vunpack.c.l.b16 %v212
    %v866 = vunpack.c.h.b16 %v212
    %v867 = vunpack.c.l.b16 %v213
    %v868 = vunpack.c.h.b16 %v213
    %v869 = vunpack.c.l.b16 %v214
    %v870 = vunpack.c.h.b16 %v214
    %v871 = vunpack.c.l.b16 %v215
    %v872 = vunpack.c.h.b16 %v215
    %v873 = vunpack.c.l.b16 %v216
    %v874 = vunpack.c.h.b16 %v216
    %v875 = vunpack.c.l.b16 %v217
    %v876 = vunpack.c.h.b16 %v217
    %v877 = vunpack.c.l.b16 %v218
    %v878 = vunpack.c.h.b16 %v218
    %v879 = vunpack.c.l.b16 %v219
    %v880 = vunpack.c.h.b16 %v219
    %v881 = vunpack.c.l.b16 %v220
    %v882 = vunpack.c.h.b16 %v220
    %v883 = vunpack.c.l.b16 %v221
    %v884 = vunpack.c.h.b16 %v221
    %v885 = vunpack.c.l.b16 %v222
    %v886 = vunpack.c.h.b16 %v222
    %v887 = vunpack.c.l.b16 %v223
    %v888 = vunpack.c.h.b16 %v223
    %v889 = vunpack.c.l.b16 %v224
    %v890 = vunpack.c.h.b16 %v224
    %v891 = vunpack.c.l.b16 %v225
    %v892 = vunpack.c.h.b16 %v225
    %v893 = vunpack.c.l.b16 %v226
    %v894 = vunpack.c.h.b16 %v226
    %v895 = vunpack.c.l.b16 %v227
    %v896 = vunpack.c.h.b16 %v227
    %v897 = vunpack.c.l.b16 %v228
    %v898 = vunpack.c.h.b16 %v228
    %v899 = vunpack.c.l.b16 %v229
    %v900 = vunpack.c.h.b16 %v229
    %v901 = vunpack.c.l.b16 %v230
    %v902 = vunpack.c.h.b16 %v230
    %v903 = vunpack.c.l.b16 %v231
    %v904 = vunpack.c.h.b16 %v231
    %v905 = vunpack.c.l.b16 %v232
    %v906 = vunpack.c.h.b16 %v232
    %v907 = vunpack.c.l.b16 %v233
    %v908 = vunpack.c.h.b16 %v233
    %v909 = vunpack.c.l.b16 %v234
    %v910 = vunpack.c.h.b16 %v234
    %v911 = vunpack.c.l.b16 %v235
    %v912 = vunpack.c.h.b16 %v235
    %v913 = vunpack.c.l.b16 %v236
    %v914 = vunpack.c.h.b16 %v236
    %v915 = vunpack.c.l.b16 %v237
    %v916 = vunpack.c.h.b16 %v237
    %v917 = vunpack.c.l.b16 %v238
    %v918 = vunpack.c.h.b16 %v238
    %v919 = vunpack.c.l.b16 %v239
    %v920 = vunpack.c.h.b16 %v239
    %v921 = vunpack.c.l.b16 %v240
    %v922 = vunpack.c.h.b16 %v240
    %v923 = vunpack.c.l.b16 %v241
    %v924 = vunpack.c.h.b16 %v241
    %v925 = vunpack.c.l.b16 %v242
    %v926 = vunpack.c.h.b16 %v242
    %v927 = vunpack.c.l.b16 %v243
    %v928 = vunpack.c.h.b16 %v243
    %v929 = vunpack.c.l.b16 %v244
    %v930 = vunpack.c.h.b16 %v244
    %v931 = vunpack.c.l.b16 %v245
    %v932 = vunpack.c.h.b16 %v245
    %v933 = vunpack.c.l.b16 %v246
    %v934 = vunpack.c.h.b16 %v246
    %v935 = vunpack.c.l.b16 %v247
    %v936 = vunpack.c.h.b16 %v247
    %v937 = vunpack.c.l.b16 %v248
    %v938 = vunpack.c.h.b16 %v248
    %v939 = vunpack.c.l.b16 %v249
    %v940 = vunpack.c.h.b16 %v249
    %v941 = vunpack.c.l.b16 %v250
    %v942 = vunpack.c.h.b16 %v250
    %v943 = vunpack.c.l.b16 %v251
    %v944 = vunpack.c.h.b16 %v251
    %v945 = vunpack.c.l.b16 %v252
    %v946 = vunpack.c.h.b16 %v252
    %v947 = vunpack.c.l.b16 %v253
    %v948 = vunpack.c.h.b16 %v253
    %v949 = vunpack.c.l.b16 %v254
    %v950 = vunpack.c.h.b16 %v254
    %v951 = vunpack.c.l.b16 %v255
    %v952 = vunpack.c.h.b16 %v255
    %v953 = vunpack.c.l.b16 %v256
    %v954 = vunpack.c.h.b16 %v256
    %v955 = vunpack.c.l.b16 %v257
    %v956 = vunpack.c.h.b16 %v257
    %v957 = vunpack.c.l.b16 %v258
    %v958 = vunpack.c.h.b16 %v258
    %v959 = vunpack.c.l.b16 %v259
    %v960 = vunpack.c.h.b16 %v259
    %v961 = vunpack.c.l.b16 %v260
    %v962 = vunpack.c.h.b16 %v260
    %v963 = vunpack.c.l.b16 %v261
    %v964 = vunpack.c.h.b16 %v261
    %v965 = vunpack.c.l.b16 %v262
    %v966 = vunpack.c.h.b16 %v262
    %v967 = vunpack.c.l.b16 %v263
    %v968 = vunpack.c.h.b16 %v263
    %v969 = vunpack.c.l.b16 %v264
    %v970 = vunpack.c.h.b16 %v264
    %v971 = vunpack.c.l.b16 %v265
    %v972 = vunpack.c.h.b16 %v265
    %v973 = vunpack.c.l.b16 %v266
    %v974 = vunpack.c.h.b16 %v266
    %v975 = vunpack.c.l.b16 %v267
    %v976 = vunpack.c.h.b16 %v267
    %v977 = vunpack.c.l.b16 %v268
    %v978 = vunpack.c.h.b16 %v268
    %v979 = vunpack.c.l.b16 %v269
    %v980 = vunpack.c.h.b16 %v269
    %v981 = vunpack.c.l.b16 %v270
    %v982 = vunpack.c.h.b16 %v270
    %v983 = vunpack.c.l.b16 %v271
    %v984 = vunpack.c.h.b16 %v271
    %v985 = vunpack.c.l.b16 %v272
    %v986 = vunpack.c.h.b16 %v272
    %v987 = vunpack.c.l.b16 %v273
    %v988 = vunpack.c.h.b16 %v273
    %v989 = vunpack.c.l.b16 %v274
    %v990 = vunpack.c.h.b16 %v274
    %v991 = vunpack.c.l.b16 %v275
    %v992 = vunpack.c.h.b16 %v275
    %v993 = vunpack.c.l.b16 %v276
    %v994 = vunpack.c.h.b16 %v276
    %v995 = vunpack.c.l.b16 %v277
    %v996 = vunpack.c.h.b16 %v277
    %v997 = vunpack.c.l.b16 %v278
    %v998 = vunpack.c.h.b16 %v278
    %v999 = vunpack.c.l.b16 %v279
    %v1000 = vunpack.c.h.b16 %v279
    %v1001 = vunpack.c.l.b16 %v280
    %v1002 = vunpack.c.h.b16 %v280
    %v1003 = vunpack.c.l.b16 %v281
    %v1004 = vunpack.c.h.b16 %v281
    %v1005 = vunpack.c.l.b16 %v282
    %v1006 = vunpack.c.h.b16 %v282
    %v1007 = vunpack.c.l.b16 %v283
    %v1008 = vunpack.c.h.b16 %v283
    %v1009 = vunpack.c.l.b16 %v284
    %v1010 = vunpack.c.h.b16 %v284
    %v1011 = vunpack.c.l.b16 %v285
    %v1012 = vunpack.c.h.b16 %v285
    %v1013 = vunpack.c.l.b16 %v286
    %v1014 = vunpack.c.h.b16 %v286
    %v1015 = vunpack.c.l.b16 %v287
    %v1016 = vunpack.c.h.b16 %v287
    %v1017 = vunpack.c.l.b16 %v288
    %v1018 = vunpack.c.h.b16 %v288
    %v1019 = vunpack.c.l.b16 %v289
    %v1020 = vunpack.c.h.b16 %v289
    %v1021 = vunpack.c.l.b16 %v290
    %v1022 = vunpack.c.h.b16 %v290
    %v1023 = vunpack.c.l.b16 %v291
    %v1024 = vunpack.c.h.b16 %v291
    %v1025 = vunpack.c.l.b16 %v292
    %v1026 = vunpack.c.h.b16 %v292
    %v1027 = vunpack.c.l.b16 %v293
    %v1028 = vunpack.c.h.b16 %v293
    %v1029 = vunpack.c.l.b16 %v294
    %v1030 = vunpack.c.h.b16 %v294
    %v1031 = vunpack.c.l.b16 %v295
    %v1032 = vunpack.c.h.b16 %v295
    %v1033 = vunpack.c.l.b16 %v296
    %v1034 = vunpack.c.h.b16 %v296
    %v1035 = vunpack.c.l.b16 %v297
    %v1036 = vunpack.c.h.b16 %v297
    %v1037 = vunpack.c.l.b16 %v298
    %v1038 = vunpack.c.h.b16 %v298
    %v1039 = vunpack.c.l.b16 %v299
    %v1040 = vunpack.c.h.b16 %v299
    %v1041 = vunpack.c.l.b16 %v300
    %v1042 = vunpack.c.h.b16 %v300
    %v1043 = vunpack.c.l.b16 %v301
    %v1044 = vunpack.c.h.b16 %v301
    %v1045 = vunpack.c.l.b16 %v302
    %v1046 = vunpack.c.h.b16 %v302
    %v1047 = vunpack.c.l.b16 %v303
    %v1048 = vunpack.c.h.b16 %v303
    %v1049 = vunpack.c.l.b16 %v304
    %v1050 = vunpack.c.h.b16 %v304
    %v1051 = vunpack.c.l.b16 %v305
    %v1052 = vunpack.c.h.b16 %v305
    %v1053 = vunpack.c.l.b16 %v306
    %v1054 = vunpack.c.h.b16 %v306
    %v1055 = vunpack.c.l.b16 %v307
    %v1056 = vunpack.c.h.b16 %v307
    %v1057 = vunpack.c.l.b16 %v308
    %v1058 = vunpack.c.h.b16 %v308
    %v1059 = vunpack.c.l.b16 %v309
    %v1060 = vunpack.c.h.b16 %v309
    %v1061 = vunpack.c.l.b16 %v310
    %v1062 = vunpack.c.h.b16 %v310
    %v1063 = vunpack.c.l.b16 %v311
    %v1064 = vunpack.c.h.b16 %v311
    %v1065 = vunpack.c.l.b16 %v312
    %v1066 = vunpack.c.h.b16 %v312
    %v1067 = vunpack.c.l.b16 %v313
    %v1068 = vunpack.c.h.b16 %v313
    %v1069 = vunpack.c.l.b16 %v314
    %v1070 = vunpack.c.h.b16 %v314
    %v1071 = vunpack.c.l.b16 %v315
    %v1072 = vunpack.c.h.b16 %v315
    %v1073 = vunpack.c.l.b16 %v316
    %v1074 = vunpack.c.h.b16 %v316
    %v1075 = vunpack.c.l.b16 %v317
    %v1076 = vunpack.c.h.b16 %v317
    %v1077 = vunpack.c.l.b16 %v318
    %v1078 = vunpack.c.h.b16 %v318
    %v1079 = vunpack.c.l.b16 %v319
    %v1080 = vunpack.c.h.b16 %v319
    %v1081 = vunpack.c.l.b16 %v320
    %v1082 = vunpack.c.h.b16 %v320
    %v1083 = vunpack.c.l.b16 %v321
    %v1084 = vunpack.c.h.b16 %v321
    %v1085 = vunpack.c.l.b16 %v322
    %v1086 = vunpack.c.h.b16 %v322
    %v1087 = vunpack.c.l.b16 %v323
    %v1088 = vunpack.c.h.b16 %v323
    %v1089 = vunpack.c.l.b16 %v324
    %v1090 = vunpack.c.h.b16 %v324
    %v1091 = vunpack.c.l.b16 %v325
    %v1092 = vunpack.c.h.b16 %v325
    %v1093 = vunpack.c.l.b16 %v326
    %v1094 = vunpack.c.h.b16 %v326
    %v1095 = vunpack.c.l.b16 %v327
    %v1096 = vunpack.c.h.b16 %v327
    %v1097 = vunpack.c.l.b16 %v328
    %v1098 = vunpack.c.h.b16 %v328
    %v1099 = vunpack.c.l.b16 %v329
    %v1100 = vunpack.c.h.b16 %v329
    %v1101 = vunpack.c.l.b16 %v330
    %v1102 = vunpack.c.h.b16 %v330
    %v1103 = vunpack.c.l.b16 %v331
    %v1104 = vunpack.c.h.b16 %v331
    %v1105 = vunpack.c.l.b16 %v332
    %v1106 = vunpack.c.h.b16 %v332
    %v1107 = vunpack.c.l.b16 %v333
    %v1108 = vunpack.c.h.b16 %v333
    %v1109 = vunpack.c.l.b16 %v334
    %v1110 = vunpack.c.h.b16 %v334
    %v1111 = vunpack.c.l.b16 %v335
    %v1112 = vunpack.c.h.b16 %v335
    %v1113 = vunpack.c.l.b16 %v336
    %v1114 = vunpack.c.h.b16 %v336
    %v1115 = vpack.c.b16 %v607, %v603
    %v1116 = vpack.c.b16 %v608, %v604
    %v1117 = vpack.c.b16 %v609, %v605
    %v1118 = vpack.c.b16 %v610, %v606
    %v1119 = vpack.c.b16 %v615, %v611
    %v1120 = vpack.c.b16 %v616, %v612
    %v1121 = vpack.c.b16 %v617, %v613
    %v1122 = vpack.c.b16 %v618, %v614
    %v1123 = vpack.c.b16 %v623, %v619
    %v1124 = vpack.c.b16 %v624, %v620
    %v1125 = vpack.c.b16 %v625, %v621
    %v1126 = vpack.c.b16 %v626, %v622
    %v1127 = vpack.c.b16 %v631, %v627
    %v1128 = vpack.c.b16 %v632, %v628
    %v1129 = vpack.c.b16 %v633, %v629
    %v1130 = vpack.c.b16 %v634, %v630
    %v1131 = vpack.c.b16 %v639, %v635
    %v1132 = vpack.c.b16 %v640, %v636
    %v1133 = vpack.c.b16 %v641, %v637
    %v1134 = vpack.c.b16 %v642, %v638
    %v1135 = vpack.c.b16 %v647, %v643
    %v1136 = vpack.c.b16 %v648, %v644
    %v1137 = vpack.c.b16 %v649, %v645
    %v1138 = vpack.c.b16 %v650, %v646
    %v1139 = vpack.c.b16 %v655, %v651
    %v1140 = vpack.c.b16 %v656, %v652
    %v1141 = vpack.c.b16 %v657, %v653
    %v1142 = vpack.c.b16 %v658, %v654
    %v1143 = vpack.c.b16 %v663, %v659
    %v1144 = vpack.c.b16 %v664, %v660
    %v1145 = vpack.c.b16 %v665, %v661
    %v1146 = vpack.c.b16 %v666, %v662
    %v1147 = vpack.c.b16 %v671, %v667
    %v1148 = vpack.c.b16 %v672, %v668
    %v1149 = vpack.c.b16 %v673, %v669
    %v1150 = vpack.c.b16 %v674, %v670
    %v1151 = vpack.c.b16 %v679, %v675
    %v1152 = vpack.c.b16 %v680, %v676
    %v1153 = vpack.c.b16 %v681, %v677
    %v1154 = vpack.c.b16 %v682, %v678
    %v1155 = vpack.c.b16 %v687, %v683
    %v1156 = vpack.c.b16 %v688, %v684
    %v1157 = vpack.c.b16 %v689, %v685
    %v1158 = vpack.c.b16 %v690, %v686
    %v1159 = vpack.c.b16 %v695, %v691
    %v1160 = vpack.c.b16 %v696, %v692
    %v1161 = vpack.c.b16 %v697, %v693
    %v1162 = vpack.c.b16 %v698, %v694
    %v1163 = vpack.c.b16 %v703, %v699
    %v1164 = vpack.c.b16 %v704, %v700
    %v1165 = vpack.c.b16 %v705, %v701
    %v1166 = vpack.c.b16 %v706, %v702
    %v1167 = vpack.c.b16 %v711, %v707
    %v1168 = vpack.c.b16 %v712, %v708
    %v1169 = vpack.c.b16 %v713, %v709
    %v1170 = vpack.c.b16 %v714, %v710
    %v1171 = vpack.c.b16 %v719, %v715
    %v1172 = vpack.c.b16 %v720, %v716
    %v1173 = vpack.c.b16 %v721, %v717
    %v1174 = vpack.c.b16 %v722, %v718
    %v1175 = vpack.c.b16 %v727, %v723
    %v1176 = vpack.c.b16 %v728, %v724
    %v1177 = vpack.c.b16 %v729, %v725
    %v1178 = vpack.c.b16 %v730, %v726
    %v1179 = vpack.c.b16 %v735, %v731
    %v1180 = vpack.c.b16 %v736, %v732
    %v1181 = vpack.c.b16 %v737, %v733
    %v1182 = vpack.c.b16 %v738, %v734
    %v1183 = vpack.c.b16 %v743, %v739
    %v1184 = vpack.c.b16 %v744, %v740
    %v1185 = vpack.c.b16 %v745, %v741
    %v1186 = vpack.c.b16 %v746, %v742
    %v1187 = vpack.c.b16 %v751, %v747
    %v1188 = vpack.c.b16 %v752, %v748
    %v1189 = vpack.c.b16 %v753, %v749
    %v1190 = vpack.c.b16 %v754, %v750
    %v1191 = vpack.c.b16 %v759, %v755
    %v1192 = vpack.c.b16 %v760, %v756
    %v1193 = vpack.c.b16 %v761, %v757
    %v1194 = vpack.c.b16 %v762, %v758
    %v1195 = vpack.c.b16 %v767, %v763
    %v1196 = vpack.c.b16 %v768, %v764
    %v1197 = vpack.c.b16 %v769, %v765
    %v1198 = vpack.c.b16 %v770, %v766
    %v1199 = vpack.c.b16 %v775, %v771
    %v1200 = vpack.c.b16 %v776, %v772
    %v1201 = vpack.c.b16 %v777, %v773
    %v1202 = vpack.c.b16 %v778, %v774
    %v1203 = vpack.c.b16 %v783, %v779
    %v1204 = vpack.c.b16 %v784, %v780
    %v1205 = vpack.c.b16 %v785, %v781
    %v1206 = vpack.c.b16 %v786, %v782
    %v1207 = vpack.c.b16 %v791, %v787
    %v1208 = vpack.c.b16 %v792, %v788
    %v1209 = vpack.c.b16 %v793, %v789
    %v1210 = vpack.c.b16 %v794, %v790
    %v1211 = vpack.c.b16 %v799, %v795
    %v1212 = vpack.c.b16 %v800, %v796
    %v1213 = vpack.c.b16 %v801, %v797
    %v1214 = vpack.c.b16 %v802, %v798
    %v1215 = vpack.c.b16 %v807, %v803
    %v1216 = vpack.c.b16 %v808, %v804
    %v1217 = vpack.c.b16 %v809, %v805
    %v1218 = vpack.c.b16 %v810, %v806
    %v1219 = vpack.c.b16 %v815, %v811
    %v1220 = vpack.c.b16 %v816, %v812
    %v1221 = vpack.c.b16 %v817, %v813
    %v1222 = vpack.c.b16 %v818, %v814
    %v1223 = vpack.c.b16 %v823, %v819
    %v1224 = vpack.c.b16 %v824, %v820
    %v1225 = vpack.c.b16 %v825, %v821
    %v1226 = vpack.c.b16 %v826, %v822
    %v1227 = vpack.c.b16 %v831, %v827
    %v1228 = vpack.c.b16 %v832, %v828
    %v1229 = vpack.c.b16 %v833, %v829
    %v1230 = vpack.c.b16 %v834, %v830
    %v1231 = vpack.c.b16 %v839, %v835
    %v1232 = vpack.c.b16 %v840, %v836
    %v1233 = vpack.c.b16 %v841, %v837
    %v1234 = vpack.c.b16 %v842, %v838
    %v1235 = vpack.c.b16 %v847, %v843
    %v1236 = vpack.c.b16 %v848, %v844
    %v1237 = vpack.c.b16 %v849, %v845
    %v1238 = vpack.c.b16 %v850, %v846
    %v1239 = vpack.c.b16 %v855, %v851
    %v1240 = vpack.c.b16 %v856, %v852
    %v1241 = vpack.c.b16 %v857, %v853
    %v1242 = vpack.c.b16 %v858, %v854
    %v1243 = vpack.c.b16 %v863, %v859
    %v1244 = vpack.c.b16 %v864, %v860
    %v1245 = vpack.c.b16 %v865, %v861
    %v1246 = vpack.c.b16 %v866, %v862
    %v1247 = vpack.c.b16 %v871, %v867
    %v1248 = vpack.c.b16 %v872, %v868
    %v1249 = vpack.c.b16 %v873, %v869
    %v1250 = vpack.c.b16 %v874, %v870
    %v1251 = vpack.c.b16 %v879, %v875
    %v1252 = vpack.c.b16 %v880, %v876
    %v1253 = vpack.c.b16 %v881, %v877
    %v1254 = vpack.c.b16 %v882, %v878
    %v1255 = vpack.c.b16 %v887, %v883
    %v1256 = vpack.c.b16 %v888, %v884
    %v1257 = vpack.c.b16 %v889, %v885
    %v1258 = vpack.c.b16 %v890, %v886
    %v1259 = vpack.c.b16 %v895, %v891
    %v1260 = vpack.c.b16 %v896, %v892
    %v1261 = vpack.c.b16 %v897, %v893
    %v1262 = vpack.c.b16 %v898, %v894
    %v1263 = vpack.c.b16 %v903, %v899
    %v1264 = vpack.c.b16 %v904, %v900
    %v1265 = vpack.c.b16 %v905, %v901
    %v1266 = vpack.c.b16 %v906, %v902
    %v1267 = vpack.c.b16 %v911, %v907
    %v1268 = vpack.c.b16 %v912, %v908
    %v1269 = vpack.c.b16 %v913, %v909
    %v1270 = vpack.c.b16 %v914, %v910
    %v1271 = vpack.c.b16 %v919, %v915
    %v1272 = vpack.c.b16 %v920, %v916
    %v1273 = vpack.c.b16 %v921, %v917
    %v1274 = vpack.c.b16 %v922, %v918
    %v1275 = vpack.c.b16 %v927, %v923
    %v1276 = vpack.c.b16 %v928, %v924
    %v1277 = vpack.c.b16 %v929, %v925
    %v1278 = vpack.c.b16 %v930, %v926
    %v1279 = vpack.c.b16 %v935, %v931
    %v1280 = vpack.c.b16 %v936, %v932
    %v1281 = vpack.c.b16 %v937, %v933
    %v1282 = vpack.c.b16 %v938, %v934
    %v1283 = vpack.c.b16 %v943, %v939
    %v1284 = vpack.c.b16 %v944, %v940
    %v1285 = vpack.c.b16 %v945, %v941
    %v1286 = vpack.c.b16 %v946, %v942
    %v1287 = vpack.c.b16 %v951, %v947
    %v1288 = vpack.c.b16 %v952, %v948
    %v1289 = vpack.c.b16 %v953, %v949
    %v1290 = vpack.c.b16 %v954, %v950
    %v1291 = vpack.c.b16 %v959, %v955
    %v1292 = vpack.c.b16 %v960, %v956
    %v1293 = vpack.c.b16 %v961, %v957
    %v1294 = vpack.c.b16 %v962, %v958
    %v1295 = vpack.c.b16 %v967, %v963
    %v1296 = vpack.c.b16 %v968, %v964
    %v1297 = vpack.c.b16 %v969, %v965
    %v1298 = vpack.c.b16 %v970, %v966
    %v1299 = vpack.c.b16 %v975, %v971
    %v1300 = vpack.c.b16 %v976, %v972
    %v1301 = vpack.c.b16 %v977, %v973
    %v1302 = vpack.c.b16 %v978, %v974
    %v1303 = vpack.c.b16 %v983, %v979
    %v1304 = vpack.c.b16 %v984, %v980
    %v1305 = vpack.c.b16 %v985, %v981
    %v1306 = vpack.c.b16 %v986, %v982
    %v1307 = vpack.c.b16 %v991, %v987
    %v1308 = vpack.c.b16 %v992, %v988
    %v1309 = vpack.c.b16 %v993, %v989
    %v1310 = vpack.c.b16 %v994, %v990
    %v1311 = vpack.c.b16 %v999, %v995
    %v1312 = vpack.c.b16 %v1000, %v996
    %v1313 = vpack.c.b16 %v1001, %v997
    %v1314 = vpack.c.b16 %v1002, %v998
    %v1315 = vpack.c.b16 %v1007, %v1003
    %v1316 = vpack.c.b16 %v1008, %v1004
    %v1317 = vpack.c.b16 %v1009, %v1005
    %v1318 = vpack.c.b16 %v1010, %v1006
    %v1319 = vpack.c.b16 %v1015, %v1011
    %v1320 = vpack.c.b16 %v1016, %v1012
    %v1321 = vpack.c.b16 %v1017, %v1013
    %v1322 = vpack.c.b16 %v1018, %v1014
    %v1323 = vpack.c.b16 %v1023, %v1019
    %v1324 = vpack.c.b16 %v1024, %v1020
    %v1325 = vpack.c.b16 %v1025, %v1021
    %v1326 = vpack.c.b16 %v1026, %v1022
    %v1327 = vpack.c.b16 %v1031, %v1027
    %v1328 = vpack.c.b16 %v1032, %v1028
    %v1329 = vpack.c.b16 %v1033, %v1029
    %v1330 = vpack.c.b16 %v1034, %v1030
    %v1331 = vpack.c.b16 %v1039, %v1035
    %v1332 = vpack.c.b16 %v1040, %v1036
    %v1333 = vpack.c.b16 %v1041, %v1037
    %v1334 = vpack.c.b16 %v1042, %v1038
    %v1335 = vpack.c.b16 %v1047, %v1043
    %v1336 = vpack.c.b16 %v1048, %v1044
    %v1337 = vpack.c.b16 %v1049, %v1045
    %v1338 = vpack.c.b16 %v1050, %v1046
    %v1339 = vpack.c.b16 %v1055, %v1051
    %v1340 = vpack.c.b16 %v1056, %v1052
    %v1341 = vpack.c.b16 %v1057, %v1053
    %v1342 = vpack.c.b16 %v1058, %v1054
    %v1343 = vpack.c.b16 %v1063, %v1059
    %v1344 = vpack.c.b16 %v1064, %v1060
    %v1345 = vpack.c.b16 %v1065, %v1061
    %v1346 = vpack.c.b16 %v1066, %v1062
    %v1347 = vpack.c.b16 %v1071, %v1067
    %v1348 = vpack.c.b16 %v1072, %v1068
    %v1349 = vpack.c.b16 %v1073, %v1069
    %v1350 = vpack.c.b16 %v1074, %v1070
    %v1351 = vpack.c.b16 %v1079, %v1075
    %v1352 = vpack.c.b16 %v1080, %v1076
    %v1353 = vpack.c.b16 %v1081, %v1077
    %v1354 = vpack.c.b16 %v1082, %v1078
    %v1355 = vpack.c.b16 %v1087, %v1083
    %v1356 = vpack.c.b16 %v1088, %v1084
    %v1357 = vpack.c.b16 %v1089, %v1085
    %v1358 = vpack.c.b16 %v1090, %v1086
    %v1359 = vpack.c.b16 %v1095, %v1091
    %v1360 = vpack.c.b16 %v1096, %v1092
    %v1361 = vpack.c.b16 %v1097, %v1093
    %v1362 = vpack.c.b16 %v1098, %v1094
    %v1363 = vpack.c.b16 %v1103, %v1099
    %v1364 = vpack.c.b16 %v1104, %v1100
    %v1365 = vpack.c.b16 %v1105, %v1101
    %v1366 = vpack.c.b16 %v1106, %v1102
    %v1367 = vpack.c.b16 %v1111, %v1107
    %v1368 = vpack.c.b16 %v1112, %v1108
    %v1369 = vpack.c.b16 %v1113, %v1109
    %v1370 = vpack.c.b16 %v1114, %v1110
    %1627 = vmatpush.bf16.msra.mxu0 %v1143
    %1628 = vmatpush.bf16.msra.mxu0 %v1139
    %1629 = vmatpush.bf16.msra.mxu0 %v1135
    %1630 = vmatpush.bf16.msra.mxu0 %v1131
    %1631 = vmatpush.bf16.msra.mxu0 %v1127
    %1632 = vmatpush.bf16.msra.mxu0 %v1123
    %1633 = vmatpush.bf16.msra.mxu0 %v1119
    %1634 = vmatpush.bf16.msra.mxu0 %v1115
    %1635 = vmatmul.bf16.gmra.mxu0 %v73
    %v1636 = vpop.f32.mrf.mxu0
    %v1637 = vadd.f32 %v339, %v1636
    %v1638 = vpop.f32.mrf.mxu0
    %1639 = vdwg.mxu0
    %1640 = vmatpush.bf16.msra.mxu0 %v1175
    %1641 = vmatpush.bf16.msra.mxu0 %v1171
    %1642 = vmatpush.bf16.msra.mxu0 %v1167
    %1643 = vmatpush.bf16.msra.mxu0 %v1163
    %1644 = vmatpush.bf16.msra.mxu0 %v1159
    %1645 = vmatpush.bf16.msra.mxu0 %v1155
    %1646 = vmatpush.bf16.msra.mxu0 %v1151
    %1647 = vmatpush.bf16.msra.mxu0 %v1147
    %1648 = vmatmul.bf16.gmra.mxu0 %v74
    %v1649 = vpop.f32.mrf.mxu0
    %v1650 = vadd.f32 %v1637, %v1649
    %v1651 = vpop.f32.mrf.mxu0
    %1652 = vdwg.mxu0
    %1653 = vmatpush.bf16.msra.mxu0 %v1207
    %1654 = vmatpush.bf16.msra.mxu0 %v1203
    %1655 = vmatpush.bf16.msra.mxu0 %v1199
    %1656 = vmatpush.bf16.msra.mxu0 %v1195
    %1657 = vmatpush.bf16.msra.mxu0 %v1191
    %1658 = vmatpush.bf16.msra.mxu0 %v1187
    %1659 = vmatpush.bf16.msra.mxu0 %v1183
    %1660 = vmatpush.bf16.msra.mxu0 %v1179
    %1661 = vmatmul.bf16.gmra.mxu0 %v75
    %v1662 = vpop.f32.mrf.mxu0
    %v1663 = vadd.f32 %v1650, %v1662
    %v1664 = vpop.f32.mrf.mxu0
    %1665 = vdwg.mxu0
    %1666 = vmatpush.bf16.msra.mxu0 %v1239
    %1667 = vmatpush.bf16.msra.mxu0 %v1235
    %1668 = vmatpush.bf16.msra.mxu0 %v1231
    %1669 = vmatpush.bf16.msra.mxu0 %v1227
    %1670 = vmatpush.bf16.msra.mxu0 %v1223
    %1671 = vmatpush.bf16.msra.mxu0 %v1219
    %1672 = vmatpush.bf16.msra.mxu0 %v1215
    %1673 = vmatpush.bf16.msra.mxu0 %v1211
    %1674 = vmatmul.bf16.gmra.mxu0 %v76
    %v1675 = vpop.f32.mrf.mxu0
    %v1676 = vadd.f32 %v1663, %v1675
    %v1677 = vpop.f32.mrf.mxu0
    %1678 = vdwg.mxu0
    %1679 = vmatpush.bf16.msra.mxu0 %v1271
    %1680 = vmatpush.bf16.msra.mxu0 %v1267
    %1681 = vmatpush.bf16.msra.mxu0 %v1263
    %1682 = vmatpush.bf16.msra.mxu0 %v1259
    %1683 = vmatpush.bf16.msra.mxu0 %v1255
    %1684 = vmatpush.bf16.msra.mxu0 %v1251
    %1685 = vmatpush.bf16.msra.mxu0 %v1247
    %1686 = vmatpush.bf16.msra.mxu0 %v1243
    %1687 = vmatmul.bf16.gmra.mxu0 %v77
    %v1688 = vpop.f32.mrf.mxu0
    %v1689 = vadd.f32 %v1676, %v1688
    %v1690 = vpop.f32.mrf.mxu0
    %1691 = vdwg.mxu0
    %1692 = vmatpush.bf16.msra.mxu0 %v1303
    %1693 = vmatpush.bf16.msra.mxu0 %v1299
    %1694 = vmatpush.bf16.msra.mxu0 %v1295
    %1695 = vmatpush.bf16.msra.mxu0 %v1291
    %1696 = vmatpush.bf16.msra.mxu0 %v1287
    %1697 = vmatpush.bf16.msra.mxu0 %v1283
    %1698 = vmatpush.bf16.msra.mxu0 %v1279
    %1699 = vmatpush.bf16.msra.mxu0 %v1275
    %1700 = vmatmul.bf16.gmra.mxu0 %v78
    %v1701 = vpop.f32.mrf.mxu0
    %v1702 = vadd.f32 %v1689, %v1701
    %v1703 = vpop.f32.mrf.mxu0
    %1704 = vdwg.mxu0
    %1705 = vmatpush.bf16.msra.mxu0 %v1335
    %1706 = vmatpush.bf16.msra.mxu0 %v1331
    %1707 = vmatpush.bf16.msra.mxu0 %v1327
    %1708 = vmatpush.bf16.msra.mxu0 %v1323
    %1709 = vmatpush.bf16.msra.mxu0 %v1319
    %1710 = vmatpush.bf16.msra.mxu0 %v1315
    %1711 = vmatpush.bf16.msra.mxu0 %v1311
    %1712 = vmatpush.bf16.msra.mxu0 %v1307
    %1713 = vmatmul.bf16.gmra.mxu0 %v79
    %v1714 = vpop.f32.mrf.mxu0
    %v1715 = vadd.f32 %v1702, %v1714
    %v1716 = vpop.f32.mrf.mxu0
    %1717 = vdwg.mxu0
    %1718 = vmatpush.bf16.msra.mxu0 %v1367
    %1719 = vmatpush.bf16.msra.mxu0 %v1363
    %1720 = vmatpush.bf16.msra.mxu0 %v1359
    %1721 = vmatpush.bf16.msra.mxu0 %v1355
    %1722 = vmatpush.bf16.msra.mxu0 %v1351
    %1723 = vmatpush.bf16.msra.mxu0 %v1347
    %1724 = vmatpush.bf16.msra.mxu0 %v1343
    %1725 = vmatpush.bf16.msra.mxu0 %v1339
    %1726 = vmatmul.bf16.gmra.mxu0 %v80
    %v1727 = vpop.f32.mrf.mxu0
    %v1728 = vadd.f32 %v1715, %v1727
    %v1729 = vpop.f32.mrf.mxu0
    %1730 = vdwg.mxu0
    %1731 = vmatpush.bf16.msra.mxu0 %v1144
    %1732 = vmatpush.bf16.msra.mxu0 %v1140
    %1733 = vmatpush.bf16.msra.mxu0 %v1136
    %1734 = vmatpush.bf16.msra.mxu0 %v1132
    %1735 = vmatpush.bf16.msra.mxu0 %v1128
    %1736 = vmatpush.bf16.msra.mxu0 %v1124
    %1737 = vmatpush.bf16.msra.mxu0 %v1120
    %1738 = vmatpush.bf16.msra.mxu0 %v1116
    %1739 = vmatmul.bf16.gmra.mxu0 %v73
    %v1740 = vpop.f32.mrf.mxu0
    %v1741 = vadd.f32 %v340, %v1740
    %v1742 = vpop.f32.mrf.mxu0
    %1743 = vdwg.mxu0
    %1744 = vmatpush.bf16.msra.mxu0 %v1176
    %1745 = vmatpush.bf16.msra.mxu0 %v1172
    %1746 = vmatpush.bf16.msra.mxu0 %v1168
    %1747 = vmatpush.bf16.msra.mxu0 %v1164
    %1748 = vmatpush.bf16.msra.mxu0 %v1160
    %1749 = vmatpush.bf16.msra.mxu0 %v1156
    %1750 = vmatpush.bf16.msra.mxu0 %v1152
    %1751 = vmatpush.bf16.msra.mxu0 %v1148
    %1752 = vmatmul.bf16.gmra.mxu0 %v74
    %v1753 = vpop.f32.mrf.mxu0
    %v1754 = vadd.f32 %v1741, %v1753
    %v1755 = vpop.f32.mrf.mxu0
    %1756 = vdwg.mxu0
    %1757 = vmatpush.bf16.msra.mxu0 %v1208
    %1758 = vmatpush.bf16.msra.mxu0 %v1204
    %1759 = vmatpush.bf16.msra.mxu0 %v1200
    %1760 = vmatpush.bf16.msra.mxu0 %v1196
    %1761 = vmatpush.bf16.msra.mxu0 %v1192
    %1762 = vmatpush.bf16.msra.mxu0 %v1188
    %1763 = vmatpush.bf16.msra.mxu0 %v1184
    %1764 = vmatpush.bf16.msra.mxu0 %v1180
    %1765 = vmatmul.bf16.gmra.mxu0 %v75
    %v1766 = vpop.f32.mrf.mxu0
    %v1767 = vadd.f32 %v1754, %v1766
    %v1768 = vpop.f32.mrf.mxu0
    %1769 = vdwg.mxu0
    %1770 = vmatpush.bf16.msra.mxu0 %v1240
    %1771 = vmatpush.bf16.msra.mxu0 %v1236
    %1772 = vmatpush.bf16.msra.mxu0 %v1232
    %1773 = vmatpush.bf16.msra.mxu0 %v1228
    %1774 = vmatpush.bf16.msra.mxu0 %v1224
    %1775 = vmatpush.bf16.msra.mxu0 %v1220
    %1776 = vmatpush.bf16.msra.mxu0 %v1216
    %1777 = vmatpush.bf16.msra.mxu0 %v1212
    %1778 = vmatmul.bf16.gmra.mxu0 %v76
    %v1779 = vpop.f32.mrf.mxu0
    %v1780 = vadd.f32 %v1767, %v1779
    %v1781 = vpop.f32.mrf.mxu0
    %1782 = vdwg.mxu0
    %1783 = vmatpush.bf16.msra.mxu0 %v1272
    %1784 = vmatpush.bf16.msra.mxu0 %v1268
    %1785 = vmatpush.bf16.msra.mxu0 %v1264
    %1786 = vmatpush.bf16.msra.mxu0 %v1260
    %1787 = vmatpush.bf16.msra.mxu0 %v1256
    %1788 = vmatpush.bf16.msra.mxu0 %v1252
    %1789 = vmatpush.bf16.msra.mxu0 %v1248
    %1790 = vmatpush.bf16.msra.mxu0 %v1244
    %1791 = vmatmul.bf16.gmra.mxu0 %v77
    %v1792 = vpop.f32.mrf.mxu0
    %v1793 = vadd.f32 %v1780, %v1792
    %v1794 = vpop.f32.mrf.mxu0
    %1795 = vdwg.mxu0
    %1796 = vmatpush.bf16.msra.mxu0 %v1304
    %1797 = vmatpush.bf16.msra.mxu0 %v1300
    %1798 = vmatpush.bf16.msra.mxu0 %v1296
    %1799 = vmatpush.bf16.msra.mxu0 %v1292
    %1800 = vmatpush.bf16.msra.mxu0 %v1288
    %1801 = vmatpush.bf16.msra.mxu0 %v1284
    %1802 = vmatpush.bf16.msra.mxu0 %v1280
    %1803 = vmatpush.bf16.msra.mxu0 %v1276
    %1804 = vmatmul.bf16.gmra.mxu0 %v78
    %v1805 = vpop.f32.mrf.mxu0
    %v1806 = vadd.f32 %v1793, %v1805
    %v1807 = vpop.f32.mrf.mxu0
    %1808 = vdwg.mxu0
    %1809 = vmatpush.bf16.msra.mxu0 %v1336
    %1810 = vmatpush.bf16.msra.mxu0 %v1332
    %1811 = vmatpush.bf16.msra.mxu0 %v1328
    %1812 = vmatpush.bf16.msra.mxu0 %v1324
    %1813 = vmatpush.bf16.msra.mxu0 %v1320
    %1814 = vmatpush.bf16.msra.mxu0 %v1316
    %1815 = vmatpush.bf16.msra.mxu0 %v1312
    %1816 = vmatpush.bf16.msra.mxu0 %v1308
    %1817 = vmatmul.bf16.gmra.mxu0 %v79
    %v1818 = vpop.f32.mrf.mxu0
    %v1819 = vadd.f32 %v1806, %v1818
    %v1820 = vpop.f32.mrf.mxu0
    %1821 = vdwg.mxu0
    %1822 = vmatpush.bf16.msra.mxu0 %v1368
    %1823 = vmatpush.bf16.msra.mxu0 %v1364
    %1824 = vmatpush.bf16.msra.mxu0 %v1360
    %1825 = vmatpush.bf16.msra.mxu0 %v1356
    %1826 = vmatpush.bf16.msra.mxu0 %v1352
    %1827 = vmatpush.bf16.msra.mxu0 %v1348
    %1828 = vmatpush.bf16.msra.mxu0 %v1344
    %1829 = vmatpush.bf16.msra.mxu0 %v1340
    %1830 = vmatmul.bf16.gmra.mxu0 %v80
    %v1831 = vpop.f32.mrf.mxu0
    %v1832 = vadd.f32 %v1819, %v1831
    %v1833 = vpop.f32.mrf.mxu0
    %1834 = vdwg.mxu0
    %1835 = vmatpush.bf16.msra.mxu0 %v1145
    %1836 = vmatpush.bf16.msra.mxu0 %v1141
    %1837 = vmatpush.bf16.msra.mxu0 %v1137
    %1838 = vmatpush.bf16.msra.mxu0 %v1133
    %1839 = vmatpush.bf16.msra.mxu0 %v1129
    %1840 = vmatpush.bf16.msra.mxu0 %v1125
    %1841 = vmatpush.bf16.msra.mxu0 %v1121
    %1842 = vmatpush.bf16.msra.mxu0 %v1117
    %1843 = vmatmul.bf16.gmra.mxu0 %v73
    %v1844 = vpop.f32.mrf.mxu0
    %v1845 = vadd.f32 %v341, %v1844
    %v1846 = vpop.f32.mrf.mxu0
    %1847 = vdwg.mxu0
    %1848 = vmatpush.bf16.msra.mxu0 %v1177
    %1849 = vmatpush.bf16.msra.mxu0 %v1173
    %1850 = vmatpush.bf16.msra.mxu0 %v1169
    %1851 = vmatpush.bf16.msra.mxu0 %v1165
    %1852 = vmatpush.bf16.msra.mxu0 %v1161
    %1853 = vmatpush.bf16.msra.mxu0 %v1157
    %1854 = vmatpush.bf16.msra.mxu0 %v1153
    %1855 = vmatpush.bf16.msra.mxu0 %v1149
    %1856 = vmatmul.bf16.gmra.mxu0 %v74
    %v1857 = vpop.f32.mrf.mxu0
    %v1858 = vadd.f32 %v1845, %v1857
    %v1859 = vpop.f32.mrf.mxu0
    %1860 = vdwg.mxu0
    %1861 = vmatpush.bf16.msra.mxu0 %v1209
    %1862 = vmatpush.bf16.msra.mxu0 %v1205
    %1863 = vmatpush.bf16.msra.mxu0 %v1201
    %1864 = vmatpush.bf16.msra.mxu0 %v1197
    %1865 = vmatpush.bf16.msra.mxu0 %v1193
    %1866 = vmatpush.bf16.msra.mxu0 %v1189
    %1867 = vmatpush.bf16.msra.mxu0 %v1185
    %1868 = vmatpush.bf16.msra.mxu0 %v1181
    %1869 = vmatmul.bf16.gmra.mxu0 %v75
    %v1870 = vpop.f32.mrf.mxu0
    %v1871 = vadd.f32 %v1858, %v1870
    %v1872 = vpop.f32.mrf.mxu0
    %1873 = vdwg.mxu0
    %1874 = vmatpush.bf16.msra.mxu0 %v1241
    %1875 = vmatpush.bf16.msra.mxu0 %v1237
    %1876 = vmatpush.bf16.msra.mxu0 %v1233
    %1877 = vmatpush.bf16.msra.mxu0 %v1229
    %1878 = vmatpush.bf16.msra.mxu0 %v1225
    %1879 = vmatpush.bf16.msra.mxu0 %v1221
    %1880 = vmatpush.bf16.msra.mxu0 %v1217
    %1881 = vmatpush.bf16.msra.mxu0 %v1213
    %1882 = vmatmul.bf16.gmra.mxu0 %v76
    %v1883 = vpop.f32.mrf.mxu0
    %v1884 = vadd.f32 %v1871, %v1883
    %v1885 = vpop.f32.mrf.mxu0
    %1886 = vdwg.mxu0
    %1887 = vmatpush.bf16.msra.mxu0 %v1273
    %1888 = vmatpush.bf16.msra.mxu0 %v1269
    %1889 = vmatpush.bf16.msra.mxu0 %v1265
    %1890 = vmatpush.bf16.msra.mxu0 %v1261
    %1891 = vmatpush.bf16.msra.mxu0 %v1257
    %1892 = vmatpush.bf16.msra.mxu0 %v1253
    %1893 = vmatpush.bf16.msra.mxu0 %v1249
    %1894 = vmatpush.bf16.msra.mxu0 %v1245
    %1895 = vmatmul.bf16.gmra.mxu0 %v77
    %v1896 = vpop.f32.mrf.mxu0
    %v1897 = vadd.f32 %v1884, %v1896
    %v1898 = vpop.f32.mrf.mxu0
    %1899 = vdwg.mxu0
    %1900 = vmatpush.bf16.msra.mxu0 %v1305
    %1901 = vmatpush.bf16.msra.mxu0 %v1301
    %1902 = vmatpush.bf16.msra.mxu0 %v1297
    %1903 = vmatpush.bf16.msra.mxu0 %v1293
    %1904 = vmatpush.bf16.msra.mxu0 %v1289
    %1905 = vmatpush.bf16.msra.mxu0 %v1285
    %1906 = vmatpush.bf16.msra.mxu0 %v1281
    %1907 = vmatpush.bf16.msra.mxu0 %v1277
    %1908 = vmatmul.bf16.gmra.mxu0 %v78
    %v1909 = vpop.f32.mrf.mxu0
    %v1910 = vadd.f32 %v1897, %v1909
    %v1911 = vpop.f32.mrf.mxu0
    %1912 = vdwg.mxu0
    %1913 = vmatpush.bf16.msra.mxu0 %v1337
    %1914 = vmatpush.bf16.msra.mxu0 %v1333
    %1915 = vmatpush.bf16.msra.mxu0 %v1329
    %1916 = vmatpush.bf16.msra.mxu0 %v1325
    %1917 = vmatpush.bf16.msra.mxu0 %v1321
    %1918 = vmatpush.bf16.msra.mxu0 %v1317
    %1919 = vmatpush.bf16.msra.mxu0 %v1313
    %1920 = vmatpush.bf16.msra.mxu0 %v1309
    %1921 = vmatmul.bf16.gmra.mxu0 %v79
    %v1922 = vpop.f32.mrf.mxu0
    %v1923 = vadd.f32 %v1910, %v1922
    %v1924 = vpop.f32.mrf.mxu0
    %1925 = vdwg.mxu0
    %1926 = vmatpush.bf16.msra.mxu0 %v1369
    %1927 = vmatpush.bf16.msra.mxu0 %v1365
    %1928 = vmatpush.bf16.msra.mxu0 %v1361
    %1929 = vmatpush.bf16.msra.mxu0 %v1357
    %1930 = vmatpush.bf16.msra.mxu0 %v1353
    %1931 = vmatpush.bf16.msra.mxu0 %v1349
    %1932 = vmatpush.bf16.msra.mxu0 %v1345
    %1933 = vmatpush.bf16.msra.mxu0 %v1341
    %1934 = vmatmul.bf16.gmra.mxu0 %v80
    %v1935 = vpop.f32.mrf.mxu0
    %v1936 = vadd.f32 %v1923, %v1935
    %v1937 = vpop.f32.mrf.mxu0
    %1938 = vdwg.mxu0
    %1939 = vmatpush.bf16.msra.mxu0 %v1146
    %1940 = vmatpush.bf16.msra.mxu0 %v1142
    %1941 = vmatpush.bf16.msra.mxu0 %v1138
    %1942 = vmatpush.bf16.msra.mxu0 %v1134
    %1943 = vmatpush.bf16.msra.mxu0 %v1130
    %1944 = vmatpush.bf16.msra.mxu0 %v1126
    %1945 = vmatpush.bf16.msra.mxu0 %v1122
    %1946 = vmatpush.bf16.msra.mxu0 %v1118
    %1947 = vmatmul.bf16.gmra.mxu0 %v73
    %v1948 = vpop.f32.mrf.mxu0
    %v1949 = vadd.f32 %v342, %v1948
    %v1950 = vpop.f32.mrf.mxu0
    %1951 = vdwg.mxu0
    %1952 = vmatpush.bf16.msra.mxu0 %v1178
    %1953 = vmatpush.bf16.msra.mxu0 %v1174
    %1954 = vmatpush.bf16.msra.mxu0 %v1170
    %1955 = vmatpush.bf16.msra.mxu0 %v1166
    %1956 = vmatpush.bf16.msra.mxu0 %v1162
    %1957 = vmatpush.bf16.msra.mxu0 %v1158
    %1958 = vmatpush.bf16.msra.mxu0 %v1154
    %1959 = vmatpush.bf16.msra.mxu0 %v1150
    %1960 = vmatmul.bf16.gmra.mxu0 %v74
    %v1961 = vpop.f32.mrf.mxu0
    %v1962 = vadd.f32 %v1949, %v1961
    %v1963 = vpop.f32.mrf.mxu0
    %1964 = vdwg.mxu0
    %1965 = vmatpush.bf16.msra.mxu0 %v1210
    %1966 = vmatpush.bf16.msra.mxu0 %v1206
    %1967 = vmatpush.bf16.msra.mxu0 %v1202
    %1968 = vmatpush.bf16.msra.mxu0 %v1198
    %1969 = vmatpush.bf16.msra.mxu0 %v1194
    %1970 = vmatpush.bf16.msra.mxu0 %v1190
    %1971 = vmatpush.bf16.msra.mxu0 %v1186
    %1972 = vmatpush.bf16.msra.mxu0 %v1182
    %1973 = vmatmul.bf16.gmra.mxu0 %v75
    %v1974 = vpop.f32.mrf.mxu0
    %v1975 = vadd.f32 %v1962, %v1974
    %v1976 = vpop.f32.mrf.mxu0
    %1977 = vdwg.mxu0
    %1978 = vmatpush.bf16.msra.mxu0 %v1242
    %1979 = vmatpush.bf16.msra.mxu0 %v1238
    %1980 = vmatpush.bf16.msra.mxu0 %v1234
    %1981 = vmatpush.bf16.msra.mxu0 %v1230
    %1982 = vmatpush.bf16.msra.mxu0 %v1226
    %1983 = vmatpush.bf16.msra.mxu0 %v1222
    %1984 = vmatpush.bf16.msra.mxu0 %v1218
    %1985 = vmatpush.bf16.msra.mxu0 %v1214
    %1986 = vmatmul.bf16.gmra.mxu0 %v76
    %v1987 = vpop.f32.mrf.mxu0
    %v1988 = vadd.f32 %v1975, %v1987
    %v1989 = vpop.f32.mrf.mxu0
    %1990 = vdwg.mxu0
    %1991 = vmatpush.bf16.msra.mxu0 %v1274
    %1992 = vmatpush.bf16.msra.mxu0 %v1270
    %1993 = vmatpush.bf16.msra.mxu0 %v1266
    %1994 = vmatpush.bf16.msra.mxu0 %v1262
    %1995 = vmatpush.bf16.msra.mxu0 %v1258
    %1996 = vmatpush.bf16.msra.mxu0 %v1254
    %1997 = vmatpush.bf16.msra.mxu0 %v1250
    %1998 = vmatpush.bf16.msra.mxu0 %v1246
    %1999 = vmatmul.bf16.gmra.mxu0 %v77
    %v2000 = vpop.f32.mrf.mxu0
    %v2001 = vadd.f32 %v1988, %v2000
    %v2002 = vpop.f32.mrf.mxu0
    %2003 = vdwg.mxu0
    %2004 = vmatpush.bf16.msra.mxu0 %v1306
    %2005 = vmatpush.bf16.msra.mxu0 %v1302
    %2006 = vmatpush.bf16.msra.mxu0 %v1298
    %2007 = vmatpush.bf16.msra.mxu0 %v1294
    %2008 = vmatpush.bf16.msra.mxu0 %v1290
    %2009 = vmatpush.bf16.msra.mxu0 %v1286
    %2010 = vmatpush.bf16.msra.mxu0 %v1282
    %2011 = vmatpush.bf16.msra.mxu0 %v1278
    %2012 = vmatmul.bf16.gmra.mxu0 %v78
    %v2013 = vpop.f32.mrf.mxu0
    %v2014 = vadd.f32 %v2001, %v2013
    %v2015 = vpop.f32.mrf.mxu0
    %2016 = vdwg.mxu0
    %2017 = vmatpush.bf16.msra.mxu0 %v1338
    %2018 = vmatpush.bf16.msra.mxu0 %v1334
    %2019 = vmatpush.bf16.msra.mxu0 %v1330
    %2020 = vmatpush.bf16.msra.mxu0 %v1326
    %2021 = vmatpush.bf16.msra.mxu0 %v1322
    %2022 = vmatpush.bf16.msra.mxu0 %v1318
    %2023 = vmatpush.bf16.msra.mxu0 %v1314
    %2024 = vmatpush.bf16.msra.mxu0 %v1310
    %2025 = vmatmul.bf16.gmra.mxu0 %v79
    %v2026 = vpop.f32.mrf.mxu0
    %v2027 = vadd.f32 %v2014, %v2026
    %v2028 = vpop.f32.mrf.mxu0
    %2029 = vdwg.mxu0
    %2030 = vmatpush.bf16.msra.mxu0 %v1370
    %2031 = vmatpush.bf16.msra.mxu0 %v1366
    %2032 = vmatpush.bf16.msra.mxu0 %v1362
    %2033 = vmatpush.bf16.msra.mxu0 %v1358
    %2034 = vmatpush.bf16.msra.mxu0 %v1354
    %2035 = vmatpush.bf16.msra.mxu0 %v1350
    %2036 = vmatpush.bf16.msra.mxu0 %v1346
    %2037 = vmatpush.bf16.msra.mxu0 %v1342
    %2038 = vmatmul.bf16.gmra.mxu0 %v80
    %v2039 = vpop.f32.mrf.mxu0
    %v2040 = vadd.f32 %v2027, %v2039
    %v2041 = vpop.f32.mrf.mxu0
    %2042 = vdwg.mxu0
    %v2043 = vmax.f32 %v1728, 0.0
    %v2044 = vmax.f32 %v1832, 0.0
    %v2045 = vmax.f32 %v1936, 0.0
    %v2046 = vmax.f32 %v2040, 0.0
    %v2047 = vpack.c.bf16 %v2043, %v2043
    %v2048 = vpack.c.bf16 %v2044, %v2044
    %v2049 = vpack.c.bf16 %v2045, %v2045
    %v2050 = vpack.c.bf16 %v2046, %v2046
    %v2051 = vld [vmem:[%s3] sm:$0xff]
    %v2052 = vld [vmem:[%s3 + $0x8] sm:$0xff]
    %v2053 = vld [vmem:[%s3 + $0x10] sm:$0xff]
    %v2054 = vld [vmem:[%s3 + $0x18] sm:$0xff]
    %v2055 = vld [vmem:[%s3 + $0x20] sm:$0xff]
    %v2056 = vld [vmem:[%s3 + $0x28] sm:$0xff]
    %v2057 = vld [vmem:[%s3 + $0x30] sm:$0xff]
    %v2058 = vld [vmem:[%s3 + $0x38] sm:$0xff]
    %v2059 = vld [vmem:[%s3 + $0x40] sm:$0xff]
    %v2060 = vld [vmem:[%s3 + $0x48] sm:$0xff]
    %v2061 = vld [vmem:[%s3 + $0x50] sm:$0xff]
    %v2062 = vld [vmem:[%s3 + $0x58] sm:$0xff]
    %v2063 = vld [vmem:[%s3 + $0x60] sm:$0xff]
    %v2064 = vld [vmem:[%s3 + $0x68] sm:$0xff]
    %v2065 = vld [vmem:[%s3 + $0x70] sm:$0xff]
    %v2066 = vld [vmem:[%s3 + $0x78] sm:$0xff]
    %v2067 = vld [vmem:[%s3 + $0x80] sm:$0xff]
    %v2068 = vld [vmem:[%s3 + $0x88] sm:$0xff]
    %v2069 = vld [vmem:[%s3 + $0x90] sm:$0xff]
    %v2070 = vld [vmem:[%s3 + $0x98] sm:$0xff]
    %v2071 = vld [vmem:[%s3 + $0xa0] sm:$0xff]
    %v2072 = vld [vmem:[%s3 + $0xa8] sm:$0xff]
    %v2073 = vld [vmem:[%s3 + $0xb0] sm:$0xff]
    %v2074 = vld [vmem:[%s3 + $0xb8] sm:$0xff]
    %v2075 = vld [vmem:[%s3 + $0xc0] sm:$0xff]
    %v2076 = vld [vmem:[%s3 + $0xc8] sm:$0xff]
    %v2077 = vld [vmem:[%s3 + $0xd0] sm:$0xff]
    %v2078 = vld [vmem:[%s3 + $0xd8] sm:$0xff]
    %v2079 = vld [vmem:[%s3 + $0xe0] sm:$0xff]
    %v2080 = vld [vmem:[%s3 + $0xe8] sm:$0xff]
    %v2081 = vld [vmem:[%s3 + $0xf0] sm:$0xff]
    %v2082 = vld [vmem:[%s3 + $0xf8] sm:$0xff]
    %v2083 = vld [vmem:[%s3 + $0x100] sm:$0xff]
    %v2084 = vld [vmem:[%s3 + $0x108] sm:$0xff]
    %v2085 = vld [vmem:[%s3 + $0x110] sm:$0xff]
    %v2086 = vld [vmem:[%s3 + $0x118] sm:$0xff]
    %v2087 = vld [vmem:[%s3 + $0x120] sm:$0xff]
    %v2088 = vld [vmem:[%s3 + $0x128] sm:$0xff]
    %v2089 = vld [vmem:[%s3 + $0x130] sm:$0xff]
    %v2090 = vld [vmem:[%s3 + $0x138] sm:$0xff]
    %v2091 = vld [vmem:[%s3 + $0x140] sm:$0xff]
    %v2092 = vld [vmem:[%s3 + $0x148] sm:$0xff]
    %v2093 = vld [vmem:[%s3 + $0x150] sm:$0xff]
    %v2094 = vld [vmem:[%s3 + $0x158] sm:$0xff]
    %v2095 = vld [vmem:[%s3 + $0x160] sm:$0xff]
    %v2096 = vld [vmem:[%s3 + $0x168] sm:$0xff]
    %v2097 = vld [vmem:[%s3 + $0x170] sm:$0xff]
    %v2098 = vld [vmem:[%s3 + $0x178] sm:$0xff]
    %v2099 = vld [vmem:[%s3 + $0x180] sm:$0xff]
    %v2100 = vld [vmem:[%s3 + $0x188] sm:$0xff]
    %v2101 = vld [vmem:[%s3 + $0x190] sm:$0xff]
    %v2102 = vld [vmem:[%s3 + $0x198] sm:$0xff]
    %v2103 = vld [vmem:[%s3 + $0x1a0] sm:$0xff]
    %v2104 = vld [vmem:[%s3 + $0x1a8] sm:$0xff]
    %v2105 = vld [vmem:[%s3 + $0x1b0] sm:$0xff]
    %v2106 = vld [vmem:[%s3 + $0x1b8] sm:$0xff]
    %v2107 = vld [vmem:[%s3 + $0x1c0] sm:$0xff]
    %v2108 = vld [vmem:[%s3 + $0x1c8] sm:$0xff]
    %v2109 = vld [vmem:[%s3 + $0x1d0] sm:$0xff]
    %v2110 = vld [vmem:[%s3 + $0x1d8] sm:$0xff]
    %v2111 = vld [vmem:[%s3 + $0x1e0] sm:$0xff]
    %v2112 = vld [vmem:[%s3 + $0x1e8] sm:$0xff]
    %v2113 = vld [vmem:[%s3 + $0x1f0] sm:$0xff]
    %v2114 = vld [vmem:[%s3 + $0x1f8] sm:$0xff]
    %v2115 = vld [vmem:[%s4] sm:$0x3]
    %v2117 = vperm.slane %v2115, 0
    %v2118 = vperm.slane %v2115, 1
    %v2185 = vunpack.c.l.b16 %v2051
    %v2186 = vunpack.c.h.b16 %v2051
    %v2187 = vunpack.c.l.b16 %v2052
    %v2188 = vunpack.c.h.b16 %v2052
    %v2189 = vunpack.c.l.b16 %v2053
    %v2190 = vunpack.c.h.b16 %v2053
    %v2191 = vunpack.c.l.b16 %v2054
    %v2192 = vunpack.c.h.b16 %v2054
    %v2193 = vunpack.c.l.b16 %v2055
    %v2194 = vunpack.c.h.b16 %v2055
    %v2195 = vunpack.c.l.b16 %v2056
    %v2196 = vunpack.c.h.b16 %v2056
    %v2197 = vunpack.c.l.b16 %v2057
    %v2198 = vunpack.c.h.b16 %v2057
    %v2199 = vunpack.c.l.b16 %v2058
    %v2200 = vunpack.c.h.b16 %v2058
    %v2201 = vunpack.c.l.b16 %v2059
    %v2202 = vunpack.c.h.b16 %v2059
    %v2203 = vunpack.c.l.b16 %v2060
    %v2204 = vunpack.c.h.b16 %v2060
    %v2205 = vunpack.c.l.b16 %v2061
    %v2206 = vunpack.c.h.b16 %v2061
    %v2207 = vunpack.c.l.b16 %v2062
    %v2208 = vunpack.c.h.b16 %v2062
    %v2209 = vunpack.c.l.b16 %v2063
    %v2210 = vunpack.c.h.b16 %v2063
    %v2211 = vunpack.c.l.b16 %v2064
    %v2212 = vunpack.c.h.b16 %v2064
    %v2213 = vunpack.c.l.b16 %v2065
    %v2214 = vunpack.c.h.b16 %v2065
    %v2215 = vunpack.c.l.b16 %v2066
    %v2216 = vunpack.c.h.b16 %v2066
    %v2217 = vunpack.c.l.b16 %v2067
    %v2218 = vunpack.c.h.b16 %v2067
    %v2219 = vunpack.c.l.b16 %v2068
    %v2220 = vunpack.c.h.b16 %v2068
    %v2221 = vunpack.c.l.b16 %v2069
    %v2222 = vunpack.c.h.b16 %v2069
    %v2223 = vunpack.c.l.b16 %v2070
    %v2224 = vunpack.c.h.b16 %v2070
    %v2225 = vunpack.c.l.b16 %v2071
    %v2226 = vunpack.c.h.b16 %v2071
    %v2227 = vunpack.c.l.b16 %v2072
    %v2228 = vunpack.c.h.b16 %v2072
    %v2229 = vunpack.c.l.b16 %v2073
    %v2230 = vunpack.c.h.b16 %v2073
    %v2231 = vunpack.c.l.b16 %v2074
    %v2232 = vunpack.c.h.b16 %v2074
    %v2233 = vunpack.c.l.b16 %v2075
    %v2234 = vunpack.c.h.b16 %v2075
    %v2235 = vunpack.c.l.b16 %v2076
    %v2236 = vunpack.c.h.b16 %v2076
    %v2237 = vunpack.c.l.b16 %v2077
    %v2238 = vunpack.c.h.b16 %v2077
    %v2239 = vunpack.c.l.b16 %v2078
    %v2240 = vunpack.c.h.b16 %v2078
    %v2241 = vunpack.c.l.b16 %v2079
    %v2242 = vunpack.c.h.b16 %v2079
    %v2243 = vunpack.c.l.b16 %v2080
    %v2244 = vunpack.c.h.b16 %v2080
    %v2245 = vunpack.c.l.b16 %v2081
    %v2246 = vunpack.c.h.b16 %v2081
    %v2247 = vunpack.c.l.b16 %v2082
    %v2248 = vunpack.c.h.b16 %v2082
    %v2249 = vunpack.c.l.b16 %v2083
    %v2250 = vunpack.c.h.b16 %v2083
    %v2251 = vunpack.c.l.b16 %v2084
    %v2252 = vunpack.c.h.b16 %v2084
    %v2253 = vunpack.c.l.b16 %v2085
    %v2254 = vunpack.c.h.b16 %v2085
    %v2255 = vunpack.c.l.b16 %v2086
    %v2256 = vunpack.c.h.b16 %v2086
    %v2257 = vunpack.c.l.b16 %v2087
    %v2258 = vunpack.c.h.b16 %v2087
    %v2259 = vunpack.c.l.b16 %v2088
    %v2260 = vunpack.c.h.b16 %v2088
    %v2261 = vunpack.c.l.b16 %v2089
    %v2262 = vunpack.c.h.b16 %v2089
    %v2263 = vunpack.c.l.b16 %v2090
    %v2264 = vunpack.c.h.b16 %v2090
    %v2265 = vunpack.c.l.b16 %v2091
    %v2266 = vunpack.c.h.b16 %v2091
    %v2267 = vunpack.c.l.b16 %v2092
    %v2268 = vunpack.c.h.b16 %v2092
    %v2269 = vunpack.c.l.b16 %v2093
    %v2270 = vunpack.c.h.b16 %v2093
    %v2271 = vunpack.c.l.b16 %v2094
    %v2272 = vunpack.c.h.b16 %v2094
    %v2273 = vunpack.c.l.b16 %v2095
    %v2274 = vunpack.c.h.b16 %v2095
    %v2275 = vunpack.c.l.b16 %v2096
    %v2276 = vunpack.c.h.b16 %v2096
    %v2277 = vunpack.c.l.b16 %v2097
    %v2278 = vunpack.c.h.b16 %v2097
    %v2279 = vunpack.c.l.b16 %v2098
    %v2280 = vunpack.c.h.b16 %v2098
    %v2281 = vunpack.c.l.b16 %v2099
    %v2282 = vunpack.c.h.b16 %v2099
    %v2283 = vunpack.c.l.b16 %v2100
    %v2284 = vunpack.c.h.b16 %v2100
    %v2285 = vunpack.c.l.b16 %v2101
    %v2286 = vunpack.c.h.b16 %v2101
    %v2287 = vunpack.c.l.b16 %v2102
    %v2288 = vunpack.c.h.b16 %v2102
    %v2289 = vunpack.c.l.b16 %v2103
    %v2290 = vunpack.c.h.b16 %v2103
    %v2291 = vunpack.c.l.b16 %v2104
    %v2292 = vunpack.c.h.b16 %v2104
    %v2293 = vunpack.c.l.b16 %v2105
    %v2294 = vunpack.c.h.b16 %v2105
    %v2295 = vunpack.c.l.b16 %v2106
    %v2296 = vunpack.c.h.b16 %v2106
    %v2297 = vunpack.c.l.b16 %v2107
    %v2298 = vunpack.c.h.b16 %v2107
    %v2299 = vunpack.c.l.b16 %v2108
    %v2300 = vunpack.c.h.b16 %v2108
    %v2301 = vunpack.c.l.b16 %v2109
    %v2302 = vunpack.c.h.b16 %v2109
    %v2303 = vunpack.c.l.b16 %v2110
    %v2304 = vunpack.c.h.b16 %v2110
    %v2305 = vunpack.c.l.b16 %v2111
    %v2306 = vunpack.c.h.b16 %v2111
    %v2307 = vunpack.c.l.b16 %v2112
    %v2308 = vunpack.c.h.b16 %v2112
    %v2309 = vunpack.c.l.b16 %v2113
    %v2310 = vunpack.c.h.b16 %v2113
    %v2311 = vunpack.c.l.b16 %v2114
    %v2312 = vunpack.c.h.b16 %v2114
    %v2313 = vpack.c.b16 %v2187, %v2185
    %v2314 = vpack.c.b16 %v2188, %v2186
    %v2315 = vpack.c.b16 %v2191, %v2189
    %v2316 = vpack.c.b16 %v2192, %v2190
    %v2317 = vpack.c.b16 %v2195, %v2193
    %v2318 = vpack.c.b16 %v2196, %v2194
    %v2319 = vpack.c.b16 %v2199, %v2197
    %v2320 = vpack.c.b16 %v2200, %v2198
    %v2321 = vpack.c.b16 %v2203, %v2201
    %v2322 = vpack.c.b16 %v2204, %v2202
    %v2323 = vpack.c.b16 %v2207, %v2205
    %v2324 = vpack.c.b16 %v2208, %v2206
    %v2325 = vpack.c.b16 %v2211, %v2209
    %v2326 = vpack.c.b16 %v2212, %v2210
    %v2327 = vpack.c.b16 %v2215, %v2213
    %v2328 = vpack.c.b16 %v2216, %v2214
    %v2329 = vpack.c.b16 %v2219, %v2217
    %v2330 = vpack.c.b16 %v2220, %v2218
    %v2331 = vpack.c.b16 %v2223, %v2221
    %v2332 = vpack.c.b16 %v2224, %v2222
    %v2333 = vpack.c.b16 %v2227, %v2225
    %v2334 = vpack.c.b16 %v2228, %v2226
    %v2335 = vpack.c.b16 %v2231, %v2229
    %v2336 = vpack.c.b16 %v2232, %v2230
    %v2337 = vpack.c.b16 %v2235, %v2233
    %v2338 = vpack.c.b16 %v2236, %v2234
    %v2339 = vpack.c.b16 %v2239, %v2237
    %v2340 = vpack.c.b16 %v2240, %v2238
    %v2341 = vpack.c.b16 %v2243, %v2241
    %v2342 = vpack.c.b16 %v2244, %v2242
    %v2343 = vpack.c.b16 %v2247, %v2245
    %v2344 = vpack.c.b16 %v2248, %v2246
    %v2345 = vpack.c.b16 %v2251, %v2249
    %v2346 = vpack.c.b16 %v2252, %v2250
    %v2347 = vpack.c.b16 %v2255, %v2253
    %v2348 = vpack.c.b16 %v2256, %v2254
    %v2349 = vpack.c.b16 %v2259, %v2257
    %v2350 = vpack.c.b16 %v2260, %v2258
    %v2351 = vpack.c.b16 %v2263, %v2261
    %v2352 = vpack.c.b16 %v2264, %v2262
    %v2353 = vpack.c.b16 %v2267, %v2265
    %v2354 = vpack.c.b16 %v2268, %v2266
    %v2355 = vpack.c.b16 %v2271, %v2269
    %v2356 = vpack.c.b16 %v2272, %v2270
    %v2357 = vpack.c.b16 %v2275, %v2273
    %v2358 = vpack.c.b16 %v2276, %v2274
    %v2359 = vpack.c.b16 %v2279, %v2277
    %v2360 = vpack.c.b16 %v2280, %v2278
    %v2361 = vpack.c.b16 %v2283, %v2281
    %v2362 = vpack.c.b16 %v2284, %v2282
    %v2363 = vpack.c.b16 %v2287, %v2285
    %v2364 = vpack.c.b16 %v2288, %v2286
    %v2365 = vpack.c.b16 %v2291, %v2289
    %v2366 = vpack.c.b16 %v2292, %v2290
    %v2367 = vpack.c.b16 %v2295, %v2293
    %v2368 = vpack.c.b16 %v2296, %v2294
    %v2369 = vpack.c.b16 %v2299, %v2297
    %v2370 = vpack.c.b16 %v2300, %v2298
    %v2371 = vpack.c.b16 %v2303, %v2301
    %v2372 = vpack.c.b16 %v2304, %v2302
    %v2373 = vpack.c.b16 %v2307, %v2305
    %v2374 = vpack.c.b16 %v2308, %v2306
    %v2375 = vpack.c.b16 %v2311, %v2309
    %v2376 = vpack.c.b16 %v2312, %v2310
    %2441 = vmatpush.bf16.msra.mxu0 %v2327
    %2442 = vmatpush.bf16.msra.mxu0 %v2325
    %2443 = vmatpush.bf16.msra.mxu0 %v2323
    %2444 = vmatpush.bf16.msra.mxu0 %v2321
    %2445 = vmatpush.bf16.msra.mxu0 %v2319
    %2446 = vmatpush.bf16.msra.mxu0 %v2317
    %2447 = vmatpush.bf16.msra.mxu0 %v2315
    %2448 = vmatpush.bf16.msra.mxu0 %v2313
    %2449 = vmatmul.bf16.gmra.mxu0 %v2047
    %v2450 = vpop.f32.mrf.mxu0
    %v2451 = vadd.f32 %v2117, %v2450
    %v2452 = vpop.f32.mrf.mxu0
    %2453 = vdwg.mxu0
    %2454 = vmatpush.bf16.msra.mxu0 %v2343
    %2455 = vmatpush.bf16.msra.mxu0 %v2341
    %2456 = vmatpush.bf16.msra.mxu0 %v2339
    %2457 = vmatpush.bf16.msra.mxu0 %v2337
    %2458 = vmatpush.bf16.msra.mxu0 %v2335
    %2459 = vmatpush.bf16.msra.mxu0 %v2333
    %2460 = vmatpush.bf16.msra.mxu0 %v2331
    %2461 = vmatpush.bf16.msra.mxu0 %v2329
    %2462 = vmatmul.bf16.gmra.mxu0 %v2048
    %v2463 = vpop.f32.mrf.mxu0
    %v2464 = vadd.f32 %v2451, %v2463
    %v2465 = vpop.f32.mrf.mxu0
    %2466 = vdwg.mxu0
    %2467 = vmatpush.bf16.msra.mxu0 %v2359
    %2468 = vmatpush.bf16.msra.mxu0 %v2357
    %2469 = vmatpush.bf16.msra.mxu0 %v2355
    %2470 = vmatpush.bf16.msra.mxu0 %v2353
    %2471 = vmatpush.bf16.msra.mxu0 %v2351
    %2472 = vmatpush.bf16.msra.mxu0 %v2349
    %2473 = vmatpush.bf16.msra.mxu0 %v2347
    %2474 = vmatpush.bf16.msra.mxu0 %v2345
    %2475 = vmatmul.bf16.gmra.mxu0 %v2049
    %v2476 = vpop.f32.mrf.mxu0
    %v2477 = vadd.f32 %v2464, %v2476
    %v2478 = vpop.f32.mrf.mxu0
    %2479 = vdwg.mxu0
    %2480 = vmatpush.bf16.msra.mxu0 %v2375
    %2481 = vmatpush.bf16.msra.mxu0 %v2373
    %2482 = vmatpush.bf16.msra.mxu0 %v2371
    %2483 = vmatpush.bf16.msra.mxu0 %v2369
    %2484 = vmatpush.bf16.msra.mxu0 %v2367
    %2485 = vmatpush.bf16.msra.mxu0 %v2365
    %2486 = vmatpush.bf16.msra.mxu0 %v2363
    %2487 = vmatpush.bf16.msra.mxu0 %v2361
    %2488 = vmatmul.bf16.gmra.mxu0 %v2050
    %v2489 = vpop.f32.mrf.mxu0
    %v2490 = vadd.f32 %v2477, %v2489
    %v2491 = vpop.f32.mrf.mxu0
    %2492 = vdwg.mxu0
    %2493 = vmatpush.bf16.msra.mxu0 %v2328
    %2494 = vmatpush.bf16.msra.mxu0 %v2326
    %2495 = vmatpush.bf16.msra.mxu0 %v2324
    %2496 = vmatpush.bf16.msra.mxu0 %v2322
    %2497 = vmatpush.bf16.msra.mxu0 %v2320
    %2498 = vmatpush.bf16.msra.mxu0 %v2318
    %2499 = vmatpush.bf16.msra.mxu0 %v2316
    %2500 = vmatpush.bf16.msra.mxu0 %v2314
    %2501 = vmatmul.bf16.gmra.mxu0 %v2047
    %v2502 = vpop.f32.mrf.mxu0
    %v2503 = vadd.f32 %v2118, %v2502
    %v2504 = vpop.f32.mrf.mxu0
    %2505 = vdwg.mxu0
    %2506 = vmatpush.bf16.msra.mxu0 %v2344
    %2507 = vmatpush.bf16.msra.mxu0 %v2342
    %2508 = vmatpush.bf16.msra.mxu0 %v2340
    %2509 = vmatpush.bf16.msra.mxu0 %v2338
    %2510 = vmatpush.bf16.msra.mxu0 %v2336
    %2511 = vmatpush.bf16.msra.mxu0 %v2334
    %2512 = vmatpush.bf16.msra.mxu0 %v2332
    %2513 = vmatpush.bf16.msra.mxu0 %v2330
    %2514 = vmatmul.bf16.gmra.mxu0 %v2048
    %v2515 = vpop.f32.mrf.mxu0
    %v2516 = vadd.f32 %v2503, %v2515
    %v2517 = vpop.f32.mrf.mxu0
    %2518 = vdwg.mxu0
    %2519 = vmatpush.bf16.msra.mxu0 %v2360
    %2520 = vmatpush.bf16.msra.mxu0 %v2358
    %2521 = vmatpush.bf16.msra.mxu0 %v2356
    %2522 = vmatpush.bf16.msra.mxu0 %v2354
    %2523 = vmatpush.bf16.msra.mxu0 %v2352
    %2524 = vmatpush.bf16.msra.mxu0 %v2350
    %2525 = vmatpush.bf16.msra.mxu0 %v2348
    %2526 = vmatpush.bf16.msra.mxu0 %v2346
    %2527 = vmatmul.bf16.gmra.mxu0 %v2049
    %v2528 = vpop.f32.mrf.mxu0
    %v2529 = vadd.f32 %v2516, %v2528
    %v2530 = vpop.f32.mrf.mxu0
    %2531 = vdwg.mxu0
    %2532 = vmatpush.bf16.msra.mxu0 %v2376
    %2533 = vmatpush.bf16.msra.mxu0 %v2374
    %2534 = vmatpush.bf16.msra.mxu0 %v2372
    %2535 = vmatpush.bf16.msra.mxu0 %v2370
    %2536 = vmatpush.bf16.msra.mxu0 %v2368
    %2537 = vmatpush.bf16.msra.mxu0 %v2366
    %2538 = vmatpush.bf16.msra.mxu0 %v2364
    %2539 = vmatpush.bf16.msra.mxu0 %v2362
    %2540 = vmatmul.bf16.gmra.mxu0 %v2050
    %v2541 = vpop.f32.mrf.mxu0
    %v2542 = vadd.f32 %v2529, %v2541
    %v2543 = vpop.f32.mrf.mxu0
    %2544 = vdwg.mxu0
    %v2545 = vmax.f32 %v2490, 0.0
    %v2546 = vmax.f32 %v2542, 0.0
    %v2547 = vld [vmem:[%s5] sm:$0xff]
    %v2548 = vld [vmem:[%s5 + $0x8] sm:$0xff]
    %v2549 = vld [vmem:[%s5 + $0x10] sm:$0xff]
    %v2550 = vld [vmem:[%s5 + $0x18] sm:$0xff]
    %v2551 = vld [vmem:[%s5 + $0x20] sm:$0xff]
    %v2552 = vld [vmem:[%s5 + $0x28] sm:$0xff]
    %v2553 = vld [vmem:[%s5 + $0x30] sm:$0xff]
    %v2554 = vld [vmem:[%s5 + $0x38] sm:$0xff]
    %v2555 = vld [vmem:[%s5 + $0x40] sm:$0xff]
    %v2556 = vld [vmem:[%s5 + $0x48] sm:$0xff]
    %v2557 = vld [vmem:[%s5 + $0x50] sm:$0xff]
    %v2558 = vld [vmem:[%s5 + $0x58] sm:$0xff]
    %v2559 = vld [vmem:[%s5 + $0x60] sm:$0xff]
    %v2560 = vld [vmem:[%s5 + $0x68] sm:$0xff]
    %v2561 = vld [vmem:[%s5 + $0x70] sm:$0xff]
    %v2562 = vld [vmem:[%s5 + $0x78] sm:$0xff]
    %v2563 = vld [vmem:[%s5 + $0x80] sm:$0xff]
    %v2564 = vld [vmem:[%s5 + $0x88] sm:$0xff]
    %v2565 = vld [vmem:[%s5 + $0x90] sm:$0xff]
    %v2566 = vld [vmem:[%s5 + $0x98] sm:$0xff]
    %v2567 = vld [vmem:[%s5 + $0xa0] sm:$0xff]
    %v2568 = vld [vmem:[%s5 + $0xa8] sm:$0xff]
    %v2569 = vld [vmem:[%s5 + $0xb0] sm:$0xff]
    %v2570 = vld [vmem:[%s5 + $0xb8] sm:$0xff]
    %v2571 = vld [vmem:[%s5 + $0xc0] sm:$0xff]
    %v2572 = vld [vmem:[%s5 + $0xc8] sm:$0xff]
    %v2573 = vld [vmem:[%s5 + $0xd0] sm:$0xff]
    %v2574 = vld [vmem:[%s5 + $0xd8] sm:$0xff]
    %v2575 = vld [vmem:[%s5 + $0xe0] sm:$0xff]
    %v2576 = vld [vmem:[%s5 + $0xe8] sm:$0xff]
    %v2577 = vld [vmem:[%s5 + $0xf0] sm:$0xff]
    %v2578 = vld [vmem:[%s5 + $0xf8] sm:$0xff]
    %v2579 = vld [vmem:[%s6] sm:$0x1]
    %v2581 = vperm.slane %v2579, 0
    %2583 = vmatpush.msra.mxu0 %v2562
    %2584 = vmatpush.msra.mxu0 %v2561
    %2585 = vmatpush.msra.mxu0 %v2560
    %2586 = vmatpush.msra.mxu0 %v2559
    %2587 = vmatpush.msra.mxu0 %v2558
    %2588 = vmatpush.msra.mxu0 %v2557
    %2589 = vmatpush.msra.mxu0 %v2556
    %2590 = vmatpush.msra.mxu0 %v2555
    %2591 = vmatpush.msra.mxu0 %v2554
    %2592 = vmatpush.msra.mxu0 %v2553
    %2593 = vmatpush.msra.mxu0 %v2552
    %2594 = vmatpush.msra.mxu0 %v2551
    %2595 = vmatpush.msra.mxu0 %v2550
    %2596 = vmatpush.msra.mxu0 %v2549
    %2597 = vmatpush.msra.mxu0 %v2548
    %2598 = vmatpush.msra.mxu0 %v2547
    %2599 = vmatmul.f32.gmra.mxu0 %v2545
    %v2600 = vpop.f32.mrf.mxu0
    %v2601 = vadd.f32 %v2581, %v2600
    %2602 = vdwg.mxu0
    %2603 = vmatpush.msra.mxu0 %v2578
    %2604 = vmatpush.msra.mxu0 %v2577
    %2605 = vmatpush.msra.mxu0 %v2576
    %2606 = vmatpush.msra.mxu0 %v2575
    %2607 = vmatpush.msra.mxu0 %v2574
    %2608 = vmatpush.msra.mxu0 %v2573
    %2609 = vmatpush.msra.mxu0 %v2572
    %2610 = vmatpush.msra.mxu0 %v2571
    %2611 = vmatpush.msra.mxu0 %v2570
    %2612 = vmatpush.msra.mxu0 %v2569
    %2613 = vmatpush.msra.mxu0 %v2568
    %2614 = vmatpush.msra.mxu0 %v2567
    %2615 = vmatpush.msra.mxu0 %v2566
    %2616 = vmatpush.msra.mxu0 %v2565
    %2617 = vmatpush.msra.mxu0 %v2564
    %2618 = vmatpush.msra.mxu0 %v2563
    %2619 = vmatmul.f32.gmra.mxu0 %v2546
    %v2620 = vpop.f32.mrf.mxu0
    %v2621 = vadd.f32 %v2601, %v2620
    %2622 = vdwg.mxu0
    %2623 = vst [vmem:[%s7] sm:$0xf] %v2621
    // Predicated region
    $region34: #{qstn_forward.3} parent=1 // pred_check
      _
    $region35: #{qstn_forward.3} parent=1 // pred_check_branch
      %2625 = sbr.rel (0) target = $region37
    $region36: #{qstn_forward.3} parent=1 // pred_region
      _
    $region37: #{qstn_forward.3} parent=1 // pred_fallthru
      _
    // Predicated region
    $region38: #{qstn_forward.3} parent=1 // pred_check
      _
    $region39: #{qstn_forward.3} parent=1 // pred_check_branch
      %2627 = sbr.rel (0) target = $region41
    $region40: #{qstn_forward.3} parent=1 // pred_region
      _
    $region41: #{qstn_forward.3} parent=1 // pred_fallthru
      _
    %2628 = vsyncpa [#allocation3], 1

</llo_original>
